<compile_context>
chip_gen: v6e
topology: v6e:2x2x1
jax: 0.10.0
libtpu: 0.0.40
codegen_flags: <defaults>
</compile_context>

<pallas_src>
from math import sqrt

import jax
import jax.numpy as jnp
from jax.experimental import pallas as pl
from jax.experimental.pallas import tpu as pltpu


def _vmem_spec():
    # Whole-array block resident in VMEM (no grid -> single kernel invocation).
    return pl.BlockSpec(memory_space=pltpu.MemorySpace.VMEM)


# -----------------------------------------------------------------------------
# Kernel 1 (sequential_length > 0 path), fully fused and batched over B:
#   per b:  ut  = W1 @ v_b                       (E, S)   K = 2048 MXU matmul
#           x   = ReLU(W2 @ ut^T + bias_eff)     (L, E)   tiny spatial mixing
#           g_b = x @ W_ih^T(perm) + b(perm)     (L, 4H)  hoisted input proj.
#   then one unrolled L-step LSTM recurrence with batched (B, H) state.
# -----------------------------------------------------------------------------
def _seq_fused_kernel(v_ref, w1_ref, w2_ref, bx_ref, wih_ref, whh_ref, bl_ref,
                      o_ref):
    B = v_ref.shape[0]
    L, E = bx_ref.shape
    H = whh_ref.shape[0]

    w1 = w1_ref[...]            # (E, C)   f32
    w2 = w2_ref[...]            # (L, S)   f32
    bx = bx_ref[...]            # (L, E)   f32  folded effective bias
    wih = wih_ref[...]          # (E, 4H)  f32  gate-permuted W_ih^T
    whh = whh_ref[...]          # (H, 4H)  f32  gate-permuted W_hh^T
    bl = bl_ref[...]            # (1, 4H)  f32  gate-permuted (b_ih + b_hh)

    # Channel projection in v's native (C, S) layout; B is small & static so
    # this loop is fully unrolled.  Only the tiny (E, S) intermediate is
    # transposed (same pattern as the reference paged-attention kernel).
    g_rows = []
    for b in range(B):
        ut = jnp.dot(w1, v_ref[b], preferred_element_type=jnp.float32)        # (E, S)
        x = jnp.maximum(
            jnp.dot(w2, ut.T, preferred_element_type=jnp.float32) + bx, 0.0)  # (L, E)
        g_rows.append(
            jnp.dot(x, wih, preferred_element_type=jnp.float32) + bl)         # (L, 4H)

    # Per-step, batch-stacked gate inputs (B, 4H).  They depend only on the
    # precomputed projections, so they sit off the recurrence critical path.
    g_steps = [
        jnp.concatenate([g_rows[b][t:t + 1, :] for b in range(B)], axis=0)
        for t in range(L)
    ]

    # Unrolled LSTM recurrence, batched (B, H) state, gate order [i, f, o, g]:
    # one sigmoid over a contiguous (B, 3H) slice + one tanh on (B, H) per step.
    h = jnp.zeros((B, H), jnp.float32)
    c = jnp.zeros((B, H), jnp.float32)
    for t in range(L):
        gates = g_steps[t] + jnp.dot(h, whh, preferred_element_type=jnp.float32)
        ifo = jax.nn.sigmoid(gates[:, :3 * H])
        gg = jnp.tanh(gates[:, 3 * H:])
        c = ifo[:, H:2 * H] * c + ifo[:, :H] * gg
        h = ifo[:, 2 * H:3 * H] * jnp.tanh(c)

    # Direct slice stores (no concatenate): row 0 = h_n, row 1 = c_n.
    o_ref[0, :, :] = h
    o_ref[1, :, :] = c


def prepare_seq_params(params):
    """One-time (hoisted) weight preprocessing for the sequential path."""
    w1 = params["w_lin1"].astype(jnp.float32)            # (E, C)
    b1 = params["b_lin1"].astype(jnp.float32)            # (E,)
    w2 = params["w_lin2"].astype(jnp.float32)            # (L, S)
    b2 = params["b_lin2"].astype(jnp.float32)            # (L,)
    w_ih = params["w_ih"].astype(jnp.float32)            # (4H, E)
    w_hh = params["w_hh"].astype(jnp.float32)            # (4H, H)
    b_ih = params["b_ih"].astype(jnp.float32)
    b_hh = params["b_hh"].astype(jnp.float32)
    H = w_hh.shape[1]

    # PyTorch gate order [i, f, g, o] -> kernel order [i, f, o, g].
    perm = jnp.concatenate([jnp.arange(2 * H), jnp.arange(3 * H, 4 * H),
                            jnp.arange(2 * H, 3 * H)])
    # Effective bias of the algebraically reordered linear1(linear2(.)):
    #   bias_x[l, e] = b2[l] * sum_c W1[e, c] + b1[e]   (all f32, consistent
    #   with the f32 W1 used inside the kernel).
    bias_x = b2[:, None] * jnp.sum(w1, axis=1)[None, :] + b1[None, :]   # (L, E)
    return {
        "w1": w1,                                         # (E, C)
        "w2": w2,                                         # (L, S)
        "bias_x": bias_x,                                 # (L, E)
        "wih_t": w_ih.T[:, perm],                         # (E, 4H) permuted
        "whh_t": w_hh.T[:, perm],                         # (H, 4H) permuted
        "b_lstm": (b_ih + b_hh)[perm].reshape(1, 4 * H),  # (1, 4H) permuted
    }


def seq_forward(v, prep):
    """v: (B, C, S) float32 (native layout).  Returns (h_n, c_n), each (1,B,H)."""
    B = v.shape[0]
    H = prep["whh_t"].shape[0]
    hc = pl.pallas_call(
        _seq_fused_kernel,
        out_shape=jax.ShapeDtypeStruct((2, B, H), jnp.float32),
        in_specs=[_vmem_spec() for _ in range(7)],
        out_specs=_vmem_spec(),
    )(v, prep["w1"], prep["w2"], prep["bias_x"], prep["wih_t"], prep["whh_t"],
      prep["b_lstm"])
    return hc[0:1], hc[1:2]


# -----------------------------------------------------------------------------
# Kernel 2 (sequential_length == 0 path), batched over B in one invocation:
#   per b:  t_b = [W1; W2] @ v_b                 (2H, S)  K = 2048 MXU matmul
#           col_b = (1/S) * sum_s t_b[:, s]      (2H, 1)  lane reduction
#   hc^T = ReLU([col_0 | col_1 | ...] + b12)     (2H, B)
# -----------------------------------------------------------------------------
def _mean_head_kernel(v_ref, w12_ref, b12_ref, o_ref):
    B = v_ref.shape[0]
    inv_s = 1.0 / v_ref.shape[2]
    w12 = w12_ref[...]                                                   # (2H, C)
    cols = []
    for b in range(B):
        t = jnp.dot(w12, v_ref[b], preferred_element_type=jnp.float32)  # (2H, S)
        cols.append(jnp.sum(t, axis=1, keepdims=True))                  # (2H, 1)
    hct = jnp.concatenate(cols, axis=1) * inv_s + b12_ref[...]          # (2H, B)
    o_ref[...] = jnp.maximum(hct, 0.0)


def prepare_mean_params(params):
    """One-time (hoisted) weight preprocessing for the mean-pool path."""
    w1 = params["w_lin1"].astype(jnp.float32)            # (H, C)
    w2 = params["w_lin2"].astype(jnp.float32)            # (H, C)
    b1 = params["b_lin1"].astype(jnp.float32)
    b2 = params["b_lin2"].astype(jnp.float32)
    H = w1.shape[0]
    return {
        "w12_rows": jnp.concatenate([w1, w2], axis=0),                  # (2H, C)
        "b12_col": jnp.concatenate([b1, b2]).reshape(2 * H, 1),         # (2H, 1)
    }


def mean_forward(v, prep):
    """v: (B, C, S) float32.  Returns (h, c), each (1, B, H)."""
    B = v.shape[0]
    H = prep["w12_rows"].shape[0] // 2
    hct = pl.pallas_call(
        _mean_head_kernel,
        out_shape=jax.ShapeDtypeStruct((2 * H, B), jnp.float32),
        in_specs=[_vmem_spec() for _ in range(3)],
        out_specs=_vmem_spec(),
    )(v, prep["w12_rows"], prep["b12_col"])
    # Tiny (H, B) -> (1, B, H) reorientations; negligible (512 B of data).
    return jnp.transpose(hct[:H])[None], jnp.transpose(hct[H:])[None]


# -----------------------------------------------------------------------------
# Full forward (Pallas) and a pure-JAX f32 reference for verification.
# -----------------------------------------------------------------------------
def glo_encoder_forward(v, params, sequential_length):
    """Convenience path; for repeated calls hoist prepare_*_params()."""
    if sequential_length > 0:
        return seq_forward(v, prepare_seq_params(params))
    return mean_forward(v, prepare_mean_params(params))


def ref_forward(v, params, sequential_length):
    if sequential_length > 0:
        y = jnp.einsum("bcs,ls->bcl", v, params["w_lin2"]) + params["b_lin2"]
        x = jnp.transpose(y, (0, 2, 1))
        x = jnp.maximum(x @ params["w_lin1"].T + params["b_lin1"], 0.0)
        B, L, _ = x.shape
        H = params["w_hh"].shape[1]
        h = jnp.zeros((B, H), jnp.float32)
        c = jnp.zeros((B, H), jnp.float32)
        for t in range(L):
            gates = (x[:, t, :] @ params["w_ih"].T + h @ params["w_hh"].T
                     + params["b_ih"] + params["b_hh"])
            i, f, g, o = jnp.split(gates, 4, axis=1)
            i, f, o = jax.nn.sigmoid(i), jax.nn.sigmoid(f), jax.nn.sigmoid(o)
            g = jnp.tanh(g)
            c = f * c + i * g
            h = o * jnp.tanh(c)
    else:
        vm = jnp.mean(jnp.transpose(v, (0, 2, 1)), axis=1)
        h = jnp.maximum(vm @ params["w_lin1"].T + params["b_lin1"], 0.0)
        c = jnp.maximum(vm @ params["w_lin2"].T + params["b_lin2"], 0.0)
    return h[None], c[None]


def _uniform(key, shape, fan_in):
    bound = 1.0 / sqrt(fan_in)
    return jax.random.uniform(key, shape, jnp.float32, -bound, bound)


def make_params(key, *, C, S, L, E, H, sequential_length):
    ks = jax.random.split(key, 8)
    if sequential_length > 0:
        return {
            "w_lin1": _uniform(ks[0], (E, C), C),      # Linear(2048, embed_size)
            "b_lin1": _uniform(ks[1], (E,), C),
            "w_lin2": _uniform(ks[2], (L, S), S),      # Linear((crop/32)^2, seq_len)
            "b_lin2": _uniform(ks[3], (L,), S),
            "w_ih": _uniform(ks[4], (4 * H, E), H),    # LSTM(embed_size, hidden_size)
            "w_hh": _uniform(ks[5], (4 * H, H), H),
            "b_ih": _uniform(ks[6], (4 * H,), H),
            "b_hh": _uniform(ks[7], (4 * H,), H),
        }
    return {
        "w_lin1": _uniform(ks[0], (H, C), C),          # Linear(2048, hidden_size)
        "b_lin1": _uniform(ks[1], (H,), C),
        "w_lin2": _uniform(ks[2], (H, C), C),          # Linear(2048, hidden_size)
        "b_lin2": _uniform(ks[3], (H,), C),
    }


if __name__ == "__main__":
    key = jax.random.PRNGKey(0)
    B, C = 2, 2048
    crop_size = 128
    S = (crop_size // 32) ** 2          # 16 spatial positions after the backbone
    L, E, H = 8, 32, 32                 # sequential_length, embed_size, hidden_size

    k_v, k_p1, k_p2 = jax.random.split(key, 3)
    v = jax.random.normal(k_v, (B, C, S), jnp.float32)   # flattened ResNet features

    # Everything f32 now (no bf16 operands) -> tight tolerance is safe.
    TOL = dict(rtol=1e-2, atol=1e-2)

    # --- sequential_length > 0 path (fused linear2/linear1 + batched LSTM) ---
    params_seq = make_params(k_p1, C=C, S=S, L=L, E=E, H=H, sequential_length=L)
    prep_seq = prepare_seq_params(params_seq)            # hoisted, one-time prep
    seq_fn = jax.jit(seq_forward)
    h_n, c_n = seq_fn(v, prep_seq)
    jax.block_until_ready((h_n, c_n))
    h_ref, c_ref = ref_forward(v, params_seq, sequential_length=L)
    assert h_n.shape == (1, B, H) and c_n.shape == (1, B, H)
    assert jnp.allclose(h_n, h_ref, **TOL)
    assert jnp.allclose(c_n, c_ref, **TOL)

    # --- sequential_length == 0 path (spatial mean + fused two-head linear) --
    params_mean = make_params(k_p2, C=C, S=S, L=L, E=E, H=H, sequential_length=0)
    prep_mean = prepare_mean_params(params_mean)         # hoisted, one-time prep
    mean_fn = jax.jit(mean_forward)
    h0, c0 = mean_fn(v, prep_mean)
    jax.block_until_ready((h0, c0))
    h0_ref, c0_ref = ref_forward(v, params_mean, sequential_length=0)
    assert h0.shape == (1, B, H) and c0.shape == (1, B, H)
    assert jnp.allclose(h0, h0_ref, **TOL)
    assert jnp.allclose(c0, c0_ref, **TOL)

    print("KERNEL_OK")
</pallas_src>

<mosaic_0001>
module attributes {stable_mosaic.version = 11 : i64} {
  func.func @_seq_fused_kernel(%arg0: memref<2x2048x16xf32, #tpu.memory_space<vmem>>, %arg1: memref<32x2048xf32, #tpu.memory_space<vmem>>, %arg2: memref<8x16xf32, #tpu.memory_space<vmem>>, %arg3: memref<8x32xf32, #tpu.memory_space<vmem>>, %arg4: memref<32x128xf32, #tpu.memory_space<vmem>>, %arg5: memref<32x128xf32, #tpu.memory_space<vmem>>, %arg6: memref<1x128xf32, #tpu.memory_space<vmem>>, %arg7: memref<2x2x32xf32, #tpu.memory_space<vmem>>) attributes {dimension_semantics = [], scalar_prefetch = 0 : i64, scratch_operands = 0 : i64, tpu.core_type = #tpu.core_type<tc>} {
    %c0 = arith.constant 0 : index
    %c0_0 = arith.constant 0 : index
    %0 = vector.load %arg1[%c0, %c0_0] : memref<32x2048xf32, #tpu.memory_space<vmem>>, vector<32x2048xf32>
    %c0_1 = arith.constant 0 : index
    %c0_2 = arith.constant 0 : index
    %1 = vector.load %arg2[%c0_1, %c0_2] : memref<8x16xf32, #tpu.memory_space<vmem>>, vector<8x16xf32>
    %c0_3 = arith.constant 0 : index
    %c0_4 = arith.constant 0 : index
    %2 = vector.load %arg3[%c0_3, %c0_4] : memref<8x32xf32, #tpu.memory_space<vmem>>, vector<8x32xf32>
    %c0_5 = arith.constant 0 : index
    %c0_6 = arith.constant 0 : index
    %3 = vector.load %arg4[%c0_5, %c0_6] : memref<32x128xf32, #tpu.memory_space<vmem>>, vector<32x128xf32>
    %c0_7 = arith.constant 0 : index
    %c0_8 = arith.constant 0 : index
    %4 = vector.load %arg5[%c0_7, %c0_8] : memref<32x128xf32, #tpu.memory_space<vmem>>, vector<32x128xf32>
    %c0_9 = arith.constant 0 : index
    %c0_10 = arith.constant 0 : index
    %5 = vector.load %arg6[%c0_9, %c0_10] : memref<1x128xf32, #tpu.memory_space<vmem>>, vector<1x128xf32>
    %c0_11 = arith.constant 0 : index
    %c0_12 = arith.constant 0 : index
    %c0_13 = arith.constant 0 : index
    %6 = vector.load %arg0[%c0_11, %c0_12, %c0_13] : memref<2x2048x16xf32, #tpu.memory_space<vmem>>, vector<1x2048x16xf32>
    %7 = vector.shape_cast %6 : vector<1x2048x16xf32> to vector<2048x16xf32>
    %cst = arith.constant dense<0.000000e+00> : vector<32x16xf32>
    %8 = tpu.matmul %0, %7, %cst {dimension_numbers = #tpu.dot_dimension_numbers<[1], [0], [0], [1], [0, 0, 1, 1], [], []>} : vector<32x2048xf32>, vector<2048x16xf32>, vector<32x16xf32> -> vector<32x16xf32>
    %9 = tpu.transpose %8, [1, 0] : vector<32x16xf32> -> vector<16x32xf32>
    %cst_14 = arith.constant dense<0.000000e+00> : vector<8x32xf32>
    %10 = tpu.matmul %1, %9, %cst_14 {dimension_numbers = #tpu.dot_dimension_numbers<[1], [0], [0], [1], [0, 0, 1, 1], [], []>} : vector<8x16xf32>, vector<16x32xf32>, vector<8x32xf32> -> vector<8x32xf32>
    %11 = arith.addf %10, %2 : vector<8x32xf32>
    %cst_15 = arith.constant 0.000000e+00 : f32
    %12 = vector.broadcast %cst_15 : f32 to vector<8x32xf32>
    %13 = arith.maximumf %11, %12 : vector<8x32xf32>
    %cst_16 = arith.constant dense<0.000000e+00> : vector<8x128xf32>
    %14 = tpu.matmul %13, %3, %cst_16 {dimension_numbers = #tpu.dot_dimension_numbers<[1], [0], [0], [1], [0, 0, 1, 1], [], []>} : vector<8x32xf32>, vector<32x128xf32>, vector<8x128xf32> -> vector<8x128xf32>
    %15 = vector.broadcast %5 : vector<1x128xf32> to vector<8x128xf32>
    %16 = arith.addf %14, %15 : vector<8x128xf32>
    %c1 = arith.constant 1 : index
    %c0_17 = arith.constant 0 : index
    %c0_18 = arith.constant 0 : index
    %17 = vector.load %arg0[%c1, %c0_17, %c0_18] : memref<2x2048x16xf32, #tpu.memory_space<vmem>>, vector<1x2048x16xf32>
    %18 = vector.shape_cast %17 : vector<1x2048x16xf32> to vector<2048x16xf32>
    %cst_19 = arith.constant dense<0.000000e+00> : vector<32x16xf32>
    %19 = tpu.matmul %0, %18, %cst_19 {dimension_numbers = #tpu.dot_dimension_numbers<[1], [0], [0], [1], [0, 0, 1, 1], [], []>} : vector<32x2048xf32>, vector<2048x16xf32>, vector<32x16xf32> -> vector<32x16xf32>
    %20 = tpu.transpose %19, [1, 0] : vector<32x16xf32> -> vector<16x32xf32>
    %cst_20 = arith.constant dense<0.000000e+00> : vector<8x32xf32>
    %21 = tpu.matmul %1, %20, %cst_20 {dimension_numbers = #tpu.dot_dimension_numbers<[1], [0], [0], [1], [0, 0, 1, 1], [], []>} : vector<8x16xf32>, vector<16x32xf32>, vector<8x32xf32> -> vector<8x32xf32>
    %22 = arith.addf %21, %2 : vector<8x32xf32>
    %cst_21 = arith.constant 0.000000e+00 : f32
    %23 = vector.broadcast %cst_21 : f32 to vector<8x32xf32>
    %24 = arith.maximumf %22, %23 : vector<8x32xf32>
    %cst_22 = arith.constant dense<0.000000e+00> : vector<8x128xf32>
    %25 = tpu.matmul %24, %3, %cst_22 {dimension_numbers = #tpu.dot_dimension_numbers<[1], [0], [0], [1], [0, 0, 1, 1], [], []>} : vector<8x32xf32>, vector<32x128xf32>, vector<8x128xf32> -> vector<8x128xf32>
    %26 = vector.broadcast %5 : vector<1x128xf32> to vector<8x128xf32>
    %27 = arith.addf %25, %26 : vector<8x128xf32>
    %28 = vector.extract_strided_slice %16 {offsets = [0, 0], sizes = [1, 128], strides = [1, 1]} : vector<8x128xf32> to vector<1x128xf32>
    %29 = vector.extract_strided_slice %27 {offsets = [0, 0], sizes = [1, 128], strides = [1, 1]} : vector<8x128xf32> to vector<1x128xf32>
    %30 = tpu.concatenate %28, %29 in 0 : vector<1x128xf32>, vector<1x128xf32> -> vector<2x128xf32>
    %31 = vector.extract_strided_slice %16 {offsets = [1, 0], sizes = [1, 128], strides = [1, 1]} : vector<8x128xf32> to vector<1x128xf32>
    %32 = vector.extract_strided_slice %27 {offsets = [1, 0], sizes = [1, 128], strides = [1, 1]} : vector<8x128xf32> to vector<1x128xf32>
    %33 = tpu.concatenate %31, %32 in 0 : vector<1x128xf32>, vector<1x128xf32> -> vector<2x128xf32>
    %34 = vector.extract_strided_slice %16 {offsets = [2, 0], sizes = [1, 128], strides = [1, 1]} : vector<8x128xf32> to vector<1x128xf32>
    %35 = vector.extract_strided_slice %27 {offsets = [2, 0], sizes = [1, 128], strides = [1, 1]} : vector<8x128xf32> to vector<1x128xf32>
    %36 = tpu.concatenate %34, %35 in 0 : vector<1x128xf32>, vector<1x128xf32> -> vector<2x128xf32>
    %37 = vector.extract_strided_slice %16 {offsets = [3, 0], sizes = [1, 128], strides = [1, 1]} : vector<8x128xf32> to vector<1x128xf32>
    %38 = vector.extract_strided_slice %27 {offsets = [3, 0], sizes = [1, 128], strides = [1, 1]} : vector<8x128xf32> to vector<1x128xf32>
    %39 = tpu.concatenate %37, %38 in 0 : vector<1x128xf32>, vector<1x128xf32> -> vector<2x128xf32>
    %40 = vector.extract_strided_slice %16 {offsets = [4, 0], sizes = [1, 128], strides = [1, 1]} : vector<8x128xf32> to vector<1x128xf32>
    %41 = vector.extract_strided_slice %27 {offsets = [4, 0], sizes = [1, 128], strides = [1, 1]} : vector<8x128xf32> to vector<1x128xf32>
    %42 = tpu.concatenate %40, %41 in 0 : vector<1x128xf32>, vector<1x128xf32> -> vector<2x128xf32>
    %43 = vector.extract_strided_slice %16 {offsets = [5, 0], sizes = [1, 128], strides = [1, 1]} : vector<8x128xf32> to vector<1x128xf32>
    %44 = vector.extract_strided_slice %27 {offsets = [5, 0], sizes = [1, 128], strides = [1, 1]} : vector<8x128xf32> to vector<1x128xf32>
    %45 = tpu.concatenate %43, %44 in 0 : vector<1x128xf32>, vector<1x128xf32> -> vector<2x128xf32>
    %46 = vector.extract_strided_slice %16 {offsets = [6, 0], sizes = [1, 128], strides = [1, 1]} : vector<8x128xf32> to vector<1x128xf32>
    %47 = vector.extract_strided_slice %27 {offsets = [6, 0], sizes = [1, 128], strides = [1, 1]} : vector<8x128xf32> to vector<1x128xf32>
    %48 = tpu.concatenate %46, %47 in 0 : vector<1x128xf32>, vector<1x128xf32> -> vector<2x128xf32>
    %49 = vector.extract_strided_slice %16 {offsets = [7, 0], sizes = [1, 128], strides = [1, 1]} : vector<8x128xf32> to vector<1x128xf32>
    %50 = vector.extract_strided_slice %27 {offsets = [7, 0], sizes = [1, 128], strides = [1, 1]} : vector<8x128xf32> to vector<1x128xf32>
    %51 = tpu.concatenate %49, %50 in 0 : vector<1x128xf32>, vector<1x128xf32> -> vector<2x128xf32>
    %cst_23 = arith.constant 0.000000e+00 : f32
    %52 = vector.broadcast %cst_23 : f32 to vector<2x32xf32>
    %cst_24 = arith.constant 0.000000e+00 : f32
    %53 = vector.broadcast %cst_24 : f32 to vector<2x32xf32>
    %cst_25 = arith.constant dense<0.000000e+00> : vector<2x128xf32>
    %54 = tpu.matmul %52, %4, %cst_25 {dimension_numbers = #tpu.dot_dimension_numbers<[1], [0], [0], [1], [0, 0, 1, 1], [], []>} : vector<2x32xf32>, vector<32x128xf32>, vector<2x128xf32> -> vector<2x128xf32>
    %55 = arith.addf %30, %54 : vector<2x128xf32>
    %56 = vector.extract_strided_slice %55 {offsets = [0, 0], sizes = [2, 96], strides = [1, 1]} : vector<2x128xf32> to vector<2x96xf32>
    %57 = arith.negf %56 : vector<2x96xf32>
    %58 = math.exp %57 : vector<2x96xf32>
    %cst_26 = arith.constant 1.000000e+00 : f32
    %59 = vector.broadcast %cst_26 : f32 to vector<2x96xf32>
    %60 = arith.addf %59, %58 : vector<2x96xf32>
    %61 = arith.divf %59, %60 : vector<2x96xf32>
    %62 = vector.extract_strided_slice %55 {offsets = [0, 96], sizes = [2, 32], strides = [1, 1]} : vector<2x128xf32> to vector<2x32xf32>
    %63 = math.tanh %62 : vector<2x32xf32>
    %64 = vector.extract_strided_slice %61 {offsets = [0, 32], sizes = [2, 32], strides = [1, 1]} : vector<2x96xf32> to vector<2x32xf32>
    %65 = arith.mulf %64, %53 : vector<2x32xf32>
    %66 = vector.extract_strided_slice %61 {offsets = [0, 0], sizes = [2, 32], strides = [1, 1]} : vector<2x96xf32> to vector<2x32xf32>
    %67 = arith.mulf %66, %63 : vector<2x32xf32>
    %68 = arith.addf %65, %67 : vector<2x32xf32>
    %69 = vector.extract_strided_slice %61 {offsets = [0, 64], sizes = [2, 32], strides = [1, 1]} : vector<2x96xf32> to vector<2x32xf32>
    %70 = math.tanh %68 : vector<2x32xf32>
    %71 = arith.mulf %69, %70 : vector<2x32xf32>
    %cst_27 = arith.constant dense<0.000000e+00> : vector<2x128xf32>
    %72 = tpu.matmul %71, %4, %cst_27 {dimension_numbers = #tpu.dot_dimension_numbers<[1], [0], [0], [1], [0, 0, 1, 1], [], []>} : vector<2x32xf32>, vector<32x128xf32>, vector<2x128xf32> -> vector<2x128xf32>
    %73 = arith.addf %33, %72 : vector<2x128xf32>
    %74 = vector.extract_strided_slice %73 {offsets = [0, 0], sizes = [2, 96], strides = [1, 1]} : vector<2x128xf32> to vector<2x96xf32>
    %75 = arith.negf %74 : vector<2x96xf32>
    %76 = math.exp %75 : vector<2x96xf32>
    %cst_28 = arith.constant 1.000000e+00 : f32
    %77 = vector.broadcast %cst_28 : f32 to vector<2x96xf32>
    %78 = arith.addf %77, %76 : vector<2x96xf32>
    %79 = arith.divf %77, %78 : vector<2x96xf32>
    %80 = vector.extract_strided_slice %73 {offsets = [0, 96], sizes = [2, 32], strides = [1, 1]} : vector<2x128xf32> to vector<2x32xf32>
    %81 = math.tanh %80 : vector<2x32xf32>
    %82 = vector.extract_strided_slice %79 {offsets = [0, 32], sizes = [2, 32], strides = [1, 1]} : vector<2x96xf32> to vector<2x32xf32>
    %83 = arith.mulf %82, %68 : vector<2x32xf32>
    %84 = vector.extract_strided_slice %79 {offsets = [0, 0], sizes = [2, 32], strides = [1, 1]} : vector<2x96xf32> to vector<2x32xf32>
    %85 = arith.mulf %84, %81 : vector<2x32xf32>
    %86 = arith.addf %83, %85 : vector<2x32xf32>
    %87 = vector.extract_strided_slice %79 {offsets = [0, 64], sizes = [2, 32], strides = [1, 1]} : vector<2x96xf32> to vector<2x32xf32>
    %88 = math.tanh %86 : vector<2x32xf32>
    %89 = arith.mulf %87, %88 : vector<2x32xf32>
    %cst_29 = arith.constant dense<0.000000e+00> : vector<2x128xf32>
    %90 = tpu.matmul %89, %4, %cst_29 {dimension_numbers = #tpu.dot_dimension_numbers<[1], [0], [0], [1], [0, 0, 1, 1], [], []>} : vector<2x32xf32>, vector<32x128xf32>, vector<2x128xf32> -> vector<2x128xf32>
    %91 = arith.addf %36, %90 : vector<2x128xf32>
    %92 = vector.extract_strided_slice %91 {offsets = [0, 0], sizes = [2, 96], strides = [1, 1]} : vector<2x128xf32> to vector<2x96xf32>
    %93 = arith.negf %92 : vector<2x96xf32>
    %94 = math.exp %93 : vector<2x96xf32>
    %cst_30 = arith.constant 1.000000e+00 : f32
    %95 = vector.broadcast %cst_30 : f32 to vector<2x96xf32>
    %96 = arith.addf %95, %94 : vector<2x96xf32>
    %97 = arith.divf %95, %96 : vector<2x96xf32>
    %98 = vector.extract_strided_slice %91 {offsets = [0, 96], sizes = [2, 32], strides = [1, 1]} : vector<2x128xf32> to vector<2x32xf32>
    %99 = math.tanh %98 : vector<2x32xf32>
    %100 = vector.extract_strided_slice %97 {offsets = [0, 32], sizes = [2, 32], strides = [1, 1]} : vector<2x96xf32> to vector<2x32xf32>
    %101 = arith.mulf %100, %86 : vector<2x32xf32>
    %102 = vector.extract_strided_slice %97 {offsets = [0, 0], sizes = [2, 32], strides = [1, 1]} : vector<2x96xf32> to vector<2x32xf32>
    %103 = arith.mulf %102, %99 : vector<2x32xf32>
    %104 = arith.addf %101, %103 : vector<2x32xf32>
    %105 = vector.extract_strided_slice %97 {offsets = [0, 64], sizes = [2, 32], strides = [1, 1]} : vector<2x96xf32> to vector<2x32xf32>
    %106 = math.tanh %104 : vector<2x32xf32>
    %107 = arith.mulf %105, %106 : vector<2x32xf32>
    %cst_31 = arith.constant dense<0.000000e+00> : vector<2x128xf32>
    %108 = tpu.matmul %107, %4, %cst_31 {dimension_numbers = #tpu.dot_dimension_numbers<[1], [0], [0], [1], [0, 0, 1, 1], [], []>} : vector<2x32xf32>, vector<32x128xf32>, vector<2x128xf32> -> vector<2x128xf32>
    %109 = arith.addf %39, %108 : vector<2x128xf32>
    %110 = vector.extract_strided_slice %109 {offsets = [0, 0], sizes = [2, 96], strides = [1, 1]} : vector<2x128xf32> to vector<2x96xf32>
    %111 = arith.negf %110 : vector<2x96xf32>
    %112 = math.exp %111 : vector<2x96xf32>
    %cst_32 = arith.constant 1.000000e+00 : f32
    %113 = vector.broadcast %cst_32 : f32 to vector<2x96xf32>
    %114 = arith.addf %113, %112 : vector<2x96xf32>
    %115 = arith.divf %113, %114 : vector<2x96xf32>
    %116 = vector.extract_strided_slice %109 {offsets = [0, 96], sizes = [2, 32], strides = [1, 1]} : vector<2x128xf32> to vector<2x32xf32>
    %117 = math.tanh %116 : vector<2x32xf32>
    %118 = vector.extract_strided_slice %115 {offsets = [0, 32], sizes = [2, 32], strides = [1, 1]} : vector<2x96xf32> to vector<2x32xf32>
    %119 = arith.mulf %118, %104 : vector<2x32xf32>
    %120 = vector.extract_strided_slice %115 {offsets = [0, 0], sizes = [2, 32], strides = [1, 1]} : vector<2x96xf32> to vector<2x32xf32>
    %121 = arith.mulf %120, %117 : vector<2x32xf32>
    %122 = arith.addf %119, %121 : vector<2x32xf32>
    %123 = vector.extract_strided_slice %115 {offsets = [0, 64], sizes = [2, 32], strides = [1, 1]} : vector<2x96xf32> to vector<2x32xf32>
    %124 = math.tanh %122 : vector<2x32xf32>
    %125 = arith.mulf %123, %124 : vector<2x32xf32>
    %cst_33 = arith.constant dense<0.000000e+00> : vector<2x128xf32>
    %126 = tpu.matmul %125, %4, %cst_33 {dimension_numbers = #tpu.dot_dimension_numbers<[1], [0], [0], [1], [0, 0, 1, 1], [], []>} : vector<2x32xf32>, vector<32x128xf32>, vector<2x128xf32> -> vector<2x128xf32>
    %127 = arith.addf %42, %126 : vector<2x128xf32>
    %128 = vector.extract_strided_slice %127 {offsets = [0, 0], sizes = [2, 96], strides = [1, 1]} : vector<2x128xf32> to vector<2x96xf32>
    %129 = arith.negf %128 : vector<2x96xf32>
    %130 = math.exp %129 : vector<2x96xf32>
    %cst_34 = arith.constant 1.000000e+00 : f32
    %131 = vector.broadcast %cst_34 : f32 to vector<2x96xf32>
    %132 = arith.addf %131, %130 : vector<2x96xf32>
    %133 = arith.divf %131, %132 : vector<2x96xf32>
    %134 = vector.extract_strided_slice %127 {offsets = [0, 96], sizes = [2, 32], strides = [1, 1]} : vector<2x128xf32> to vector<2x32xf32>
    %135 = math.tanh %134 : vector<2x32xf32>
    %136 = vector.extract_strided_slice %133 {offsets = [0, 32], sizes = [2, 32], strides = [1, 1]} : vector<2x96xf32> to vector<2x32xf32>
    %137 = arith.mulf %136, %122 : vector<2x32xf32>
    %138 = vector.extract_strided_slice %133 {offsets = [0, 0], sizes = [2, 32], strides = [1, 1]} : vector<2x96xf32> to vector<2x32xf32>
    %139 = arith.mulf %138, %135 : vector<2x32xf32>
    %140 = arith.addf %137, %139 : vector<2x32xf32>
    %141 = vector.extract_strided_slice %133 {offsets = [0, 64], sizes = [2, 32], strides = [1, 1]} : vector<2x96xf32> to vector<2x32xf32>
    %142 = math.tanh %140 : vector<2x32xf32>
    %143 = arith.mulf %141, %142 : vector<2x32xf32>
    %cst_35 = arith.constant dense<0.000000e+00> : vector<2x128xf32>
    %144 = tpu.matmul %143, %4, %cst_35 {dimension_numbers = #tpu.dot_dimension_numbers<[1], [0], [0], [1], [0, 0, 1, 1], [], []>} : vector<2x32xf32>, vector<32x128xf32>, vector<2x128xf32> -> vector<2x128xf32>
    %145 = arith.addf %45, %144 : vector<2x128xf32>
    %146 = vector.extract_strided_slice %145 {offsets = [0, 0], sizes = [2, 96], strides = [1, 1]} : vector<2x128xf32> to vector<2x96xf32>
    %147 = arith.negf %146 : vector<2x96xf32>
    %148 = math.exp %147 : vector<2x96xf32>
    %cst_36 = arith.constant 1.000000e+00 : f32
    %149 = vector.broadcast %cst_36 : f32 to vector<2x96xf32>
    %150 = arith.addf %149, %148 : vector<2x96xf32>
    %151 = arith.divf %149, %150 : vector<2x96xf32>
    %152 = vector.extract_strided_slice %145 {offsets = [0, 96], sizes = [2, 32], strides = [1, 1]} : vector<2x128xf32> to vector<2x32xf32>
    %153 = math.tanh %152 : vector<2x32xf32>
    %154 = vector.extract_strided_slice %151 {offsets = [0, 32], sizes = [2, 32], strides = [1, 1]} : vector<2x96xf32> to vector<2x32xf32>
    %155 = arith.mulf %154, %140 : vector<2x32xf32>
    %156 = vector.extract_strided_slice %151 {offsets = [0, 0], sizes = [2, 32], strides = [1, 1]} : vector<2x96xf32> to vector<2x32xf32>
    %157 = arith.mulf %156, %153 : vector<2x32xf32>
    %158 = arith.addf %155, %157 : vector<2x32xf32>
    %159 = vector.extract_strided_slice %151 {offsets = [0, 64], sizes = [2, 32], strides = [1, 1]} : vector<2x96xf32> to vector<2x32xf32>
    %160 = math.tanh %158 : vector<2x32xf32>
    %161 = arith.mulf %159, %160 : vector<2x32xf32>
    %cst_37 = arith.constant dense<0.000000e+00> : vector<2x128xf32>
    %162 = tpu.matmul %161, %4, %cst_37 {dimension_numbers = #tpu.dot_dimension_numbers<[1], [0], [0], [1], [0, 0, 1, 1], [], []>} : vector<2x32xf32>, vector<32x128xf32>, vector<2x128xf32> -> vector<2x128xf32>
    %163 = arith.addf %48, %162 : vector<2x128xf32>
    %164 = vector.extract_strided_slice %163 {offsets = [0, 0], sizes = [2, 96], strides = [1, 1]} : vector<2x128xf32> to vector<2x96xf32>
    %165 = arith.negf %164 : vector<2x96xf32>
    %166 = math.exp %165 : vector<2x96xf32>
    %cst_38 = arith.constant 1.000000e+00 : f32
    %167 = vector.broadcast %cst_38 : f32 to vector<2x96xf32>
    %168 = arith.addf %167, %166 : vector<2x96xf32>
    %169 = arith.divf %167, %168 : vector<2x96xf32>
    %170 = vector.extract_strided_slice %163 {offsets = [0, 96], sizes = [2, 32], strides = [1, 1]} : vector<2x128xf32> to vector<2x32xf32>
    %171 = math.tanh %170 : vector<2x32xf32>
    %172 = vector.extract_strided_slice %169 {offsets = [0, 32], sizes = [2, 32], strides = [1, 1]} : vector<2x96xf32> to vector<2x32xf32>
    %173 = arith.mulf %172, %158 : vector<2x32xf32>
    %174 = vector.extract_strided_slice %169 {offsets = [0, 0], sizes = [2, 32], strides = [1, 1]} : vector<2x96xf32> to vector<2x32xf32>
    %175 = arith.mulf %174, %171 : vector<2x32xf32>
    %176 = arith.addf %173, %175 : vector<2x32xf32>
    %177 = vector.extract_strided_slice %169 {offsets = [0, 64], sizes = [2, 32], strides = [1, 1]} : vector<2x96xf32> to vector<2x32xf32>
    %178 = math.tanh %176 : vector<2x32xf32>
    %179 = arith.mulf %177, %178 : vector<2x32xf32>
    %cst_39 = arith.constant dense<0.000000e+00> : vector<2x128xf32>
    %180 = tpu.matmul %179, %4, %cst_39 {dimension_numbers = #tpu.dot_dimension_numbers<[1], [0], [0], [1], [0, 0, 1, 1], [], []>} : vector<2x32xf32>, vector<32x128xf32>, vector<2x128xf32> -> vector<2x128xf32>
    %181 = arith.addf %51, %180 : vector<2x128xf32>
    %182 = vector.extract_strided_slice %181 {offsets = [0, 0], sizes = [2, 96], strides = [1, 1]} : vector<2x128xf32> to vector<2x96xf32>
    %183 = arith.negf %182 : vector<2x96xf32>
    %184 = math.exp %183 : vector<2x96xf32>
    %cst_40 = arith.constant 1.000000e+00 : f32
    %185 = vector.broadcast %cst_40 : f32 to vector<2x96xf32>
    %186 = arith.addf %185, %184 : vector<2x96xf32>
    %187 = arith.divf %185, %186 : vector<2x96xf32>
    %188 = vector.extract_strided_slice %181 {offsets = [0, 96], sizes = [2, 32], strides = [1, 1]} : vector<2x128xf32> to vector<2x32xf32>
    %189 = math.tanh %188 : vector<2x32xf32>
    %190 = vector.extract_strided_slice %187 {offsets = [0, 32], sizes = [2, 32], strides = [1, 1]} : vector<2x96xf32> to vector<2x32xf32>
    %191 = arith.mulf %190, %176 : vector<2x32xf32>
    %192 = vector.extract_strided_slice %187 {offsets = [0, 0], sizes = [2, 32], strides = [1, 1]} : vector<2x96xf32> to vector<2x32xf32>
    %193 = arith.mulf %192, %189 : vector<2x32xf32>
    %194 = arith.addf %191, %193 : vector<2x32xf32>
    %195 = vector.extract_strided_slice %187 {offsets = [0, 64], sizes = [2, 32], strides = [1, 1]} : vector<2x96xf32> to vector<2x32xf32>
    %196 = math.tanh %194 : vector<2x32xf32>
    %197 = arith.mulf %195, %196 : vector<2x32xf32>
    %c0_41 = arith.constant 0 : index
    %c0_42 = arith.constant 0 : index
    %c0_43 = arith.constant 0 : index
    %198 = vector.load %arg7[%c0_41, %c0_42, %c0_43] : memref<2x2x32xf32, #tpu.memory_space<vmem>>, vector<1x2x32xf32>
    %199 = vector.shape_cast %198 : vector<1x2x32xf32> to vector<2x32xf32>
    %200 = vector.shape_cast %197 : vector<2x32xf32> to vector<1x2x32xf32>
    tpu.vector_store %arg7[%c0_41, %c0_42, %c0_43], %200 {strides = array<i32>} : memref<2x2x32xf32, #tpu.memory_space<vmem>>, vector<1x2x32xf32>,
    %c1_44 = arith.constant 1 : index
    %c0_45 = arith.constant 0 : index
    %c0_46 = arith.constant 0 : index
    %201 = vector.load %arg7[%c1_44, %c0_45, %c0_46] : memref<2x2x32xf32, #tpu.memory_space<vmem>>, vector<1x2x32xf32>
    %202 = vector.shape_cast %201 : vector<1x2x32xf32> to vector<2x32xf32>
    %203 = vector.shape_cast %194 : vector<2x32xf32> to vector<1x2x32xf32>
    tpu.vector_store %arg7[%c1_44, %c0_45, %c0_46], %203 {strides = array<i32>} : memref<2x2x32xf32, #tpu.memory_space<vmem>>, vector<1x2x32xf32>,
    return
  }
}

</mosaic_0001>

<llo_original>
// kernel: seq_forward.1
$region0: #{seq_forward.1}
  #allocation0 [shape = 'u32[]', space=smem, size = 0x4, offset = 0x4, fixed_abs, tag = 'smem constant byte address 0x4 - core index']
  #allocation1 [shape = 'u32[144,128]{1,0:T(1,128)}', space=vmem, size = 0x12000, scoped, tag = 'internal scratch']
  %s0 = inlined_call_operand.vmem [shape: f32[2,2048,16], index: 0, kind: input, shape index: {}]
  %s1 = inlined_call_operand.vmem [shape: f32[32,2048], index: 1, kind: input, shape index: {}]
  %s2 = inlined_call_operand.vmem [shape: f32[8,16], index: 2, kind: input, shape index: {}]
  %s3 = inlined_call_operand.vmem [shape: f32[8,32], index: 3, kind: input, shape index: {}]
  %s4 = inlined_call_operand.vmem [shape: f32[32,128], index: 4, kind: input, shape index: {}]
  %s5 = inlined_call_operand.vmem [shape: f32[32,128], index: 5, kind: input, shape index: {}]
  %s6 = inlined_call_operand.vmem [shape: f32[1,128], index: 6, kind: input, shape index: {}]
  %s7 = inlined_call_operand.vmem [shape: f32[2,2,32], index: 7, kind: output, shape index: {}]
  %s8 = sld [smem:[#allocation0]]
  $region38: #{seq_forward.1} parent=0
    _
  %s10 = ssub.s32 1, %s8
  %s11 = scalar_select 0, %s10, %s8
  // Predicated region
  $region2: #{seq_forward.1} parent=0 // pred_check
    _
  $region3: #{seq_forward.1} parent=0 // pred_check_branch
    %13 = sbr.rel (0) target = $region5
  $region4: #{seq_forward.1} parent=0 // pred_region
    _
  $region5: #{seq_forward.1} parent=0 // pred_fallthru
    _
  // Predicated region
  $region6: #{seq_forward.1} parent=0 // pred_check
    _
  $region7: #{seq_forward.1} parent=0 // pred_check_branch
    %15 = sbr.rel (0) target = $region9
  $region8: #{seq_forward.1} parent=0 // pred_region
    _
  $region9: #{seq_forward.1} parent=0 // pred_fallthru
    _
  // Predicated region
  $region10: #{seq_forward.1} parent=0 // pred_check
    _
  $region11: #{seq_forward.1} parent=0 // pred_check_branch
    %17 = sbr.rel (0) target = $region13
  $region12: #{seq_forward.1} parent=0 // pred_region
    _
  $region13: #{seq_forward.1} parent=0 // pred_fallthru
    _
  // Predicated region
  $region14: #{seq_forward.1} parent=0 // pred_check
    _
  $region15: #{seq_forward.1} parent=0 // pred_check_branch
    %19 = sbr.rel (0) target = $region17
  $region16: #{seq_forward.1} parent=0 // pred_region
    _
  $region17: #{seq_forward.1} parent=0 // pred_fallthru
    _
  // Predicated region
  $region18: #{seq_forward.1} parent=0 // pred_check
    _
  $region19: #{seq_forward.1} parent=0 // pred_check_branch
    %21 = sbr.rel (0) target = $region21
  $region20: #{seq_forward.1} parent=0 // pred_region
    _
  $region21: #{seq_forward.1} parent=0 // pred_fallthru
    _
  // Predicated region
  $region22: #{seq_forward.1} parent=0 // pred_check
    _
  $region23: #{seq_forward.1} parent=0 // pred_check_branch
    %23 = sbr.rel (0) target = $region25
  $region24: #{seq_forward.1} parent=0 // pred_region
    _
  $region25: #{seq_forward.1} parent=0 // pred_fallthru
    _
  // Predicated region
  $region26: #{seq_forward.1} parent=0 // pred_check
    _
  $region27: #{seq_forward.1} parent=0 // pred_check_branch
    %25 = sbr.rel (0) target = $region29
  $region28: #{seq_forward.1} parent=0 // pred_region
    _
  $region29: #{seq_forward.1} parent=0 // pred_fallthru
    _
  %v26 = vld [vmem:[%s1] sm:$0xff]
  %v27 = vld [vmem:[%s1 + $0x8] sm:$0xff]
  %v28 = vld [vmem:[%s1 + $0x10] sm:$0xff]
  %v29 = vld [vmem:[%s1 + $0x18] sm:$0xff]
  %v30 = vld [vmem:[%s1 + $0x20] sm:$0xff]
  %v31 = vld [vmem:[%s1 + $0x28] sm:$0xff]
  %v32 = vld [vmem:[%s1 + $0x30] sm:$0xff]
  %v33 = vld [vmem:[%s1 + $0x38] sm:$0xff]
  %v34 = vld [vmem:[%s1 + $0x40] sm:$0xff]
  %v35 = vld [vmem:[%s1 + $0x48] sm:$0xff]
  %v36 = vld [vmem:[%s1 + $0x50] sm:$0xff]
  %v37 = vld [vmem:[%s1 + $0x58] sm:$0xff]
  %v38 = vld [vmem:[%s1 + $0x60] sm:$0xff]
  %v39 = vld [vmem:[%s1 + $0x68] sm:$0xff]
  %v40 = vld [vmem:[%s1 + $0x70] sm:$0xff]
  %v41 = vld [vmem:[%s1 + $0x78] sm:$0xff]
  %v42 = vld [vmem:[%s1 + $0x80] sm:$0xff]
  %v43 = vld [vmem:[%s1 + $0x88] sm:$0xff]
  %v44 = vld [vmem:[%s1 + $0x90] sm:$0xff]
  %v45 = vld [vmem:[%s1 + $0x98] sm:$0xff]
  %v46 = vld [vmem:[%s1 + $0xa0] sm:$0xff]
  %v47 = vld [vmem:[%s1 + $0xa8] sm:$0xff]
  %v48 = vld [vmem:[%s1 + $0xb0] sm:$0xff]
  %v49 = vld [vmem:[%s1 + $0xb8] sm:$0xff]
  %v50 = vld [vmem:[%s1 + $0xc0] sm:$0xff]
  %v51 = vld [vmem:[%s1 + $0xc8] sm:$0xff]
  %v52 = vld [vmem:[%s1 + $0xd0] sm:$0xff]
  %v53 = vld [vmem:[%s1 + $0xd8] sm:$0xff]
  %v54 = vld [vmem:[%s1 + $0xe0] sm:$0xff]
  %v55 = vld [vmem:[%s1 + $0xe8] sm:$0xff]
  %v56 = vld [vmem:[%s1 + $0xf0] sm:$0xff]
  %v57 = vld [vmem:[%s1 + $0xf8] sm:$0xff]
  %v58 = vld [vmem:[%s1 + $0x100] sm:$0xff]
  %v59 = vld [vmem:[%s1 + $0x108] sm:$0xff]
  %v60 = vld [vmem:[%s1 + $0x110] sm:$0xff]
  %v61 = vld [vmem:[%s1 + $0x118] sm:$0xff]
  %v62 = vld [vmem:[%s1 + $0x120] sm:$0xff]
  %v63 = vld [vmem:[%s1 + $0x128] sm:$0xff]
  %v64 = vld [vmem:[%s1 + $0x130] sm:$0xff]
  %v65 = vld [vmem:[%s1 + $0x138] sm:$0xff]
  %v66 = vld [vmem:[%s1 + $0x140] sm:$0xff]
  %v67 = vld [vmem:[%s1 + $0x148] sm:$0xff]
  %v68 = vld [vmem:[%s1 + $0x150] sm:$0xff]
  %v69 = vld [vmem:[%s1 + $0x158] sm:$0xff]
  %v70 = vld [vmem:[%s1 + $0x160] sm:$0xff]
  %v71 = vld [vmem:[%s1 + $0x168] sm:$0xff]
  %v72 = vld [vmem:[%s1 + $0x170] sm:$0xff]
  %v73 = vld [vmem:[%s1 + $0x178] sm:$0xff]
  %v74 = vld [vmem:[%s1 + $0x180] sm:$0xff]
  %v75 = vld [vmem:[%s1 + $0x188] sm:$0xff]
  %v76 = vld [vmem:[%s1 + $0x190] sm:$0xff]
  %v77 = vld [vmem:[%s1 + $0x198] sm:$0xff]
  %v78 = vld [vmem:[%s1 + $0x1a0] sm:$0xff]
  %v79 = vld [vmem:[%s1 + $0x1a8] sm:$0xff]
  %v80 = vld [vmem:[%s1 + $0x1b0] sm:$0xff]
  %v81 = vld [vmem:[%s1 + $0x1b8] sm:$0xff]
  %v82 = vld [vmem:[%s1 + $0x1c0] sm:$0xff]
  %v83 = vld [vmem:[%s1 + $0x1c8] sm:$0xff]
  %v84 = vld [vmem:[%s1 + $0x1d0] sm:$0xff]
  %v85 = vld [vmem:[%s1 + $0x1d8] sm:$0xff]
  %v86 = vld [vmem:[%s1 + $0x1e0] sm:$0xff]
  %v87 = vld [vmem:[%s1 + $0x1e8] sm:$0xff]
  %v88 = vld [vmem:[%s1 + $0x1f0] sm:$0xff]
  %v89 = vld [vmem:[%s1 + $0x1f8] sm:$0xff]
  %v90 = vld [vmem:[%s2] sm:$0xff]
  %v91 = vld [vmem:[%s3] sm:$0xff]
  %v92 = vld [vmem:[%s4] sm:$0xff]
  %v93 = vld [vmem:[%s4 + $0x8] sm:$0xff]
  %v94 = vld [vmem:[%s4 + $0x10] sm:$0xff]
  %v95 = vld [vmem:[%s4 + $0x18] sm:$0xff]
  %v96 = vld [vmem:[%s5] sm:$0xff]
  %v97 = vld [vmem:[%s5 + $0x8] sm:$0xff]
  %v98 = vld [vmem:[%s5 + $0x10] sm:$0xff]
  %v99 = vld [vmem:[%s5 + $0x18] sm:$0xff]
  %v100 = vld [vmem:[%s6] sm:$0x1]
  %v101 = vld [vmem:[%s0] sm:$0xff]
  %v102 = vld [vmem:[%s0 + $0x8] sm:$0xff]
  %v103 = vld [vmem:[%s0 + $0x10] sm:$0xff]
  %v104 = vld [vmem:[%s0 + $0x18] sm:$0xff]
  %v105 = vld [vmem:[%s0 + $0x20] sm:$0xff]
  %v106 = vld [vmem:[%s0 + $0x28] sm:$0xff]
  %v107 = vld [vmem:[%s0 + $0x30] sm:$0xff]
  %v108 = vld [vmem:[%s0 + $0x38] sm:$0xff]
  %v109 = vld [vmem:[%s0 + $0x40] sm:$0xff]
  %v110 = vld [vmem:[%s0 + $0x48] sm:$0xff]
  %v111 = vld [vmem:[%s0 + $0x50] sm:$0xff]
  %v112 = vld [vmem:[%s0 + $0x58] sm:$0xff]
  %v113 = vld [vmem:[%s0 + $0x60] sm:$0xff]
  %v114 = vld [vmem:[%s0 + $0x68] sm:$0xff]
  %v115 = vld [vmem:[%s0 + $0x70] sm:$0xff]
  %v116 = vld [vmem:[%s0 + $0x78] sm:$0xff]
  %v117 = vld [vmem:[%s0 + $0x80] sm:$0xff]
  %v118 = vld [vmem:[%s0 + $0x88] sm:$0xff]
  %v119 = vld [vmem:[%s0 + $0x90] sm:$0xff]
  %v120 = vld [vmem:[%s0 + $0x98] sm:$0xff]
  %v121 = vld [vmem:[%s0 + $0xa0] sm:$0xff]
  %v122 = vld [vmem:[%s0 + $0xa8] sm:$0xff]
  %v123 = vld [vmem:[%s0 + $0xb0] sm:$0xff]
  %v124 = vld [vmem:[%s0 + $0xb8] sm:$0xff]
  %v125 = vld [vmem:[%s0 + $0xc0] sm:$0xff]
  %v126 = vld [vmem:[%s0 + $0xc8] sm:$0xff]
  %v127 = vld [vmem:[%s0 + $0xd0] sm:$0xff]
  %v128 = vld [vmem:[%s0 + $0xd8] sm:$0xff]
  %v129 = vld [vmem:[%s0 + $0xe0] sm:$0xff]
  %v130 = vld [vmem:[%s0 + $0xe8] sm:$0xff]
  %v131 = vld [vmem:[%s0 + $0xf0] sm:$0xff]
  %v132 = vld [vmem:[%s0 + $0xf8] sm:$0xff]
  %v133 = vld [vmem:[%s0 + $0x100] sm:$0xff]
  %v134 = vld [vmem:[%s0 + $0x108] sm:$0xff]
  %v135 = vld [vmem:[%s0 + $0x110] sm:$0xff]
  %v136 = vld [vmem:[%s0 + $0x118] sm:$0xff]
  %v137 = vld [vmem:[%s0 + $0x120] sm:$0xff]
  %v138 = vld [vmem:[%s0 + $0x128] sm:$0xff]
  %v139 = vld [vmem:[%s0 + $0x130] sm:$0xff]
  %v140 = vld [vmem:[%s0 + $0x138] sm:$0xff]
  %v141 = vld [vmem:[%s0 + $0x140] sm:$0xff]
  %v142 = vld [vmem:[%s0 + $0x148] sm:$0xff]
  %v143 = vld [vmem:[%s0 + $0x150] sm:$0xff]
  %v144 = vld [vmem:[%s0 + $0x158] sm:$0xff]
  %v145 = vld [vmem:[%s0 + $0x160] sm:$0xff]
  %v146 = vld [vmem:[%s0 + $0x168] sm:$0xff]
  %v147 = vld [vmem:[%s0 + $0x170] sm:$0xff]
  %v148 = vld [vmem:[%s0 + $0x178] sm:$0xff]
  %v149 = vld [vmem:[%s0 + $0x180] sm:$0xff]
  %v150 = vld [vmem:[%s0 + $0x188] sm:$0xff]
  %v151 = vld [vmem:[%s0 + $0x190] sm:$0xff]
  %v152 = vld [vmem:[%s0 + $0x198] sm:$0xff]
  %v153 = vld [vmem:[%s0 + $0x1a0] sm:$0xff]
  %v154 = vld [vmem:[%s0 + $0x1a8] sm:$0xff]
  %v155 = vld [vmem:[%s0 + $0x1b0] sm:$0xff]
  %v156 = vld [vmem:[%s0 + $0x1b8] sm:$0xff]
  %v157 = vld [vmem:[%s0 + $0x1c0] sm:$0xff]
  %v158 = vld [vmem:[%s0 + $0x1c8] sm:$0xff]
  %v159 = vld [vmem:[%s0 + $0x1d0] sm:$0xff]
  %v160 = vld [vmem:[%s0 + $0x1d8] sm:$0xff]
  %v161 = vld [vmem:[%s0 + $0x1e0] sm:$0xff]
  %v162 = vld [vmem:[%s0 + $0x1e8] sm:$0xff]
  %v163 = vld [vmem:[%s0 + $0x1f0] sm:$0xff]
  %v164 = vld [vmem:[%s0 + $0x1f8] sm:$0xff]
  %v165 = vld [vmem:[%s0 + $0x200] sm:$0xff]
  %v166 = vld [vmem:[%s0 + $0x208] sm:$0xff]
  %v167 = vld [vmem:[%s0 + $0x210] sm:$0xff]
  %v168 = vld [vmem:[%s0 + $0x218] sm:$0xff]
  %v169 = vld [vmem:[%s0 + $0x220] sm:$0xff]
  %v170 = vld [vmem:[%s0 + $0x228] sm:$0xff]
  %v171 = vld [vmem:[%s0 + $0x230] sm:$0xff]
  %v172 = vld [vmem:[%s0 + $0x238] sm:$0xff]
  %v173 = vld [vmem:[%s0 + $0x240] sm:$0xff]
  %v174 = vld [vmem:[%s0 + $0x248] sm:$0xff]
  %v175 = vld [vmem:[%s0 + $0x250] sm:$0xff]
  %v176 = vld [vmem:[%s0 + $0x258] sm:$0xff]
  %v177 = vld [vmem:[%s0 + $0x260] sm:$0xff]
  %v178 = vld [vmem:[%s0 + $0x268] sm:$0xff]
  %v179 = vld [vmem:[%s0 + $0x270] sm:$0xff]
  %v180 = vld [vmem:[%s0 + $0x278] sm:$0xff]
  %v181 = vld [vmem:[%s0 + $0x280] sm:$0xff]
  %v182 = vld [vmem:[%s0 + $0x288] sm:$0xff]
  %v183 = vld [vmem:[%s0 + $0x290] sm:$0xff]
  %v184 = vld [vmem:[%s0 + $0x298] sm:$0xff]
  %v185 = vld [vmem:[%s0 + $0x2a0] sm:$0xff]
  %v186 = vld [vmem:[%s0 + $0x2a8] sm:$0xff]
  %v187 = vld [vmem:[%s0 + $0x2b0] sm:$0xff]
  %v188 = vld [vmem:[%s0 + $0x2b8] sm:$0xff]
  %v189 = vld [vmem:[%s0 + $0x2c0] sm:$0xff]
  %v190 = vld [vmem:[%s0 + $0x2c8] sm:$0xff]
  %v191 = vld [vmem:[%s0 + $0x2d0] sm:$0xff]
  %v192 = vld [vmem:[%s0 + $0x2d8] sm:$0xff]
  %v193 = vld [vmem:[%s0 + $0x2e0] sm:$0xff]
  %v194 = vld [vmem:[%s0 + $0x2e8] sm:$0xff]
  %v195 = vld [vmem:[%s0 + $0x2f0] sm:$0xff]
  %v196 = vld [vmem:[%s0 + $0x2f8] sm:$0xff]
  %v197 = vld [vmem:[%s0 + $0x300] sm:$0xff]
  %v198 = vld [vmem:[%s0 + $0x308] sm:$0xff]
  %v199 = vld [vmem:[%s0 + $0x310] sm:$0xff]
  %v200 = vld [vmem:[%s0 + $0x318] sm:$0xff]
  %v201 = vld [vmem:[%s0 + $0x320] sm:$0xff]
  %v202 = vld [vmem:[%s0 + $0x328] sm:$0xff]
  %v203 = vld [vmem:[%s0 + $0x330] sm:$0xff]
  %v204 = vld [vmem:[%s0 + $0x338] sm:$0xff]
  %v205 = vld [vmem:[%s0 + $0x340] sm:$0xff]
  %v206 = vld [vmem:[%s0 + $0x348] sm:$0xff]
  %v207 = vld [vmem:[%s0 + $0x350] sm:$0xff]
  %v208 = vld [vmem:[%s0 + $0x358] sm:$0xff]
  %v209 = vld [vmem:[%s0 + $0x360] sm:$0xff]
  %v210 = vld [vmem:[%s0 + $0x368] sm:$0xff]
  %v211 = vld [vmem:[%s0 + $0x370] sm:$0xff]
  %v212 = vld [vmem:[%s0 + $0x378] sm:$0xff]
  %v213 = vld [vmem:[%s0 + $0x380] sm:$0xff]
  %v214 = vld [vmem:[%s0 + $0x388] sm:$0xff]
  %v215 = vld [vmem:[%s0 + $0x390] sm:$0xff]
  %v216 = vld [vmem:[%s0 + $0x398] sm:$0xff]
  %v217 = vld [vmem:[%s0 + $0x3a0] sm:$0xff]
  %v218 = vld [vmem:[%s0 + $0x3a8] sm:$0xff]
  %v219 = vld [vmem:[%s0 + $0x3b0] sm:$0xff]
  %v220 = vld [vmem:[%s0 + $0x3b8] sm:$0xff]
  %v221 = vld [vmem:[%s0 + $0x3c0] sm:$0xff]
  %v222 = vld [vmem:[%s0 + $0x3c8] sm:$0xff]
  %v223 = vld [vmem:[%s0 + $0x3d0] sm:$0xff]
  %v224 = vld [vmem:[%s0 + $0x3d8] sm:$0xff]
  %v225 = vld [vmem:[%s0 + $0x3e0] sm:$0xff]
  %v226 = vld [vmem:[%s0 + $0x3e8] sm:$0xff]
  %v227 = vld [vmem:[%s0 + $0x3f0] sm:$0xff]
  %v228 = vld [vmem:[%s0 + $0x3f8] sm:$0xff]
  %v229 = vld [vmem:[%s0 + $0x400] sm:$0xff]
  %v230 = vld [vmem:[%s0 + $0x408] sm:$0xff]
  %v231 = vld [vmem:[%s0 + $0x410] sm:$0xff]
  %v232 = vld [vmem:[%s0 + $0x418] sm:$0xff]
  %v233 = vld [vmem:[%s0 + $0x420] sm:$0xff]
  %v234 = vld [vmem:[%s0 + $0x428] sm:$0xff]
  %v235 = vld [vmem:[%s0 + $0x430] sm:$0xff]
  %v236 = vld [vmem:[%s0 + $0x438] sm:$0xff]
  %v237 = vld [vmem:[%s0 + $0x440] sm:$0xff]
  %v238 = vld [vmem:[%s0 + $0x448] sm:$0xff]
  %v239 = vld [vmem:[%s0 + $0x450] sm:$0xff]
  %v240 = vld [vmem:[%s0 + $0x458] sm:$0xff]
  %v241 = vld [vmem:[%s0 + $0x460] sm:$0xff]
  %v242 = vld [vmem:[%s0 + $0x468] sm:$0xff]
  %v243 = vld [vmem:[%s0 + $0x470] sm:$0xff]
  %v244 = vld [vmem:[%s0 + $0x478] sm:$0xff]
  %v245 = vld [vmem:[%s0 + $0x480] sm:$0xff]
  %v246 = vld [vmem:[%s0 + $0x488] sm:$0xff]
  %v247 = vld [vmem:[%s0 + $0x490] sm:$0xff]
  %v248 = vld [vmem:[%s0 + $0x498] sm:$0xff]
  %v249 = vld [vmem:[%s0 + $0x4a0] sm:$0xff]
  %v250 = vld [vmem:[%s0 + $0x4a8] sm:$0xff]
  %v251 = vld [vmem:[%s0 + $0x4b0] sm:$0xff]
  %v252 = vld [vmem:[%s0 + $0x4b8] sm:$0xff]
  %v253 = vld [vmem:[%s0 + $0x4c0] sm:$0xff]
  %v254 = vld [vmem:[%s0 + $0x4c8] sm:$0xff]
  %v255 = vld [vmem:[%s0 + $0x4d0] sm:$0xff]
  %v256 = vld [vmem:[%s0 + $0x4d8] sm:$0xff]
  %v257 = vld [vmem:[%s0 + $0x4e0] sm:$0xff]
  %v258 = vld [vmem:[%s0 + $0x4e8] sm:$0xff]
  %v259 = vld [vmem:[%s0 + $0x4f0] sm:$0xff]
  %v260 = vld [vmem:[%s0 + $0x4f8] sm:$0xff]
  %v261 = vld [vmem:[%s0 + $0x500] sm:$0xff]
  %v262 = vld [vmem:[%s0 + $0x508] sm:$0xff]
  %v263 = vld [vmem:[%s0 + $0x510] sm:$0xff]
  %v264 = vld [vmem:[%s0 + $0x518] sm:$0xff]
  %v265 = vld [vmem:[%s0 + $0x520] sm:$0xff]
  %v266 = vld [vmem:[%s0 + $0x528] sm:$0xff]
  %v267 = vld [vmem:[%s0 + $0x530] sm:$0xff]
  %v268 = vld [vmem:[%s0 + $0x538] sm:$0xff]
  %v269 = vld [vmem:[%s0 + $0x540] sm:$0xff]
  %v270 = vld [vmem:[%s0 + $0x548] sm:$0xff]
  %v271 = vld [vmem:[%s0 + $0x550] sm:$0xff]
  %v272 = vld [vmem:[%s0 + $0x558] sm:$0xff]
  %v273 = vld [vmem:[%s0 + $0x560] sm:$0xff]
  %v274 = vld [vmem:[%s0 + $0x568] sm:$0xff]
  %v275 = vld [vmem:[%s0 + $0x570] sm:$0xff]
  %v276 = vld [vmem:[%s0 + $0x578] sm:$0xff]
  %v277 = vld [vmem:[%s0 + $0x580] sm:$0xff]
  %v278 = vld [vmem:[%s0 + $0x588] sm:$0xff]
  %v279 = vld [vmem:[%s0 + $0x590] sm:$0xff]
  %v280 = vld [vmem:[%s0 + $0x598] sm:$0xff]
  %v281 = vld [vmem:[%s0 + $0x5a0] sm:$0xff]
  %v282 = vld [vmem:[%s0 + $0x5a8] sm:$0xff]
  %v283 = vld [vmem:[%s0 + $0x5b0] sm:$0xff]
  %v284 = vld [vmem:[%s0 + $0x5b8] sm:$0xff]
  %v285 = vld [vmem:[%s0 + $0x5c0] sm:$0xff]
  %v286 = vld [vmem:[%s0 + $0x5c8] sm:$0xff]
  %v287 = vld [vmem:[%s0 + $0x5d0] sm:$0xff]
  %v288 = vld [vmem:[%s0 + $0x5d8] sm:$0xff]
  %v289 = vld [vmem:[%s0 + $0x5e0] sm:$0xff]
  %v290 = vld [vmem:[%s0 + $0x5e8] sm:$0xff]
  %v291 = vld [vmem:[%s0 + $0x5f0] sm:$0xff]
  %v292 = vld [vmem:[%s0 + $0x5f8] sm:$0xff]
  %v293 = vld [vmem:[%s0 + $0x600] sm:$0xff]
  %v294 = vld [vmem:[%s0 + $0x608] sm:$0xff]
  %v295 = vld [vmem:[%s0 + $0x610] sm:$0xff]
  %v296 = vld [vmem:[%s0 + $0x618] sm:$0xff]
  %v297 = vld [vmem:[%s0 + $0x620] sm:$0xff]
  %v298 = vld [vmem:[%s0 + $0x628] sm:$0xff]
  %v299 = vld [vmem:[%s0 + $0x630] sm:$0xff]
  %v300 = vld [vmem:[%s0 + $0x638] sm:$0xff]
  %v301 = vld [vmem:[%s0 + $0x640] sm:$0xff]
  %v302 = vld [vmem:[%s0 + $0x648] sm:$0xff]
  %v303 = vld [vmem:[%s0 + $0x650] sm:$0xff]
  %v304 = vld [vmem:[%s0 + $0x658] sm:$0xff]
  %v305 = vld [vmem:[%s0 + $0x660] sm:$0xff]
  %v306 = vld [vmem:[%s0 + $0x668] sm:$0xff]
  %v307 = vld [vmem:[%s0 + $0x670] sm:$0xff]
  %v308 = vld [vmem:[%s0 + $0x678] sm:$0xff]
  %v309 = vld [vmem:[%s0 + $0x680] sm:$0xff]
  %v310 = vld [vmem:[%s0 + $0x688] sm:$0xff]
  %v311 = vld [vmem:[%s0 + $0x690] sm:$0xff]
  %v312 = vld [vmem:[%s0 + $0x698] sm:$0xff]
  %v313 = vld [vmem:[%s0 + $0x6a0] sm:$0xff]
  %v314 = vld [vmem:[%s0 + $0x6a8] sm:$0xff]
  %v315 = vld [vmem:[%s0 + $0x6b0] sm:$0xff]
  %v316 = vld [vmem:[%s0 + $0x6b8] sm:$0xff]
  %v317 = vld [vmem:[%s0 + $0x6c0] sm:$0xff]
  %v318 = vld [vmem:[%s0 + $0x6c8] sm:$0xff]
  %v319 = vld [vmem:[%s0 + $0x6d0] sm:$0xff]
  %v320 = vld [vmem:[%s0 + $0x6d8] sm:$0xff]
  %v321 = vld [vmem:[%s0 + $0x6e0] sm:$0xff]
  %v322 = vld [vmem:[%s0 + $0x6e8] sm:$0xff]
  %v323 = vld [vmem:[%s0 + $0x6f0] sm:$0xff]
  %v324 = vld [vmem:[%s0 + $0x6f8] sm:$0xff]
  %v325 = vld [vmem:[%s0 + $0x700] sm:$0xff]
  %v326 = vld [vmem:[%s0 + $0x708] sm:$0xff]
  %v327 = vld [vmem:[%s0 + $0x710] sm:$0xff]
  %v328 = vld [vmem:[%s0 + $0x718] sm:$0xff]
  %v329 = vld [vmem:[%s0 + $0x720] sm:$0xff]
  %v330 = vld [vmem:[%s0 + $0x728] sm:$0xff]
  %v331 = vld [vmem:[%s0 + $0x730] sm:$0xff]
  %v332 = vld [vmem:[%s0 + $0x738] sm:$0xff]
  %v333 = vld [vmem:[%s0 + $0x740] sm:$0xff]
  %v334 = vld [vmem:[%s0 + $0x748] sm:$0xff]
  %v335 = vld [vmem:[%s0 + $0x750] sm:$0xff]
  %v336 = vld [vmem:[%s0 + $0x758] sm:$0xff]
  %v337 = vld [vmem:[%s0 + $0x760] sm:$0xff]
  %v338 = vld [vmem:[%s0 + $0x768] sm:$0xff]
  %v339 = vld [vmem:[%s0 + $0x770] sm:$0xff]
  %v340 = vld [vmem:[%s0 + $0x778] sm:$0xff]
  %v341 = vld [vmem:[%s0 + $0x780] sm:$0xff]
  %v342 = vld [vmem:[%s0 + $0x788] sm:$0xff]
  %v343 = vld [vmem:[%s0 + $0x790] sm:$0xff]
  %v344 = vld [vmem:[%s0 + $0x798] sm:$0xff]
  %v345 = vld [vmem:[%s0 + $0x7a0] sm:$0xff]
  %v346 = vld [vmem:[%s0 + $0x7a8] sm:$0xff]
  %v347 = vld [vmem:[%s0 + $0x7b0] sm:$0xff]
  %v348 = vld [vmem:[%s0 + $0x7b8] sm:$0xff]
  %v349 = vld [vmem:[%s0 + $0x7c0] sm:$0xff]
  %v350 = vld [vmem:[%s0 + $0x7c8] sm:$0xff]
  %v351 = vld [vmem:[%s0 + $0x7d0] sm:$0xff]
  %v352 = vld [vmem:[%s0 + $0x7d8] sm:$0xff]
  %v353 = vld [vmem:[%s0 + $0x7e0] sm:$0xff]
  %v354 = vld [vmem:[%s0 + $0x7e8] sm:$0xff]
  %v355 = vld [vmem:[%s0 + $0x7f0] sm:$0xff]
  %v356 = vld [vmem:[%s0 + $0x7f8] sm:$0xff]
  %357 = vmatprep.subr.mxu0 0.0
  %358 = vmatpush1.msra.mxu0 %v116
  %359 = vmatprep.subr.mxu0 0.0
  %360 = vmatpush1.msra.mxu0 %v115
  %361 = vmatprep.subr.mxu0 0.0
  %362 = vmatpush1.msra.mxu0 %v114
  %363 = vmatprep.subr.mxu0 0.0
  %364 = vmatpush1.msra.mxu0 %v113
  %365 = vmatprep.subr.mxu0 0.0
  %366 = vmatpush1.msra.mxu0 %v112
  %367 = vmatprep.subr.mxu0 0.0
  %368 = vmatpush1.msra.mxu0 %v111
  %369 = vmatprep.subr.mxu0 0.0
  %370 = vmatpush1.msra.mxu0 %v110
  %371 = vmatprep.subr.mxu0 0.0
  %372 = vmatpush1.msra.mxu0 %v109
  %373 = vmatprep.subr.mxu0 0.0
  %374 = vmatpush1.msra.mxu0 %v108
  %375 = vmatprep.subr.mxu0 0.0
  %376 = vmatpush1.msra.mxu0 %v107
  %377 = vmatprep.subr.mxu0 0.0
  %378 = vmatpush1.msra.mxu0 %v106
  %379 = vmatprep.subr.mxu0 0.0
  %380 = vmatpush1.msra.mxu0 %v105
  %381 = vmatprep.subr.mxu0 0.0
  %382 = vmatpush1.msra.mxu0 %v104
  %383 = vmatprep.subr.mxu0 0.0
  %384 = vmatpush1.msra.mxu0 %v103
  %385 = vmatprep.subr.mxu0 0.0
  %386 = vmatpush1.msra.mxu0 %v102
  %387 = vmatprep.subr.mxu0 0.0
  %388 = vmatpush1.msra.mxu0 %v101
  %389 = vmatprep.subr.mxu0 0.0
  %390 = vmatpush2.msra.mxu0 %v132
  %391 = vmatprep.subr.mxu0 0.0
  %392 = vmatpush2.msra.mxu0 %v131
  %393 = vmatprep.subr.mxu0 0.0
  %394 = vmatpush2.msra.mxu0 %v130
  %395 = vmatprep.subr.mxu0 0.0
  %396 = vmatpush2.msra.mxu0 %v129
  %397 = vmatprep.subr.mxu0 0.0
  %398 = vmatpush2.msra.mxu0 %v128
  %399 = vmatprep.subr.mxu0 0.0
  %400 = vmatpush2.msra.mxu0 %v127
  %401 = vmatprep.subr.mxu0 0.0
  %402 = vmatpush2.msra.mxu0 %v126
  %403 = vmatprep.subr.mxu0 0.0
  %404 = vmatpush2.msra.mxu0 %v125
  %405 = vmatprep.subr.mxu0 0.0
  %406 = vmatpush2.msra.mxu0 %v124
  %407 = vmatprep.subr.mxu0 0.0
  %408 = vmatpush2.msra.mxu0 %v123
  %409 = vmatprep.subr.mxu0 0.0
  %410 = vmatpush2.msra.mxu0 %v122
  %411 = vmatprep.subr.mxu0 0.0
  %412 = vmatpush2.msra.mxu0 %v121
  %413 = vmatprep.subr.mxu0 0.0
  %414 = vmatpush2.msra.mxu0 %v120
  %415 = vmatprep.subr.mxu0 0.0
  %416 = vmatpush2.msra.mxu0 %v119
  %417 = vmatprep.subr.mxu0 0.0
  %418 = vmatpush2.msra.mxu0 %v118
  %419 = vmatprep.subr.mxu0 0.0
  %420 = vmatpush2.msra.mxu0 %v117
  %421 = vmatprep.mubr.f32.mxu0 %v27
  %422 = vmatmul.mubr.f32.gmra.mxu0 %v26
  %v423 = vpop.f32.mrf.mxu0
  %v424 = vadd.f32 0.0, %v423
  %v425 = vpop.f32.mrf.mxu0
  %426 = vmatprep.mubr.f32.mxu0 %v43
  %427 = vmatmul.mubr.f32.gmra.mxu0 %v42
  %v428 = vpop.f32.mrf.mxu0
  %v429 = vadd.f32 0.0, %v428
  %v430 = vpop.f32.mrf.mxu0
  %431 = vmatprep.mubr.f32.mxu0 %v59
  %432 = vmatmul.mubr.f32.gmra.mxu0 %v58
  %v433 = vpop.f32.mrf.mxu0
  %v434 = vadd.f32 0.0, %v433
  %v435 = vpop.f32.mrf.mxu0
  %436 = vmatprep.mubr.f32.mxu0 %v75
  %437 = vmatmul.mubr.f32.gmra.mxu0 %v74
  %v438 = vpop.f32.mrf.mxu0
  %v439 = vadd.f32 0.0, %v438
  %v440 = vpop.f32.mrf.mxu0
  %441 = vdwg.mxu0
  %442 = vmatprep.subr.mxu0 0.0
  %443 = vmatpush1.msra.mxu0 %v148
  %444 = vmatprep.subr.mxu0 0.0
  %445 = vmatpush1.msra.mxu0 %v147
  %446 = vmatprep.subr.mxu0 0.0
  %447 = vmatpush1.msra.mxu0 %v146
  %448 = vmatprep.subr.mxu0 0.0
  %449 = vmatpush1.msra.mxu0 %v145
  %450 = vmatprep.subr.mxu0 0.0
  %451 = vmatpush1.msra.mxu0 %v144
  %452 = vmatprep.subr.mxu0 0.0
  %453 = vmatpush1.msra.mxu0 %v143
  %454 = vmatprep.subr.mxu0 0.0
  %455 = vmatpush1.msra.mxu0 %v142
  %456 = vmatprep.subr.mxu0 0.0
  %457 = vmatpush1.msra.mxu0 %v141
  %458 = vmatprep.subr.mxu0 0.0
  %459 = vmatpush1.msra.mxu0 %v140
  %460 = vmatprep.subr.mxu0 0.0
  %461 = vmatpush1.msra.mxu0 %v139
  %462 = vmatprep.subr.mxu0 0.0
  %463 = vmatpush1.msra.mxu0 %v138
  %464 = vmatprep.subr.mxu0 0.0
  %465 = vmatpush1.msra.mxu0 %v137
  %466 = vmatprep.subr.mxu0 0.0
  %467 = vmatpush1.msra.mxu0 %v136
  %468 = vmatprep.subr.mxu0 0.0
  %469 = vmatpush1.msra.mxu0 %v135
  %470 = vmatprep.subr.mxu0 0.0
  %471 = vmatpush1.msra.mxu0 %v134
  %472 = vmatprep.subr.mxu0 0.0
  %473 = vmatpush1.msra.mxu0 %v133
  %474 = vmatprep.subr.mxu0 0.0
  %475 = vmatpush2.msra.mxu0 %v164
  %476 = vmatprep.subr.mxu0 0.0
  %477 = vmatpush2.msra.mxu0 %v163
  %478 = vmatprep.subr.mxu0 0.0
  %479 = vmatpush2.msra.mxu0 %v162
  %480 = vmatprep.subr.mxu0 0.0
  %481 = vmatpush2.msra.mxu0 %v161
  %482 = vmatprep.subr.mxu0 0.0
  %483 = vmatpush2.msra.mxu0 %v160
  %484 = vmatprep.subr.mxu0 0.0
  %485 = vmatpush2.msra.mxu0 %v159
  %486 = vmatprep.subr.mxu0 0.0
  %487 = vmatpush2.msra.mxu0 %v158
  %488 = vmatprep.subr.mxu0 0.0
  %489 = vmatpush2.msra.mxu0 %v157
  %490 = vmatprep.subr.mxu0 0.0
  %491 = vmatpush2.msra.mxu0 %v156
  %492 = vmatprep.subr.mxu0 0.0
  %493 = vmatpush2.msra.mxu0 %v155
  %494 = vmatprep.subr.mxu0 0.0
  %495 = vmatpush2.msra.mxu0 %v154
  %496 = vmatprep.subr.mxu0 0.0
  %497 = vmatpush2.msra.mxu0 %v153
  %498 = vmatprep.subr.mxu0 0.0
  %499 = vmatpush2.msra.mxu0 %v152
  %500 = vmatprep.subr.mxu0 0.0
  %501 = vmatpush2.msra.mxu0 %v151
  %502 = vmatprep.subr.mxu0 0.0
  %503 = vmatpush2.msra.mxu0 %v150
  %504 = vmatprep.subr.mxu0 0.0
  %505 = vmatpush2.msra.mxu0 %v149
  %506 = vmatprep.mubr.f32.mxu0 %v29
  %507 = vmatmul.mubr.f32.gmra.mxu0 %v28
  %v508 = vpop.f32.mrf.mxu0
  %v509 = vadd.f32 %v424, %v508
  %v510 = vpop.f32.mrf.mxu0
  %511 = vmatprep.mubr.f32.mxu0 %v45
  %512 = vmatmul.mubr.f32.gmra.mxu0 %v44
  %v513 = vpop.f32.mrf.mxu0
  %v514 = vadd.f32 %v429, %v513
  %v515 = vpop.f32.mrf.mxu0
  %516 = vmatprep.mubr.f32.mxu0 %v61
  %517 = vmatmul.mubr.f32.gmra.mxu0 %v60
  %v518 = vpop.f32.mrf.mxu0
  %v519 = vadd.f32 %v434, %v518
  %v520 = vpop.f32.mrf.mxu0
  %521 = vmatprep.mubr.f32.mxu0 %v77
  %522 = vmatmul.mubr.f32.gmra.mxu0 %v76
  %v523 = vpop.f32.mrf.mxu0
  %v524 = vadd.f32 %v439, %v523
  %v525 = vpop.f32.mrf.mxu0
  %526 = vdwg.mxu0
  %527 = vmatprep.subr.mxu0 0.0
  %528 = vmatpush1.msra.mxu0 %v180
  %529 = vmatprep.subr.mxu0 0.0
  %530 = vmatpush1.msra.mxu0 %v179
  %531 = vmatprep.subr.mxu0 0.0
  %532 = vmatpush1.msra.mxu0 %v178
  %533 = vmatprep.subr.mxu0 0.0
  %534 = vmatpush1.msra.mxu0 %v177
  %535 = vmatprep.subr.mxu0 0.0
  %536 = vmatpush1.msra.mxu0 %v176
  %537 = vmatprep.subr.mxu0 0.0
  %538 = vmatpush1.msra.mxu0 %v175
  %539 = vmatprep.subr.mxu0 0.0
  %540 = vmatpush1.msra.mxu0 %v174
  %541 = vmatprep.subr.mxu0 0.0
  %542 = vmatpush1.msra.mxu0 %v173
  %543 = vmatprep.subr.mxu0 0.0
  %544 = vmatpush1.msra.mxu0 %v172
  %545 = vmatprep.subr.mxu0 0.0
  %546 = vmatpush1.msra.mxu0 %v171
  %547 = vmatprep.subr.mxu0 0.0
  %548 = vmatpush1.msra.mxu0 %v170
  %549 = vmatprep.subr.mxu0 0.0
  %550 = vmatpush1.msra.mxu0 %v169
  %551 = vmatprep.subr.mxu0 0.0
  %552 = vmatpush1.msra.mxu0 %v168
  %553 = vmatprep.subr.mxu0 0.0
  %554 = vmatpush1.msra.mxu0 %v167
  %555 = vmatprep.subr.mxu0 0.0
  %556 = vmatpush1.msra.mxu0 %v166
  %557 = vmatprep.subr.mxu0 0.0
  %558 = vmatpush1.msra.mxu0 %v165
  %559 = vmatprep.subr.mxu0 0.0
  %560 = vmatpush2.msra.mxu0 %v196
  %561 = vmatprep.subr.mxu0 0.0
  %562 = vmatpush2.msra.mxu0 %v195
  %563 = vmatprep.subr.mxu0 0.0
  %564 = vmatpush2.msra.mxu0 %v194
  %565 = vmatprep.subr.mxu0 0.0
  %566 = vmatpush2.msra.mxu0 %v193
  %567 = vmatprep.subr.mxu0 0.0
  %568 = vmatpush2.msra.mxu0 %v192
  %569 = vmatprep.subr.mxu0 0.0
  %570 = vmatpush2.msra.mxu0 %v191
  %571 = vmatprep.subr.mxu0 0.0
  %572 = vmatpush2.msra.mxu0 %v190
  %573 = vmatprep.subr.mxu0 0.0
  %574 = vmatpush2.msra.mxu0 %v189
  %575 = vmatprep.subr.mxu0 0.0
  %576 = vmatpush2.msra.mxu0 %v188
  %577 = vmatprep.subr.mxu0 0.0
  %578 = vmatpush2.msra.mxu0 %v187
  %579 = vmatprep.subr.mxu0 0.0
  %580 = vmatpush2.msra.mxu0 %v186
  %581 = vmatprep.subr.mxu0 0.0
  %582 = vmatpush2.msra.mxu0 %v185
  %583 = vmatprep.subr.mxu0 0.0
  %584 = vmatpush2.msra.mxu0 %v184
  %585 = vmatprep.subr.mxu0 0.0
  %586 = vmatpush2.msra.mxu0 %v183
  %587 = vmatprep.subr.mxu0 0.0
  %588 = vmatpush2.msra.mxu0 %v182
  %589 = vmatprep.subr.mxu0 0.0
  %590 = vmatpush2.msra.mxu0 %v181
  %591 = vmatprep.mubr.f32.mxu0 %v31
  %592 = vmatmul.mubr.f32.gmra.mxu0 %v30
  %v593 = vpop.f32.mrf.mxu0
  %v594 = vadd.f32 %v509, %v593
  %v595 = vpop.f32.mrf.mxu0
  %596 = vmatprep.mubr.f32.mxu0 %v47
  %597 = vmatmul.mubr.f32.gmra.mxu0 %v46
  %v598 = vpop.f32.mrf.mxu0
  %v599 = vadd.f32 %v514, %v598
  %v600 = vpop.f32.mrf.mxu0
  %601 = vmatprep.mubr.f32.mxu0 %v63
  %602 = vmatmul.mubr.f32.gmra.mxu0 %v62
  %v603 = vpop.f32.mrf.mxu0
  %v604 = vadd.f32 %v519, %v603
  %v605 = vpop.f32.mrf.mxu0
  %606 = vmatprep.mubr.f32.mxu0 %v79
  %607 = vmatmul.mubr.f32.gmra.mxu0 %v78
  %v608 = vpop.f32.mrf.mxu0
  %v609 = vadd.f32 %v524, %v608
  %v610 = vpop.f32.mrf.mxu0
  %611 = vdwg.mxu0
  %612 = vmatprep.subr.mxu0 0.0
  %613 = vmatpush1.msra.mxu0 %v212
  %614 = vmatprep.subr.mxu0 0.0
  %615 = vmatpush1.msra.mxu0 %v211
  %616 = vmatprep.subr.mxu0 0.0
  %617 = vmatpush1.msra.mxu0 %v210
  %618 = vmatprep.subr.mxu0 0.0
  %619 = vmatpush1.msra.mxu0 %v209
  %620 = vmatprep.subr.mxu0 0.0
  %621 = vmatpush1.msra.mxu0 %v208
  %622 = vmatprep.subr.mxu0 0.0
  %623 = vmatpush1.msra.mxu0 %v207
  %624 = vmatprep.subr.mxu0 0.0
  %625 = vmatpush1.msra.mxu0 %v206
  %626 = vmatprep.subr.mxu0 0.0
  %627 = vmatpush1.msra.mxu0 %v205
  %628 = vmatprep.subr.mxu0 0.0
  %629 = vmatpush1.msra.mxu0 %v204
  %630 = vmatprep.subr.mxu0 0.0
  %631 = vmatpush1.msra.mxu0 %v203
  %632 = vmatprep.subr.mxu0 0.0
  %633 = vmatpush1.msra.mxu0 %v202
  %634 = vmatprep.subr.mxu0 0.0
  %635 = vmatpush1.msra.mxu0 %v201
  %636 = vmatprep.subr.mxu0 0.0
  %637 = vmatpush1.msra.mxu0 %v200
  %638 = vmatprep.subr.mxu0 0.0
  %639 = vmatpush1.msra.mxu0 %v199
  %640 = vmatprep.subr.mxu0 0.0
  %641 = vmatpush1.msra.mxu0 %v198
  %642 = vmatprep.subr.mxu0 0.0
  %643 = vmatpush1.msra.mxu0 %v197
  %644 = vmatprep.subr.mxu0 0.0
  %645 = vmatpush2.msra.mxu0 %v228
  %646 = vmatprep.subr.mxu0 0.0
  %647 = vmatpush2.msra.mxu0 %v227
  %648 = vmatprep.subr.mxu0 0.0
  %649 = vmatpush2.msra.mxu0 %v226
  %650 = vmatprep.subr.mxu0 0.0
  %651 = vmatpush2.msra.mxu0 %v225
  %652 = vmatprep.subr.mxu0 0.0
  %653 = vmatpush2.msra.mxu0 %v224
  %654 = vmatprep.subr.mxu0 0.0
  %655 = vmatpush2.msra.mxu0 %v223
  %656 = vmatprep.subr.mxu0 0.0
  %657 = vmatpush2.msra.mxu0 %v222
  %658 = vmatprep.subr.mxu0 0.0
  %659 = vmatpush2.msra.mxu0 %v221
  %660 = vmatprep.subr.mxu0 0.0
  %661 = vmatpush2.msra.mxu0 %v220
  %662 = vmatprep.subr.mxu0 0.0
  %663 = vmatpush2.msra.mxu0 %v219
  %664 = vmatprep.subr.mxu0 0.0
  %665 = vmatpush2.msra.mxu0 %v218
  %666 = vmatprep.subr.mxu0 0.0
  %667 = vmatpush2.msra.mxu0 %v217
  %668 = vmatprep.subr.mxu0 0.0
  %669 = vmatpush2.msra.mxu0 %v216
  %670 = vmatprep.subr.mxu0 0.0
  %671 = vmatpush2.msra.mxu0 %v215
  %672 = vmatprep.subr.mxu0 0.0
  %673 = vmatpush2.msra.mxu0 %v214
  %674 = vmatprep.subr.mxu0 0.0
  %675 = vmatpush2.msra.mxu0 %v213
  %676 = vmatprep.mubr.f32.mxu0 %v33
  %677 = vmatmul.mubr.f32.gmra.mxu0 %v32
  %v678 = vpop.f32.mrf.mxu0
  %v679 = vadd.f32 %v594, %v678
  %v680 = vpop.f32.mrf.mxu0
  %681 = vmatprep.mubr.f32.mxu0 %v49
  %682 = vmatmul.mubr.f32.gmra.mxu0 %v48
  %v683 = vpop.f32.mrf.mxu0
  %v684 = vadd.f32 %v599, %v683
  %v685 = vpop.f32.mrf.mxu0
  %686 = vmatprep.mubr.f32.mxu0 %v65
  %687 = vmatmul.mubr.f32.gmra.mxu0 %v64
  %v688 = vpop.f32.mrf.mxu0
  %v689 = vadd.f32 %v604, %v688
  %v690 = vpop.f32.mrf.mxu0
  %691 = vmatprep.mubr.f32.mxu0 %v81
  %692 = vmatmul.mubr.f32.gmra.mxu0 %v80
  %v693 = vpop.f32.mrf.mxu0
  %v694 = vadd.f32 %v609, %v693
  %v695 = vpop.f32.mrf.mxu0
  %696 = vdwg.mxu0
  %697 = vmatprep.subr.mxu0 0.0
  %698 = vmatpush1.msra.mxu0 %v244
  %699 = vmatprep.subr.mxu0 0.0
  %700 = vmatpush1.msra.mxu0 %v243
  %701 = vmatprep.subr.mxu0 0.0
  %702 = vmatpush1.msra.mxu0 %v242
  %703 = vmatprep.subr.mxu0 0.0
  %704 = vmatpush1.msra.mxu0 %v241
  %705 = vmatprep.subr.mxu0 0.0
  %706 = vmatpush1.msra.mxu0 %v240
  %707 = vmatprep.subr.mxu0 0.0
  %708 = vmatpush1.msra.mxu0 %v239
  %709 = vmatprep.subr.mxu0 0.0
  %710 = vmatpush1.msra.mxu0 %v238
  %711 = vmatprep.subr.mxu0 0.0
  %712 = vmatpush1.msra.mxu0 %v237
  %713 = vmatprep.subr.mxu0 0.0
  %714 = vmatpush1.msra.mxu0 %v236
  %715 = vmatprep.subr.mxu0 0.0
  %716 = vmatpush1.msra.mxu0 %v235
  %717 = vmatprep.subr.mxu0 0.0
  %718 = vmatpush1.msra.mxu0 %v234
  %719 = vmatprep.subr.mxu0 0.0
  %720 = vmatpush1.msra.mxu0 %v233
  %721 = vmatprep.subr.mxu0 0.0
  %722 = vmatpush1.msra.mxu0 %v232
  %723 = vmatprep.subr.mxu0 0.0
  %724 = vmatpush1.msra.mxu0 %v231
  %725 = vmatprep.subr.mxu0 0.0
  %726 = vmatpush1.msra.mxu0 %v230
  %727 = vmatprep.subr.mxu0 0.0
  %728 = vmatpush1.msra.mxu0 %v229
  %729 = vmatprep.subr.mxu0 0.0
  %730 = vmatpush2.msra.mxu0 %v260
  %731 = vmatprep.subr.mxu0 0.0
  %732 = vmatpush2.msra.mxu0 %v259
  %733 = vmatprep.subr.mxu0 0.0
  %734 = vmatpush2.msra.mxu0 %v258
  %735 = vmatprep.subr.mxu0 0.0
  %736 = vmatpush2.msra.mxu0 %v257
  %737 = vmatprep.subr.mxu0 0.0
  %738 = vmatpush2.msra.mxu0 %v256
  %739 = vmatprep.subr.mxu0 0.0
  %740 = vmatpush2.msra.mxu0 %v255
  %741 = vmatprep.subr.mxu0 0.0
  %742 = vmatpush2.msra.mxu0 %v254
  %743 = vmatprep.subr.mxu0 0.0
  %744 = vmatpush2.msra.mxu0 %v253
  %745 = vmatprep.subr.mxu0 0.0
  %746 = vmatpush2.msra.mxu0 %v252
  %747 = vmatprep.subr.mxu0 0.0
  %748 = vmatpush2.msra.mxu0 %v251
  %749 = vmatprep.subr.mxu0 0.0
  %750 = vmatpush2.msra.mxu0 %v250
  %751 = vmatprep.subr.mxu0 0.0
  %752 = vmatpush2.msra.mxu0 %v249
  %753 = vmatprep.subr.mxu0 0.0
  %754 = vmatpush2.msra.mxu0 %v248
  %755 = vmatprep.subr.mxu0 0.0
  %756 = vmatpush2.msra.mxu0 %v247
  %757 = vmatprep.subr.mxu0 0.0
  %758 = vmatpush2.msra.mxu0 %v246
  %759 = vmatprep.subr.mxu0 0.0
  %760 = vmatpush2.msra.mxu0 %v245
  %761 = vmatprep.mubr.f32.mxu0 %v35
  %762 = vmatmul.mubr.f32.gmra.mxu0 %v34
  %v763 = vpop.f32.mrf.mxu0
  %v764 = vadd.f32 %v679, %v763
  %v765 = vpop.f32.mrf.mxu0
  %766 = vmatprep.mubr.f32.mxu0 %v51
  %767 = vmatmul.mubr.f32.gmra.mxu0 %v50
  %v768 = vpop.f32.mrf.mxu0
  %v769 = vadd.f32 %v684, %v768
  %v770 = vpop.f32.mrf.mxu0
  %771 = vmatprep.mubr.f32.mxu0 %v67
  %772 = vmatmul.mubr.f32.gmra.mxu0 %v66
  %v773 = vpop.f32.mrf.mxu0
  %v774 = vadd.f32 %v689, %v773
  %v775 = vpop.f32.mrf.mxu0
  %776 = vmatprep.mubr.f32.mxu0 %v83
  %777 = vmatmul.mubr.f32.gmra.mxu0 %v82
  %v778 = vpop.f32.mrf.mxu0
  %v779 = vadd.f32 %v694, %v778
  %v780 = vpop.f32.mrf.mxu0
  %781 = vdwg.mxu0
  %782 = vmatprep.subr.mxu0 0.0
  %783 = vmatpush1.msra.mxu0 %v276
  %784 = vmatprep.subr.mxu0 0.0
  %785 = vmatpush1.msra.mxu0 %v275
  %786 = vmatprep.subr.mxu0 0.0
  %787 = vmatpush1.msra.mxu0 %v274
  %788 = vmatprep.subr.mxu0 0.0
  %789 = vmatpush1.msra.mxu0 %v273
  %790 = vmatprep.subr.mxu0 0.0
  %791 = vmatpush1.msra.mxu0 %v272
  %792 = vmatprep.subr.mxu0 0.0
  %793 = vmatpush1.msra.mxu0 %v271
  %794 = vmatprep.subr.mxu0 0.0
  %795 = vmatpush1.msra.mxu0 %v270
  %796 = vmatprep.subr.mxu0 0.0
  %797 = vmatpush1.msra.mxu0 %v269
  %798 = vmatprep.subr.mxu0 0.0
  %799 = vmatpush1.msra.mxu0 %v268
  %800 = vmatprep.subr.mxu0 0.0
  %801 = vmatpush1.msra.mxu0 %v267
  %802 = vmatprep.subr.mxu0 0.0
  %803 = vmatpush1.msra.mxu0 %v266
  %804 = vmatprep.subr.mxu0 0.0
  %805 = vmatpush1.msra.mxu0 %v265
  %806 = vmatprep.subr.mxu0 0.0
  %807 = vmatpush1.msra.mxu0 %v264
  %808 = vmatprep.subr.mxu0 0.0
  %809 = vmatpush1.msra.mxu0 %v263
  %810 = vmatprep.subr.mxu0 0.0
  %811 = vmatpush1.msra.mxu0 %v262
  %812 = vmatprep.subr.mxu0 0.0
  %813 = vmatpush1.msra.mxu0 %v261
  %814 = vmatprep.subr.mxu0 0.0
  %815 = vmatpush2.msra.mxu0 %v292
  %816 = vmatprep.subr.mxu0 0.0
  %817 = vmatpush2.msra.mxu0 %v291
  %818 = vmatprep.subr.mxu0 0.0
  %819 = vmatpush2.msra.mxu0 %v290
  %820 = vmatprep.subr.mxu0 0.0
  %821 = vmatpush2.msra.mxu0 %v289
  %822 = vmatprep.subr.mxu0 0.0
  %823 = vmatpush2.msra.mxu0 %v288
  %824 = vmatprep.subr.mxu0 0.0
  %825 = vmatpush2.msra.mxu0 %v287
  %826 = vmatprep.subr.mxu0 0.0
  %827 = vmatpush2.msra.mxu0 %v286
  %828 = vmatprep.subr.mxu0 0.0
  %829 = vmatpush2.msra.mxu0 %v285
  %830 = vmatprep.subr.mxu0 0.0
  %831 = vmatpush2.msra.mxu0 %v284
  %832 = vmatprep.subr.mxu0 0.0
  %833 = vmatpush2.msra.mxu0 %v283
  %834 = vmatprep.subr.mxu0 0.0
  %835 = vmatpush2.msra.mxu0 %v282
  %836 = vmatprep.subr.mxu0 0.0
  %837 = vmatpush2.msra.mxu0 %v281
  %838 = vmatprep.subr.mxu0 0.0
  %839 = vmatpush2.msra.mxu0 %v280
  %840 = vmatprep.subr.mxu0 0.0
  %841 = vmatpush2.msra.mxu0 %v279
  %842 = vmatprep.subr.mxu0 0.0
  %843 = vmatpush2.msra.mxu0 %v278
  %844 = vmatprep.subr.mxu0 0.0
  %845 = vmatpush2.msra.mxu0 %v277
  %846 = vmatprep.mubr.f32.mxu0 %v37
  %847 = vmatmul.mubr.f32.gmra.mxu0 %v36
  %v848 = vpop.f32.mrf.mxu0
  %v849 = vadd.f32 %v764, %v848
  %v850 = vpop.f32.mrf.mxu0
  %851 = vmatprep.mubr.f32.mxu0 %v53
  %852 = vmatmul.mubr.f32.gmra.mxu0 %v52
  %v853 = vpop.f32.mrf.mxu0
  %v854 = vadd.f32 %v769, %v853
  %v855 = vpop.f32.mrf.mxu0
  %856 = vmatprep.mubr.f32.mxu0 %v69
  %857 = vmatmul.mubr.f32.gmra.mxu0 %v68
  %v858 = vpop.f32.mrf.mxu0
  %v859 = vadd.f32 %v774, %v858
  %v860 = vpop.f32.mrf.mxu0
  %861 = vmatprep.mubr.f32.mxu0 %v85
  %862 = vmatmul.mubr.f32.gmra.mxu0 %v84
  %v863 = vpop.f32.mrf.mxu0
  %v864 = vadd.f32 %v779, %v863
  %v865 = vpop.f32.mrf.mxu0
  %866 = vdwg.mxu0
  %867 = vmatprep.subr.mxu0 0.0
  %868 = vmatpush1.msra.mxu0 %v308
  %869 = vmatprep.subr.mxu0 0.0
  %870 = vmatpush1.msra.mxu0 %v307
  %871 = vmatprep.subr.mxu0 0.0
  %872 = vmatpush1.msra.mxu0 %v306
  %873 = vmatprep.subr.mxu0 0.0
  %874 = vmatpush1.msra.mxu0 %v305
  %875 = vmatprep.subr.mxu0 0.0
  %876 = vmatpush1.msra.mxu0 %v304
  %877 = vmatprep.subr.mxu0 0.0
  %878 = vmatpush1.msra.mxu0 %v303
  %879 = vmatprep.subr.mxu0 0.0
  %880 = vmatpush1.msra.mxu0 %v302
  %881 = vmatprep.subr.mxu0 0.0
  %882 = vmatpush1.msra.mxu0 %v301
  %883 = vmatprep.subr.mxu0 0.0
  %884 = vmatpush1.msra.mxu0 %v300
  %885 = vmatprep.subr.mxu0 0.0
  %886 = vmatpush1.msra.mxu0 %v299
  %887 = vmatprep.subr.mxu0 0.0
  %888 = vmatpush1.msra.mxu0 %v298
  %889 = vmatprep.subr.mxu0 0.0
  %890 = vmatpush1.msra.mxu0 %v297
  %891 = vmatprep.subr.mxu0 0.0
  %892 = vmatpush1.msra.mxu0 %v296
  %893 = vmatprep.subr.mxu0 0.0
  %894 = vmatpush1.msra.mxu0 %v295
  %895 = vmatprep.subr.mxu0 0.0
  %896 = vmatpush1.msra.mxu0 %v294
  %897 = vmatprep.subr.mxu0 0.0
  %898 = vmatpush1.msra.mxu0 %v293
  %899 = vmatprep.subr.mxu0 0.0
  %900 = vmatpush2.msra.mxu0 %v324
  %901 = vmatprep.subr.mxu0 0.0
  %902 = vmatpush2.msra.mxu0 %v323
  %903 = vmatprep.subr.mxu0 0.0
  %904 = vmatpush2.msra.mxu0 %v322
  %905 = vmatprep.subr.mxu0 0.0
  %906 = vmatpush2.msra.mxu0 %v321
  %907 = vmatprep.subr.mxu0 0.0
  %908 = vmatpush2.msra.mxu0 %v320
  %909 = vmatprep.subr.mxu0 0.0
  %910 = vmatpush2.msra.mxu0 %v319
  %911 = vmatprep.subr.mxu0 0.0
  %912 = vmatpush2.msra.mxu0 %v318
  %913 = vmatprep.subr.mxu0 0.0
  %914 = vmatpush2.msra.mxu0 %v317
  %915 = vmatprep.subr.mxu0 0.0
  %916 = vmatpush2.msra.mxu0 %v316
  %917 = vmatprep.subr.mxu0 0.0
  %918 = vmatpush2.msra.mxu0 %v315
  %919 = vmatprep.subr.mxu0 0.0
  %920 = vmatpush2.msra.mxu0 %v314
  %921 = vmatprep.subr.mxu0 0.0
  %922 = vmatpush2.msra.mxu0 %v313
  %923 = vmatprep.subr.mxu0 0.0
  %924 = vmatpush2.msra.mxu0 %v312
  %925 = vmatprep.subr.mxu0 0.0
  %926 = vmatpush2.msra.mxu0 %v311
  %927 = vmatprep.subr.mxu0 0.0
  %928 = vmatpush2.msra.mxu0 %v310
  %929 = vmatprep.subr.mxu0 0.0
  %930 = vmatpush2.msra.mxu0 %v309
  %931 = vmatprep.mubr.f32.mxu0 %v39
  %932 = vmatmul.mubr.f32.gmra.mxu0 %v38
  %v933 = vpop.f32.mrf.mxu0
  %v934 = vadd.f32 %v849, %v933
  %v935 = vpop.f32.mrf.mxu0
  %936 = vmatprep.mubr.f32.mxu0 %v55
  %937 = vmatmul.mubr.f32.gmra.mxu0 %v54
  %v938 = vpop.f32.mrf.mxu0
  %v939 = vadd.f32 %v854, %v938
  %v940 = vpop.f32.mrf.mxu0
  %941 = vmatprep.mubr.f32.mxu0 %v71
  %942 = vmatmul.mubr.f32.gmra.mxu0 %v70
  %v943 = vpop.f32.mrf.mxu0
  %v944 = vadd.f32 %v859, %v943
  %v945 = vpop.f32.mrf.mxu0
  %946 = vmatprep.mubr.f32.mxu0 %v87
  %947 = vmatmul.mubr.f32.gmra.mxu0 %v86
  %v948 = vpop.f32.mrf.mxu0
  %v949 = vadd.f32 %v864, %v948
  %v950 = vpop.f32.mrf.mxu0
  %951 = vdwg.mxu0
  %952 = vmatprep.subr.mxu0 0.0
  %953 = vmatpush1.msra.mxu0 %v340
  %954 = vmatprep.subr.mxu0 0.0
  %955 = vmatpush1.msra.mxu0 %v339
  %956 = vmatprep.subr.mxu0 0.0
  %957 = vmatpush1.msra.mxu0 %v338
  %958 = vmatprep.subr.mxu0 0.0
  %959 = vmatpush1.msra.mxu0 %v337
  %960 = vmatprep.subr.mxu0 0.0
  %961 = vmatpush1.msra.mxu0 %v336
  %962 = vmatprep.subr.mxu0 0.0
  %963 = vmatpush1.msra.mxu0 %v335
  %964 = vmatprep.subr.mxu0 0.0
  %965 = vmatpush1.msra.mxu0 %v334
  %966 = vmatprep.subr.mxu0 0.0
  %967 = vmatpush1.msra.mxu0 %v333
  %968 = vmatprep.subr.mxu0 0.0
  %969 = vmatpush1.msra.mxu0 %v332
  %970 = vmatprep.subr.mxu0 0.0
  %971 = vmatpush1.msra.mxu0 %v331
  %972 = vmatprep.subr.mxu0 0.0
  %973 = vmatpush1.msra.mxu0 %v330
  %974 = vmatprep.subr.mxu0 0.0
  %975 = vmatpush1.msra.mxu0 %v329
  %976 = vmatprep.subr.mxu0 0.0
  %977 = vmatpush1.msra.mxu0 %v328
  %978 = vmatprep.subr.mxu0 0.0
  %979 = vmatpush1.msra.mxu0 %v327
  %980 = vmatprep.subr.mxu0 0.0
  %981 = vmatpush1.msra.mxu0 %v326
  %982 = vmatprep.subr.mxu0 0.0
  %983 = vmatpush1.msra.mxu0 %v325
  %984 = vmatprep.subr.mxu0 0.0
  %985 = vmatpush2.msra.mxu0 %v356
  %986 = vmatprep.subr.mxu0 0.0
  %987 = vmatpush2.msra.mxu0 %v355
  %988 = vmatprep.subr.mxu0 0.0
  %989 = vmatpush2.msra.mxu0 %v354
  %990 = vmatprep.subr.mxu0 0.0
  %991 = vmatpush2.msra.mxu0 %v353
  %992 = vmatprep.subr.mxu0 0.0
  %993 = vmatpush2.msra.mxu0 %v352
  %994 = vmatprep.subr.mxu0 0.0
  %995 = vmatpush2.msra.mxu0 %v351
  %996 = vmatprep.subr.mxu0 0.0
  %997 = vmatpush2.msra.mxu0 %v350
  %998 = vmatprep.subr.mxu0 0.0
  %999 = vmatpush2.msra.mxu0 %v349
  %1000 = vmatprep.subr.mxu0 0.0
  %1001 = vmatpush2.msra.mxu0 %v348
  %1002 = vmatprep.subr.mxu0 0.0
  %1003 = vmatpush2.msra.mxu0 %v347
  %1004 = vmatprep.subr.mxu0 0.0
  %1005 = vmatpush2.msra.mxu0 %v346
  %1006 = vmatprep.subr.mxu0 0.0
  %1007 = vmatpush2.msra.mxu0 %v345
  %1008 = vmatprep.subr.mxu0 0.0
  %1009 = vmatpush2.msra.mxu0 %v344
  %1010 = vmatprep.subr.mxu0 0.0
  %1011 = vmatpush2.msra.mxu0 %v343
  %1012 = vmatprep.subr.mxu0 0.0
  %1013 = vmatpush2.msra.mxu0 %v342
  %1014 = vmatprep.subr.mxu0 0.0
  %1015 = vmatpush2.msra.mxu0 %v341
  %1016 = vmatprep.mubr.f32.mxu0 %v41
  %1017 = vmatmul.mubr.f32.gmra.mxu0 %v40
  %v1018 = vpop.f32.mrf.mxu0
  %v1019 = vadd.f32 %v934, %v1018
  %v1020 = vpop.f32.mrf.mxu0
  %1021 = vmatprep.mubr.f32.mxu0 %v57
  %1022 = vmatmul.mubr.f32.gmra.mxu0 %v56
  %v1023 = vpop.f32.mrf.mxu0
  %v1024 = vadd.f32 %v939, %v1023
  %v1025 = vpop.f32.mrf.mxu0
  %1026 = vmatprep.mubr.f32.mxu0 %v73
  %1027 = vmatmul.mubr.f32.gmra.mxu0 %v72
  %v1028 = vpop.f32.mrf.mxu0
  %v1029 = vadd.f32 %v944, %v1028
  %v1030 = vpop.f32.mrf.mxu0
  %1031 = vmatprep.mubr.f32.mxu0 %v89
  %1032 = vmatmul.mubr.f32.gmra.mxu0 %v88
  %v1033 = vpop.f32.mrf.mxu0
  %v1034 = vadd.f32 %v949, %v1033
  %v1035 = vpop.f32.mrf.mxu0
  %1036 = vdwg.mxu0
  %vm1037 = vcmask 130048
  %v1039 = vsel %vm1037, %v90, 0
  %v1042 = vsel %vm1037, %v1019, 0
  %v1045 = vsel %vm1037, %v1024, 0
  %v1048 = vsel %vm1037, %v1029, 0
  %v1051 = vsel %vm1037, %v1034, 0
  %1053 = vmatprep.subr.mxu0 0.0
  %1054 = vmatpush1.xpose.msra.mxu0 0.0
  %1055 = vmatprep.subr.mxu0 0.0
  %1056 = vmatpush1.xpose.msra.mxu0 0.0
  %1057 = vmatprep.subr.mxu0 0.0
  %1058 = vmatpush1.xpose.msra.mxu0 0.0
  %1059 = vmatprep.subr.mxu0 0.0
  %1060 = vmatpush1.xpose.msra.mxu0 0.0
  %1061 = vmatprep.subr.mxu0 0.0
  %1062 = vmatpush1.xpose.msra.mxu0 0.0
  %1063 = vmatprep.subr.mxu0 0.0
  %1064 = vmatpush1.xpose.msra.mxu0 0.0
  %1065 = vmatprep.subr.mxu0 0.0
  %1066 = vmatpush1.xpose.msra.mxu0 0.0
  %1067 = vmatprep.subr.mxu0 0.0
  %1068 = vmatpush1.xpose.msra.mxu0 0.0
  %1069 = vmatprep.subr.mxu0 0.0
  %1070 = vmatpush1.xpose.msra.mxu0 0.0
  %1071 = vmatprep.subr.mxu0 0.0
  %1072 = vmatpush1.xpose.msra.mxu0 0.0
  %1073 = vmatprep.subr.mxu0 0.0
  %1074 = vmatpush1.xpose.msra.mxu0 0.0
  %1075 = vmatprep.subr.mxu0 0.0
  %1076 = vmatpush1.xpose.msra.mxu0 0.0
  %1077 = vmatprep.subr.mxu0 0.0
  %1078 = vmatpush1.xpose.msra.mxu0 %v1051
  %1079 = vmatprep.subr.mxu0 0.0
  %1080 = vmatpush1.xpose.msra.mxu0 %v1048
  %1081 = vmatprep.subr.mxu0 0.0
  %1082 = vmatpush1.xpose.msra.mxu0 %v1045
  %1083 = vmatprep.subr.mxu0 0.0
  %1084 = vmatpush1.xpose.msra.mxu0 %v1042
  %1085 = vmatprep.subr.mxu0 0.0
  %1086 = vmatpush2.xpose.msra.mxu0 0.0
  %1087 = vmatprep.subr.mxu0 0.0
  %1088 = vmatpush2.xpose.msra.mxu0 0.0
  %1089 = vmatprep.subr.mxu0 0.0
  %1090 = vmatpush2.xpose.msra.mxu0 0.0
  %1091 = vmatprep.subr.mxu0 0.0
  %1092 = vmatpush2.xpose.msra.mxu0 0.0
  %1093 = vmatprep.subr.mxu0 0.0
  %1094 = vmatpush2.xpose.msra.mxu0 0.0
  %1095 = vmatprep.subr.mxu0 0.0
  %1096 = vmatpush2.xpose.msra.mxu0 0.0
  %1097 = vmatprep.subr.mxu0 0.0
  %1098 = vmatpush2.xpose.msra.mxu0 0.0
  %1099 = vmatprep.subr.mxu0 0.0
  %1100 = vmatpush2.xpose.msra.mxu0 0.0
  %1101 = vmatprep.subr.mxu0 0.0
  %1102 = vmatpush2.xpose.msra.mxu0 0.0
  %1103 = vmatprep.subr.mxu0 0.0
  %1104 = vmatpush2.xpose.msra.mxu0 0.0
  %1105 = vmatprep.subr.mxu0 0.0
  %1106 = vmatpush2.xpose.msra.mxu0 0.0
  %1107 = vmatprep.subr.mxu0 0.0
  %1108 = vmatpush2.xpose.msra.mxu0 0.0
  %1109 = vmatprep.subr.mxu0 0.0
  %1110 = vmatpush2.xpose.msra.mxu0 0.0
  %1111 = vmatprep.subr.mxu0 0.0
  %1112 = vmatpush2.xpose.msra.mxu0 0.0
  %1113 = vmatprep.subr.mxu0 0.0
  %1114 = vmatpush2.xpose.msra.mxu0 0.0
  %1115 = vmatprep.subr.mxu0 0.0
  %1116 = vmatpush2.xpose.msra.mxu0 0.0
  %1117 = vmatprep.mubr.f32.mxu0 0.0
  %1118 = vmatmul.mubr.f32.gmra.mxu0 %v1039
  %v1119 = vpop.f32.mrf.mxu0
  %v1120 = vadd.f32 %v91, %v1119
  %v1121 = vpop.f32.mrf.mxu0
  %1122 = vdwg.mxu0
  %v1123 = vmax.f32 %v1120, 0.0
  %v1125 = vlaneseq
  %v1126 = vshrl.u32 %v1125, 7
  %v1127 = vsub.s32 0, %v1126
  %v1128 = vrot.slane %v100, %v1127
  %vm1130 = vcmask 261120
  %v1132 = vsel %vm1130, %v1123, 0
  %1134 = vmatprep.subr.mxu0 0.0
  %1135 = vmatpush1.msra.mxu0 0.0
  %1136 = vmatprep.subr.mxu0 0.0
  %1137 = vmatpush1.msra.mxu0 0.0
  %1138 = vmatprep.subr.mxu0 0.0
  %1139 = vmatpush1.msra.mxu0 0.0
  %1140 = vmatprep.subr.mxu0 0.0
  %1141 = vmatpush1.msra.mxu0 0.0
  %1142 = vmatprep.subr.mxu0 0.0
  %1143 = vmatpush1.msra.mxu0 0.0
  %1144 = vmatprep.subr.mxu0 0.0
  %1145 = vmatpush1.msra.mxu0 0.0
  %1146 = vmatprep.subr.mxu0 0.0
  %1147 = vmatpush1.msra.mxu0 0.0
  %1148 = vmatprep.subr.mxu0 0.0
  %1149 = vmatpush1.msra.mxu0 0.0
  %1150 = vmatprep.subr.mxu0 0.0
  %1151 = vmatpush1.msra.mxu0 0.0
  %1152 = vmatprep.subr.mxu0 0.0
  %1153 = vmatpush1.msra.mxu0 0.0
  %1154 = vmatprep.subr.mxu0 0.0
  %1155 = vmatpush1.msra.mxu0 0.0
  %1156 = vmatprep.subr.mxu0 0.0
  %1157 = vmatpush1.msra.mxu0 0.0
  %1158 = vmatprep.subr.mxu0 0.0
  %1159 = vmatpush1.msra.mxu0 %v95
  %1160 = vmatprep.subr.mxu0 0.0
  %1161 = vmatpush1.msra.mxu0 %v94
  %1162 = vmatprep.subr.mxu0 0.0
  %1163 = vmatpush1.msra.mxu0 %v93
  %1164 = vmatprep.subr.mxu0 0.0
  %1165 = vmatpush1.msra.mxu0 %v92
  %1166 = vmatprep.subr.mxu0 0.0
  %1167 = vmatpush2.msra.mxu0 0.0
  %1168 = vmatprep.subr.mxu0 0.0
  %1169 = vmatpush2.msra.mxu0 0.0
  %1170 = vmatprep.subr.mxu0 0.0
  %1171 = vmatpush2.msra.mxu0 0.0
  %1172 = vmatprep.subr.mxu0 0.0
  %1173 = vmatpush2.msra.mxu0 0.0
  %1174 = vmatprep.subr.mxu0 0.0
  %1175 = vmatpush2.msra.mxu0 0.0
  %1176 = vmatprep.subr.mxu0 0.0
  %1177 = vmatpush2.msra.mxu0 0.0
  %1178 = vmatprep.subr.mxu0 0.0
  %1179 = vmatpush2.msra.mxu0 0.0
  %1180 = vmatprep.subr.mxu0 0.0
  %1181 = vmatpush2.msra.mxu0 0.0
  %1182 = vmatprep.subr.mxu0 0.0
  %1183 = vmatpush2.msra.mxu0 0.0
  %1184 = vmatprep.subr.mxu0 0.0
  %1185 = vmatpush2.msra.mxu0 0.0
  %1186 = vmatprep.subr.mxu0 0.0
  %1187 = vmatpush2.msra.mxu0 0.0
  %1188 = vmatprep.subr.mxu0 0.0
  %1189 = vmatpush2.msra.mxu0 0.0
  %1190 = vmatprep.subr.mxu0 0.0
  %1191 = vmatpush2.msra.mxu0 0.0
  %1192 = vmatprep.subr.mxu0 0.0
  %1193 = vmatpush2.msra.mxu0 0.0
  %1194 = vmatprep.subr.mxu0 0.0
  %1195 = vmatpush2.msra.mxu0 0.0
  %1196 = vmatprep.subr.mxu0 0.0
  %1197 = vmatpush2.msra.mxu0 0.0
  %1198 = vmatprep.mubr.f32.mxu0 0.0
  %1199 = vmatmul.mubr.f32.gmra.mxu0 %v1132
  %v1200 = vpop.f32.mrf.mxu0
  %v1201 = vadd.f32 %v1128, %v1200
  %v1202 = vpop.f32.mrf.mxu0
  %1203 = vdwg.mxu0
  %s1204 = scalar_lea.vmem %s0, 2048
  %v1205 = vld [vmem:[%s1204] sm:$0xff]
  %v1206 = vld [vmem:[%s1204 + $0x8] sm:$0xff]
  %v1207 = vld [vmem:[%s1204 + $0x10] sm:$0xff]
  %v1208 = vld [vmem:[%s1204 + $0x18] sm:$0xff]
  %v1209 = vld [vmem:[%s1204 + $0x20] sm:$0xff]
  %v1210 = vld [vmem:[%s1204 + $0x28] sm:$0xff]
  %v1211 = vld [vmem:[%s1204 + $0x30] sm:$0xff]
  %v1212 = vld [vmem:[%s1204 + $0x38] sm:$0xff]
  %v1213 = vld [vmem:[%s1204 + $0x40] sm:$0xff]
  %v1214 = vld [vmem:[%s1204 + $0x48] sm:$0xff]
  %v1215 = vld [vmem:[%s1204 + $0x50] sm:$0xff]
  %v1216 = vld [vmem:[%s1204 + $0x58] sm:$0xff]
  %v1217 = vld [vmem:[%s1204 + $0x60] sm:$0xff]
  %v1218 = vld [vmem:[%s1204 + $0x68] sm:$0xff]
  %v1219 = vld [vmem:[%s1204 + $0x70] sm:$0xff]
  %v1220 = vld [vmem:[%s1204 + $0x78] sm:$0xff]
  %v1221 = vld [vmem:[%s1204 + $0x80] sm:$0xff]
  %v1222 = vld [vmem:[%s1204 + $0x88] sm:$0xff]
  %v1223 = vld [vmem:[%s1204 + $0x90] sm:$0xff]
  %v1224 = vld [vmem:[%s1204 + $0x98] sm:$0xff]
  %v1225 = vld [vmem:[%s1204 + $0xa0] sm:$0xff]
  %v1226 = vld [vmem:[%s1204 + $0xa8] sm:$0xff]
  %v1227 = vld [vmem:[%s1204 + $0xb0] sm:$0xff]
  %v1228 = vld [vmem:[%s1204 + $0xb8] sm:$0xff]
  %v1229 = vld [vmem:[%s1204 + $0xc0] sm:$0xff]
  %v1230 = vld [vmem:[%s1204 + $0xc8] sm:$0xff]
  %v1231 = vld [vmem:[%s1204 + $0xd0] sm:$0xff]
  %v1232 = vld [vmem:[%s1204 + $0xd8] sm:$0xff]
  %v1233 = vld [vmem:[%s1204 + $0xe0] sm:$0xff]
  %v1234 = vld [vmem:[%s1204 + $0xe8] sm:$0xff]
  %v1235 = vld [vmem:[%s1204 + $0xf0] sm:$0xff]
  %v1236 = vld [vmem:[%s1204 + $0xf8] sm:$0xff]
  %v1237 = vld [vmem:[%s1204 + $0x100] sm:$0xff]
  %v1238 = vld [vmem:[%s1204 + $0x108] sm:$0xff]
  %v1239 = vld [vmem:[%s1204 + $0x110] sm:$0xff]
  %v1240 = vld [vmem:[%s1204 + $0x118] sm:$0xff]
  %v1241 = vld [vmem:[%s1204 + $0x120] sm:$0xff]
  %v1242 = vld [vmem:[%s1204 + $0x128] sm:$0xff]
  %v1243 = vld [vmem:[%s1204 + $0x130] sm:$0xff]
  %v1244 = vld [vmem:[%s1204 + $0x138] sm:$0xff]
  %v1245 = vld [vmem:[%s1204 + $0x140] sm:$0xff]
  %v1246 = vld [vmem:[%s1204 + $0x148] sm:$0xff]
  %v1247 = vld [vmem:[%s1204 + $0x150] sm:$0xff]
  %v1248 = vld [vmem:[%s1204 + $0x158] sm:$0xff]
  %v1249 = vld [vmem:[%s1204 + $0x160] sm:$0xff]
  %v1250 = vld [vmem:[%s1204 + $0x168] sm:$0xff]
  %v1251 = vld [vmem:[%s1204 + $0x170] sm:$0xff]
  %v1252 = vld [vmem:[%s1204 + $0x178] sm:$0xff]
  %v1253 = vld [vmem:[%s1204 + $0x180] sm:$0xff]
  %v1254 = vld [vmem:[%s1204 + $0x188] sm:$0xff]
  %v1255 = vld [vmem:[%s1204 + $0x190] sm:$0xff]
  %v1256 = vld [vmem:[%s1204 + $0x198] sm:$0xff]
  %v1257 = vld [vmem:[%s1204 + $0x1a0] sm:$0xff]
  %v1258 = vld [vmem:[%s1204 + $0x1a8] sm:$0xff]
  %v1259 = vld [vmem:[%s1204 + $0x1b0] sm:$0xff]
  %v1260 = vld [vmem:[%s1204 + $0x1b8] sm:$0xff]
  %v1261 = vld [vmem:[%s1204 + $0x1c0] sm:$0xff]
  %v1262 = vld [vmem:[%s1204 + $0x1c8] sm:$0xff]
  %v1263 = vld [vmem:[%s1204 + $0x1d0] sm:$0xff]
  %v1264 = vld [vmem:[%s1204 + $0x1d8] sm:$0xff]
  %v1265 = vld [vmem:[%s1204 + $0x1e0] sm:$0xff]
  %v1266 = vld [vmem:[%s1204 + $0x1e8] sm:$0xff]
  %v1267 = vld [vmem:[%s1204 + $0x1f0] sm:$0xff]
  %v1268 = vld [vmem:[%s1204 + $0x1f8] sm:$0xff]
  %v1269 = vld [vmem:[%s1204 + $0x200] sm:$0xff]
  %v1270 = vld [vmem:[%s1204 + $0x208] sm:$0xff]
  %v1271 = vld [vmem:[%s1204 + $0x210] sm:$0xff]
  %v1272 = vld [vmem:[%s1204 + $0x218] sm:$0xff]
  %v1273 = vld [vmem:[%s1204 + $0x220] sm:$0xff]
  %v1274 = vld [vmem:[%s1204 + $0x228] sm:$0xff]
  %v1275 = vld [vmem:[%s1204 + $0x230] sm:$0xff]
  %v1276 = vld [vmem:[%s1204 + $0x238] sm:$0xff]
  %v1277 = vld [vmem:[%s1204 + $0x240] sm:$0xff]
  %v1278 = vld [vmem:[%s1204 + $0x248] sm:$0xff]
  %v1279 = vld [vmem:[%s1204 + $0x250] sm:$0xff]
  %v1280 = vld [vmem:[%s1204 + $0x258] sm:$0xff]
  %v1281 = vld [vmem:[%s1204 + $0x260] sm:$0xff]
  %v1282 = vld [vmem:[%s1204 + $0x268] sm:$0xff]
  %v1283 = vld [vmem:[%s1204 + $0x270] sm:$0xff]
  %v1284 = vld [vmem:[%s1204 + $0x278] sm:$0xff]
  %v1285 = vld [vmem:[%s1204 + $0x280] sm:$0xff]
  %v1286 = vld [vmem:[%s1204 + $0x288] sm:$0xff]
  %v1287 = vld [vmem:[%s1204 + $0x290] sm:$0xff]
  %v1288 = vld [vmem:[%s1204 + $0x298] sm:$0xff]
  %v1289 = vld [vmem:[%s1204 + $0x2a0] sm:$0xff]
  %v1290 = vld [vmem:[%s1204 + $0x2a8] sm:$0xff]
  %v1291 = vld [vmem:[%s1204 + $0x2b0] sm:$0xff]
  %v1292 = vld [vmem:[%s1204 + $0x2b8] sm:$0xff]
  %v1293 = vld [vmem:[%s1204 + $0x2c0] sm:$0xff]
  %v1294 = vld [vmem:[%s1204 + $0x2c8] sm:$0xff]
  %v1295 = vld [vmem:[%s1204 + $0x2d0] sm:$0xff]
  %v1296 = vld [vmem:[%s1204 + $0x2d8] sm:$0xff]
  %v1297 = vld [vmem:[%s1204 + $0x2e0] sm:$0xff]
  %v1298 = vld [vmem:[%s1204 + $0x2e8] sm:$0xff]
  %v1299 = vld [vmem:[%s1204 + $0x2f0] sm:$0xff]
  %v1300 = vld [vmem:[%s1204 + $0x2f8] sm:$0xff]
  %v1301 = vld [vmem:[%s1204 + $0x300] sm:$0xff]
  %v1302 = vld [vmem:[%s1204 + $0x308] sm:$0xff]
  %v1303 = vld [vmem:[%s1204 + $0x310] sm:$0xff]
  %v1304 = vld [vmem:[%s1204 + $0x318] sm:$0xff]
  %v1305 = vld [vmem:[%s1204 + $0x320] sm:$0xff]
  %v1306 = vld [vmem:[%s1204 + $0x328] sm:$0xff]
  %v1307 = vld [vmem:[%s1204 + $0x330] sm:$0xff]
  %v1308 = vld [vmem:[%s1204 + $0x338] sm:$0xff]
  %v1309 = vld [vmem:[%s1204 + $0x340] sm:$0xff]
  %v1310 = vld [vmem:[%s1204 + $0x348] sm:$0xff]
  %v1311 = vld [vmem:[%s1204 + $0x350] sm:$0xff]
  %v1312 = vld [vmem:[%s1204 + $0x358] sm:$0xff]
  %v1313 = vld [vmem:[%s1204 + $0x360] sm:$0xff]
  %v1314 = vld [vmem:[%s1204 + $0x368] sm:$0xff]
  %v1315 = vld [vmem:[%s1204 + $0x370] sm:$0xff]
  %v1316 = vld [vmem:[%s1204 + $0x378] sm:$0xff]
  %v1317 = vld [vmem:[%s1204 + $0x380] sm:$0xff]
  %v1318 = vld [vmem:[%s1204 + $0x388] sm:$0xff]
  %v1319 = vld [vmem:[%s1204 + $0x390] sm:$0xff]
  %v1320 = vld [vmem:[%s1204 + $0x398] sm:$0xff]
  %v1321 = vld [vmem:[%s1204 + $0x3a0] sm:$0xff]
  %v1322 = vld [vmem:[%s1204 + $0x3a8] sm:$0xff]
  %v1323 = vld [vmem:[%s1204 + $0x3b0] sm:$0xff]
  %v1324 = vld [vmem:[%s1204 + $0x3b8] sm:$0xff]
  %v1325 = vld [vmem:[%s1204 + $0x3c0] sm:$0xff]
  %v1326 = vld [vmem:[%s1204 + $0x3c8] sm:$0xff]
  %v1327 = vld [vmem:[%s1204 + $0x3d0] sm:$0xff]
  %v1328 = vld [vmem:[%s1204 + $0x3d8] sm:$0xff]
  %v1329 = vld [vmem:[%s1204 + $0x3e0] sm:$0xff]
  %v1330 = vld [vmem:[%s1204 + $0x3e8] sm:$0xff]
  %v1331 = vld [vmem:[%s1204 + $0x3f0] sm:$0xff]
  %v1332 = vld [vmem:[%s1204 + $0x3f8] sm:$0xff]
  %v1333 = vld [vmem:[%s1204 + $0x400] sm:$0xff]
  %v1334 = vld [vmem:[%s1204 + $0x408] sm:$0xff]
  %v1335 = vld [vmem:[%s1204 + $0x410] sm:$0xff]
  %v1336 = vld [vmem:[%s1204 + $0x418] sm:$0xff]
  %v1337 = vld [vmem:[%s1204 + $0x420] sm:$0xff]
  %v1338 = vld [vmem:[%s1204 + $0x428] sm:$0xff]
  %v1339 = vld [vmem:[%s1204 + $0x430] sm:$0xff]
  %v1340 = vld [vmem:[%s1204 + $0x438] sm:$0xff]
  %v1341 = vld [vmem:[%s1204 + $0x440] sm:$0xff]
  %v1342 = vld [vmem:[%s1204 + $0x448] sm:$0xff]
  %v1343 = vld [vmem:[%s1204 + $0x450] sm:$0xff]
  %v1344 = vld [vmem:[%s1204 + $0x458] sm:$0xff]
  %v1345 = vld [vmem:[%s1204 + $0x460] sm:$0xff]
  %v1346 = vld [vmem:[%s1204 + $0x468] sm:$0xff]
  %v1347 = vld [vmem:[%s1204 + $0x470] sm:$0xff]
  %v1348 = vld [vmem:[%s1204 + $0x478] sm:$0xff]
  %v1349 = vld [vmem:[%s1204 + $0x480] sm:$0xff]
  %v1350 = vld [vmem:[%s1204 + $0x488] sm:$0xff]
  %v1351 = vld [vmem:[%s1204 + $0x490] sm:$0xff]
  %v1352 = vld [vmem:[%s1204 + $0x498] sm:$0xff]
  %v1353 = vld [vmem:[%s1204 + $0x4a0] sm:$0xff]
  %v1354 = vld [vmem:[%s1204 + $0x4a8] sm:$0xff]
  %v1355 = vld [vmem:[%s1204 + $0x4b0] sm:$0xff]
  %v1356 = vld [vmem:[%s1204 + $0x4b8] sm:$0xff]
  %v1357 = vld [vmem:[%s1204 + $0x4c0] sm:$0xff]
  %v1358 = vld [vmem:[%s1204 + $0x4c8] sm:$0xff]
  %v1359 = vld [vmem:[%s1204 + $0x4d0] sm:$0xff]
  %v1360 = vld [vmem:[%s1204 + $0x4d8] sm:$0xff]
  %v1361 = vld [vmem:[%s1204 + $0x4e0] sm:$0xff]
  %v1362 = vld [vmem:[%s1204 + $0x4e8] sm:$0xff]
  %v1363 = vld [vmem:[%s1204 + $0x4f0] sm:$0xff]
  %v1364 = vld [vmem:[%s1204 + $0x4f8] sm:$0xff]
  %v1365 = vld [vmem:[%s1204 + $0x500] sm:$0xff]
  %v1366 = vld [vmem:[%s1204 + $0x508] sm:$0xff]
  %v1367 = vld [vmem:[%s1204 + $0x510] sm:$0xff]
  %v1368 = vld [vmem:[%s1204 + $0x518] sm:$0xff]
  %v1369 = vld [vmem:[%s1204 + $0x520] sm:$0xff]
  %v1370 = vld [vmem:[%s1204 + $0x528] sm:$0xff]
  %v1371 = vld [vmem:[%s1204 + $0x530] sm:$0xff]
  %v1372 = vld [vmem:[%s1204 + $0x538] sm:$0xff]
  %v1373 = vld [vmem:[%s1204 + $0x540] sm:$0xff]
  %v1374 = vld [vmem:[%s1204 + $0x548] sm:$0xff]
  %v1375 = vld [vmem:[%s1204 + $0x550] sm:$0xff]
  %v1376 = vld [vmem:[%s1204 + $0x558] sm:$0xff]
  %v1377 = vld [vmem:[%s1204 + $0x560] sm:$0xff]
  %v1378 = vld [vmem:[%s1204 + $0x568] sm:$0xff]
  %v1379 = vld [vmem:[%s1204 + $0x570] sm:$0xff]
  %v1380 = vld [vmem:[%s1204 + $0x578] sm:$0xff]
  %v1381 = vld [vmem:[%s1204 + $0x580] sm:$0xff]
  %v1382 = vld [vmem:[%s1204 + $0x588] sm:$0xff]
  %v1383 = vld [vmem:[%s1204 + $0x590] sm:$0xff]
  %v1384 = vld [vmem:[%s1204 + $0x598] sm:$0xff]
  %v1385 = vld [vmem:[%s1204 + $0x5a0] sm:$0xff]
  %v1386 = vld [vmem:[%s1204 + $0x5a8] sm:$0xff]
  %v1387 = vld [vmem:[%s1204 + $0x5b0] sm:$0xff]
  %v1388 = vld [vmem:[%s1204 + $0x5b8] sm:$0xff]
  %v1389 = vld [vmem:[%s1204 + $0x5c0] sm:$0xff]
  %v1390 = vld [vmem:[%s1204 + $0x5c8] sm:$0xff]
  %v1391 = vld [vmem:[%s1204 + $0x5d0] sm:$0xff]
  %v1392 = vld [vmem:[%s1204 + $0x5d8] sm:$0xff]
  %v1393 = vld [vmem:[%s1204 + $0x5e0] sm:$0xff]
  %v1394 = vld [vmem:[%s1204 + $0x5e8] sm:$0xff]
  %v1395 = vld [vmem:[%s1204 + $0x5f0] sm:$0xff]
  %v1396 = vld [vmem:[%s1204 + $0x5f8] sm:$0xff]
  %v1397 = vld [vmem:[%s1204 + $0x600] sm:$0xff]
  %v1398 = vld [vmem:[%s1204 + $0x608] sm:$0xff]
  %v1399 = vld [vmem:[%s1204 + $0x610] sm:$0xff]
  %v1400 = vld [vmem:[%s1204 + $0x618] sm:$0xff]
  %v1401 = vld [vmem:[%s1204 + $0x620] sm:$0xff]
  %v1402 = vld [vmem:[%s1204 + $0x628] sm:$0xff]
  %v1403 = vld [vmem:[%s1204 + $0x630] sm:$0xff]
  %v1404 = vld [vmem:[%s1204 + $0x638] sm:$0xff]
  %v1405 = vld [vmem:[%s1204 + $0x640] sm:$0xff]
  %v1406 = vld [vmem:[%s1204 + $0x648] sm:$0xff]
  %v1407 = vld [vmem:[%s1204 + $0x650] sm:$0xff]
  %v1408 = vld [vmem:[%s1204 + $0x658] sm:$0xff]
  %v1409 = vld [vmem:[%s1204 + $0x660] sm:$0xff]
  %v1410 = vld [vmem:[%s1204 + $0x668] sm:$0xff]
  %v1411 = vld [vmem:[%s1204 + $0x670] sm:$0xff]
  %v1412 = vld [vmem:[%s1204 + $0x678] sm:$0xff]
  %v1413 = vld [vmem:[%s1204 + $0x680] sm:$0xff]
  %v1414 = vld [vmem:[%s1204 + $0x688] sm:$0xff]
  %v1415 = vld [vmem:[%s1204 + $0x690] sm:$0xff]
  %v1416 = vld [vmem:[%s1204 + $0x698] sm:$0xff]
  %v1417 = vld [vmem:[%s1204 + $0x6a0] sm:$0xff]
  %v1418 = vld [vmem:[%s1204 + $0x6a8] sm:$0xff]
  %v1419 = vld [vmem:[%s1204 + $0x6b0] sm:$0xff]
  %v1420 = vld [vmem:[%s1204 + $0x6b8] sm:$0xff]
  %v1421 = vld [vmem:[%s1204 + $0x6c0] sm:$0xff]
  %v1422 = vld [vmem:[%s1204 + $0x6c8] sm:$0xff]
  %v1423 = vld [vmem:[%s1204 + $0x6d0] sm:$0xff]
  %v1424 = vld [vmem:[%s1204 + $0x6d8] sm:$0xff]
  %v1425 = vld [vmem:[%s1204 + $0x6e0] sm:$0xff]
  %v1426 = vld [vmem:[%s1204 + $0x6e8] sm:$0xff]
  %v1427 = vld [vmem:[%s1204 + $0x6f0] sm:$0xff]
  %v1428 = vld [vmem:[%s1204 + $0x6f8] sm:$0xff]
  %v1429 = vld [vmem:[%s1204 + $0x700] sm:$0xff]
  %v1430 = vld [vmem:[%s1204 + $0x708] sm:$0xff]
  %v1431 = vld [vmem:[%s1204 + $0x710] sm:$0xff]
  %v1432 = vld [vmem:[%s1204 + $0x718] sm:$0xff]
  %v1433 = vld [vmem:[%s1204 + $0x720] sm:$0xff]
  %v1434 = vld [vmem:[%s1204 + $0x728] sm:$0xff]
  %v1435 = vld [vmem:[%s1204 + $0x730] sm:$0xff]
  %v1436 = vld [vmem:[%s1204 + $0x738] sm:$0xff]
  %v1437 = vld [vmem:[%s1204 + $0x740] sm:$0xff]
  %v1438 = vld [vmem:[%s1204 + $0x748] sm:$0xff]
  %v1439 = vld [vmem:[%s1204 + $0x750] sm:$0xff]
  %v1440 = vld [vmem:[%s1204 + $0x758] sm:$0xff]
  %v1441 = vld [vmem:[%s1204 + $0x760] sm:$0xff]
  %v1442 = vld [vmem:[%s1204 + $0x768] sm:$0xff]
  %v1443 = vld [vmem:[%s1204 + $0x770] sm:$0xff]
  %v1444 = vld [vmem:[%s1204 + $0x778] sm:$0xff]
  %v1445 = vld [vmem:[%s1204 + $0x780] sm:$0xff]
  %v1446 = vld [vmem:[%s1204 + $0x788] sm:$0xff]
  %v1447 = vld [vmem:[%s1204 + $0x790] sm:$0xff]
  %v1448 = vld [vmem:[%s1204 + $0x798] sm:$0xff]
  %v1449 = vld [vmem:[%s1204 + $0x7a0] sm:$0xff]
  %v1450 = vld [vmem:[%s1204 + $0x7a8] sm:$0xff]
  %v1451 = vld [vmem:[%s1204 + $0x7b0] sm:$0xff]
  %v1452 = vld [vmem:[%s1204 + $0x7b8] sm:$0xff]
  %v1453 = vld [vmem:[%s1204 + $0x7c0] sm:$0xff]
  %v1454 = vld [vmem:[%s1204 + $0x7c8] sm:$0xff]
  %v1455 = vld [vmem:[%s1204 + $0x7d0] sm:$0xff]
  %v1456 = vld [vmem:[%s1204 + $0x7d8] sm:$0xff]
  %v1457 = vld [vmem:[%s1204 + $0x7e0] sm:$0xff]
  %v1458 = vld [vmem:[%s1204 + $0x7e8] sm:$0xff]
  %v1459 = vld [vmem:[%s1204 + $0x7f0] sm:$0xff]
  %v1460 = vld [vmem:[%s1204 + $0x7f8] sm:$0xff]
  %1461 = vmatprep.subr.mxu0 0.0
  %1462 = vmatpush1.msra.mxu0 %v1220
  %1463 = vmatprep.subr.mxu0 0.0
  %1464 = vmatpush1.msra.mxu0 %v1219
  %1465 = vmatprep.subr.mxu0 0.0
  %1466 = vmatpush1.msra.mxu0 %v1218
  %1467 = vmatprep.subr.mxu0 0.0
  %1468 = vmatpush1.msra.mxu0 %v1217
  %1469 = vmatprep.subr.mxu0 0.0
  %1470 = vmatpush1.msra.mxu0 %v1216
  %1471 = vmatprep.subr.mxu0 0.0
  %1472 = vmatpush1.msra.mxu0 %v1215
  %1473 = vmatprep.subr.mxu0 0.0
  %1474 = vmatpush1.msra.mxu0 %v1214
  %1475 = vmatprep.subr.mxu0 0.0
  %1476 = vmatpush1.msra.mxu0 %v1213
  %1477 = vmatprep.subr.mxu0 0.0
  %1478 = vmatpush1.msra.mxu0 %v1212
  %1479 = vmatprep.subr.mxu0 0.0
  %1480 = vmatpush1.msra.mxu0 %v1211
  %1481 = vmatprep.subr.mxu0 0.0
  %1482 = vmatpush1.msra.mxu0 %v1210
  %1483 = vmatprep.subr.mxu0 0.0
  %1484 = vmatpush1.msra.mxu0 %v1209
  %1485 = vmatprep.subr.mxu0 0.0
  %1486 = vmatpush1.msra.mxu0 %v1208
  %1487 = vmatprep.subr.mxu0 0.0
  %1488 = vmatpush1.msra.mxu0 %v1207
  %1489 = vmatprep.subr.mxu0 0.0
  %1490 = vmatpush1.msra.mxu0 %v1206
  %1491 = vmatprep.subr.mxu0 0.0
  %1492 = vmatpush1.msra.mxu0 %v1205
  %1493 = vmatprep.subr.mxu0 0.0
  %1494 = vmatpush2.msra.mxu0 %v1236
  %1495 = vmatprep.subr.mxu0 0.0
  %1496 = vmatpush2.msra.mxu0 %v1235
  %1497 = vmatprep.subr.mxu0 0.0
  %1498 = vmatpush2.msra.mxu0 %v1234
  %1499 = vmatprep.subr.mxu0 0.0
  %1500 = vmatpush2.msra.mxu0 %v1233
  %1501 = vmatprep.subr.mxu0 0.0
  %1502 = vmatpush2.msra.mxu0 %v1232
  %1503 = vmatprep.subr.mxu0 0.0
  %1504 = vmatpush2.msra.mxu0 %v1231
  %1505 = vmatprep.subr.mxu0 0.0
  %1506 = vmatpush2.msra.mxu0 %v1230
  %1507 = vmatprep.subr.mxu0 0.0
  %1508 = vmatpush2.msra.mxu0 %v1229
  %1509 = vmatprep.subr.mxu0 0.0
  %1510 = vmatpush2.msra.mxu0 %v1228
  %1511 = vmatprep.subr.mxu0 0.0
  %1512 = vmatpush2.msra.mxu0 %v1227
  %1513 = vmatprep.subr.mxu0 0.0
  %1514 = vmatpush2.msra.mxu0 %v1226
  %1515 = vmatprep.subr.mxu0 0.0
  %1516 = vmatpush2.msra.mxu0 %v1225
  %1517 = vmatprep.subr.mxu0 0.0
  %1518 = vmatpush2.msra.mxu0 %v1224
  %1519 = vmatprep.subr.mxu0 0.0
  %1520 = vmatpush2.msra.mxu0 %v1223
  %1521 = vmatprep.subr.mxu0 0.0
  %1522 = vmatpush2.msra.mxu0 %v1222
  %1523 = vmatprep.subr.mxu0 0.0
  %1524 = vmatpush2.msra.mxu0 %v1221
  %1525 = vmatprep.mubr.f32.mxu0 %v27
  %1526 = vmatmul.mubr.f32.gmra.mxu0 %v26
  %v1527 = vpop.f32.mrf.mxu0
  %v1528 = vadd.f32 0.0, %v1527
  %v1529 = vpop.f32.mrf.mxu0
  %1530 = vmatprep.mubr.f32.mxu0 %v43
  %1531 = vmatmul.mubr.f32.gmra.mxu0 %v42
  %v1532 = vpop.f32.mrf.mxu0
  %v1533 = vadd.f32 0.0, %v1532
  %v1534 = vpop.f32.mrf.mxu0
  %1535 = vmatprep.mubr.f32.mxu0 %v59
  %1536 = vmatmul.mubr.f32.gmra.mxu0 %v58
  %v1537 = vpop.f32.mrf.mxu0
  %v1538 = vadd.f32 0.0, %v1537
  %v1539 = vpop.f32.mrf.mxu0
  %1540 = vmatprep.mubr.f32.mxu0 %v75
  %1541 = vmatmul.mubr.f32.gmra.mxu0 %v74
  %v1542 = vpop.f32.mrf.mxu0
  %v1543 = vadd.f32 0.0, %v1542
  %v1544 = vpop.f32.mrf.mxu0
  %1545 = vdwg.mxu0
  %1546 = vmatprep.subr.mxu0 0.0
  %1547 = vmatpush1.msra.mxu0 %v1252
  %1548 = vmatprep.subr.mxu0 0.0
  %1549 = vmatpush1.msra.mxu0 %v1251
  %1550 = vmatprep.subr.mxu0 0.0
  %1551 = vmatpush1.msra.mxu0 %v1250
  %1552 = vmatprep.subr.mxu0 0.0
  %1553 = vmatpush1.msra.mxu0 %v1249
  %1554 = vmatprep.subr.mxu0 0.0
  %1555 = vmatpush1.msra.mxu0 %v1248
  %1556 = vmatprep.subr.mxu0 0.0
  %1557 = vmatpush1.msra.mxu0 %v1247
  %1558 = vmatprep.subr.mxu0 0.0
  %1559 = vmatpush1.msra.mxu0 %v1246
  %1560 = vmatprep.subr.mxu0 0.0
  %1561 = vmatpush1.msra.mxu0 %v1245
  %1562 = vmatprep.subr.mxu0 0.0
  %1563 = vmatpush1.msra.mxu0 %v1244
  %1564 = vmatprep.subr.mxu0 0.0
  %1565 = vmatpush1.msra.mxu0 %v1243
  %1566 = vmatprep.subr.mxu0 0.0
  %1567 = vmatpush1.msra.mxu0 %v1242
  %1568 = vmatprep.subr.mxu0 0.0
  %1569 = vmatpush1.msra.mxu0 %v1241
  %1570 = vmatprep.subr.mxu0 0.0
  %1571 = vmatpush1.msra.mxu0 %v1240
  %1572 = vmatprep.subr.mxu0 0.0
  %1573 = vmatpush1.msra.mxu0 %v1239
  %1574 = vmatprep.subr.mxu0 0.0
  %1575 = vmatpush1.msra.mxu0 %v1238
  %1576 = vmatprep.subr.mxu0 0.0
  %1577 = vmatpush1.msra.mxu0 %v1237
  %1578 = vmatprep.subr.mxu0 0.0
  %1579 = vmatpush2.msra.mxu0 %v1268
  %1580 = vmatprep.subr.mxu0 0.0
  %1581 = vmatpush2.msra.mxu0 %v1267
  %1582 = vmatprep.subr.mxu0 0.0
  %1583 = vmatpush2.msra.mxu0 %v1266
  %1584 = vmatprep.subr.mxu0 0.0
  %1585 = vmatpush2.msra.mxu0 %v1265
  %1586 = vmatprep.subr.mxu0 0.0
  %1587 = vmatpush2.msra.mxu0 %v1264
  %1588 = vmatprep.subr.mxu0 0.0
  %1589 = vmatpush2.msra.mxu0 %v1263
  %1590 = vmatprep.subr.mxu0 0.0
  %1591 = vmatpush2.msra.mxu0 %v1262
  %1592 = vmatprep.subr.mxu0 0.0
  %1593 = vmatpush2.msra.mxu0 %v1261
  %1594 = vmatprep.subr.mxu0 0.0
  %1595 = vmatpush2.msra.mxu0 %v1260
  %1596 = vmatprep.subr.mxu0 0.0
  %1597 = vmatpush2.msra.mxu0 %v1259
  %1598 = vmatprep.subr.mxu0 0.0
  %1599 = vmatpush2.msra.mxu0 %v1258
  %1600 = vmatprep.subr.mxu0 0.0
  %1601 = vmatpush2.msra.mxu0 %v1257
  %1602 = vmatprep.subr.mxu0 0.0
  %1603 = vmatpush2.msra.mxu0 %v1256
  %1604 = vmatprep.subr.mxu0 0.0
  %1605 = vmatpush2.msra.mxu0 %v1255
  %1606 = vmatprep.subr.mxu0 0.0
  %1607 = vmatpush2.msra.mxu0 %v1254
  %1608 = vmatprep.subr.mxu0 0.0
  %1609 = vmatpush2.msra.mxu0 %v1253
  %1610 = vmatprep.mubr.f32.mxu0 %v29
  %1611 = vmatmul.mubr.f32.gmra.mxu0 %v28
  %v1612 = vpop.f32.mrf.mxu0
  %v1613 = vadd.f32 %v1528, %v1612
  %v1614 = vpop.f32.mrf.mxu0
  %1615 = vmatprep.mubr.f32.mxu0 %v45
  %1616 = vmatmul.mubr.f32.gmra.mxu0 %v44
  %v1617 = vpop.f32.mrf.mxu0
  %v1618 = vadd.f32 %v1533, %v1617
  %v1619 = vpop.f32.mrf.mxu0
  %1620 = vmatprep.mubr.f32.mxu0 %v61
  %1621 = vmatmul.mubr.f32.gmra.mxu0 %v60
  %v1622 = vpop.f32.mrf.mxu0
  %v1623 = vadd.f32 %v1538, %v1622
  %v1624 = vpop.f32.mrf.mxu0
  %1625 = vmatprep.mubr.f32.mxu0 %v77
  %1626 = vmatmul.mubr.f32.gmra.mxu0 %v76
  %v1627 = vpop.f32.mrf.mxu0
  %v1628 = vadd.f32 %v1543, %v1627
  %v1629 = vpop.f32.mrf.mxu0
  %1630 = vdwg.mxu0
  %1631 = vmatprep.subr.mxu0 0.0
  %1632 = vmatpush1.msra.mxu0 %v1284
  %1633 = vmatprep.subr.mxu0 0.0
  %1634 = vmatpush1.msra.mxu0 %v1283
  %1635 = vmatprep.subr.mxu0 0.0
  %1636 = vmatpush1.msra.mxu0 %v1282
  %1637 = vmatprep.subr.mxu0 0.0
  %1638 = vmatpush1.msra.mxu0 %v1281
  %1639 = vmatprep.subr.mxu0 0.0
  %1640 = vmatpush1.msra.mxu0 %v1280
  %1641 = vmatprep.subr.mxu0 0.0
  %1642 = vmatpush1.msra.mxu0 %v1279
  %1643 = vmatprep.subr.mxu0 0.0
  %1644 = vmatpush1.msra.mxu0 %v1278
  %1645 = vmatprep.subr.mxu0 0.0
  %1646 = vmatpush1.msra.mxu0 %v1277
  %1647 = vmatprep.subr.mxu0 0.0
  %1648 = vmatpush1.msra.mxu0 %v1276
  %1649 = vmatprep.subr.mxu0 0.0
  %1650 = vmatpush1.msra.mxu0 %v1275
  %1651 = vmatprep.subr.mxu0 0.0
  %1652 = vmatpush1.msra.mxu0 %v1274
  %1653 = vmatprep.subr.mxu0 0.0
  %1654 = vmatpush1.msra.mxu0 %v1273
  %1655 = vmatprep.subr.mxu0 0.0
  %1656 = vmatpush1.msra.mxu0 %v1272
  %1657 = vmatprep.subr.mxu0 0.0
  %1658 = vmatpush1.msra.mxu0 %v1271
  %1659 = vmatprep.subr.mxu0 0.0
  %1660 = vmatpush1.msra.mxu0 %v1270
  %1661 = vmatprep.subr.mxu0 0.0
  %1662 = vmatpush1.msra.mxu0 %v1269
  %1663 = vmatprep.subr.mxu0 0.0
  %1664 = vmatpush2.msra.mxu0 %v1300
  %1665 = vmatprep.subr.mxu0 0.0
  %1666 = vmatpush2.msra.mxu0 %v1299
  %1667 = vmatprep.subr.mxu0 0.0
  %1668 = vmatpush2.msra.mxu0 %v1298
  %1669 = vmatprep.subr.mxu0 0.0
  %1670 = vmatpush2.msra.mxu0 %v1297
  %1671 = vmatprep.subr.mxu0 0.0
  %1672 = vmatpush2.msra.mxu0 %v1296
  %1673 = vmatprep.subr.mxu0 0.0
  %1674 = vmatpush2.msra.mxu0 %v1295
  %1675 = vmatprep.subr.mxu0 0.0
  %1676 = vmatpush2.msra.mxu0 %v1294
  %1677 = vmatprep.subr.mxu0 0.0
  %1678 = vmatpush2.msra.mxu0 %v1293
  %1679 = vmatprep.subr.mxu0 0.0
  %1680 = vmatpush2.msra.mxu0 %v1292
  %1681 = vmatprep.subr.mxu0 0.0
  %1682 = vmatpush2.msra.mxu0 %v1291
  %1683 = vmatprep.subr.mxu0 0.0
  %1684 = vmatpush2.msra.mxu0 %v1290
  %1685 = vmatprep.subr.mxu0 0.0
  %1686 = vmatpush2.msra.mxu0 %v1289
  %1687 = vmatprep.subr.mxu0 0.0
  %1688 = vmatpush2.msra.mxu0 %v1288
  %1689 = vmatprep.subr.mxu0 0.0
  %1690 = vmatpush2.msra.mxu0 %v1287
  %1691 = vmatprep.subr.mxu0 0.0
  %1692 = vmatpush2.msra.mxu0 %v1286
  %1693 = vmatprep.subr.mxu0 0.0
  %1694 = vmatpush2.msra.mxu0 %v1285
  %1695 = vmatprep.mubr.f32.mxu0 %v31
  %1696 = vmatmul.mubr.f32.gmra.mxu0 %v30
  %v1697 = vpop.f32.mrf.mxu0
  %v1698 = vadd.f32 %v1613, %v1697
  %v1699 = vpop.f32.mrf.mxu0
  %1700 = vmatprep.mubr.f32.mxu0 %v47
  %1701 = vmatmul.mubr.f32.gmra.mxu0 %v46
  %v1702 = vpop.f32.mrf.mxu0
  %v1703 = vadd.f32 %v1618, %v1702
  %v1704 = vpop.f32.mrf.mxu0
  %1705 = vmatprep.mubr.f32.mxu0 %v63
  %1706 = vmatmul.mubr.f32.gmra.mxu0 %v62
  %v1707 = vpop.f32.mrf.mxu0
  %v1708 = vadd.f32 %v1623, %v1707
  %v1709 = vpop.f32.mrf.mxu0
  %1710 = vmatprep.mubr.f32.mxu0 %v79
  %1711 = vmatmul.mubr.f32.gmra.mxu0 %v78
  %v1712 = vpop.f32.mrf.mxu0
  %v1713 = vadd.f32 %v1628, %v1712
  %v1714 = vpop.f32.mrf.mxu0
  %1715 = vdwg.mxu0
  %1716 = vmatprep.subr.mxu0 0.0
  %1717 = vmatpush1.msra.mxu0 %v1316
  %1718 = vmatprep.subr.mxu0 0.0
  %1719 = vmatpush1.msra.mxu0 %v1315
  %1720 = vmatprep.subr.mxu0 0.0
  %1721 = vmatpush1.msra.mxu0 %v1314
  %1722 = vmatprep.subr.mxu0 0.0
  %1723 = vmatpush1.msra.mxu0 %v1313
  %1724 = vmatprep.subr.mxu0 0.0
  %1725 = vmatpush1.msra.mxu0 %v1312
  %1726 = vmatprep.subr.mxu0 0.0
  %1727 = vmatpush1.msra.mxu0 %v1311
  %1728 = vmatprep.subr.mxu0 0.0
  %1729 = vmatpush1.msra.mxu0 %v1310
  %1730 = vmatprep.subr.mxu0 0.0
  %1731 = vmatpush1.msra.mxu0 %v1309
  %1732 = vmatprep.subr.mxu0 0.0
  %1733 = vmatpush1.msra.mxu0 %v1308
  %1734 = vmatprep.subr.mxu0 0.0
  %1735 = vmatpush1.msra.mxu0 %v1307
  %1736 = vmatprep.subr.mxu0 0.0
  %1737 = vmatpush1.msra.mxu0 %v1306
  %1738 = vmatprep.subr.mxu0 0.0
  %1739 = vmatpush1.msra.mxu0 %v1305
  %1740 = vmatprep.subr.mxu0 0.0
  %1741 = vmatpush1.msra.mxu0 %v1304
  %1742 = vmatprep.subr.mxu0 0.0
  %1743 = vmatpush1.msra.mxu0 %v1303
  %1744 = vmatprep.subr.mxu0 0.0
  %1745 = vmatpush1.msra.mxu0 %v1302
  %1746 = vmatprep.subr.mxu0 0.0
  %1747 = vmatpush1.msra.mxu0 %v1301
  %1748 = vmatprep.subr.mxu0 0.0
  %1749 = vmatpush2.msra.mxu0 %v1332
  %1750 = vmatprep.subr.mxu0 0.0
  %1751 = vmatpush2.msra.mxu0 %v1331
  %1752 = vmatprep.subr.mxu0 0.0
  %1753 = vmatpush2.msra.mxu0 %v1330
  %1754 = vmatprep.subr.mxu0 0.0
  %1755 = vmatpush2.msra.mxu0 %v1329
  %1756 = vmatprep.subr.mxu0 0.0
  %1757 = vmatpush2.msra.mxu0 %v1328
  %1758 = vmatprep.subr.mxu0 0.0
  %1759 = vmatpush2.msra.mxu0 %v1327
  %1760 = vmatprep.subr.mxu0 0.0
  %1761 = vmatpush2.msra.mxu0 %v1326
  %1762 = vmatprep.subr.mxu0 0.0
  %1763 = vmatpush2.msra.mxu0 %v1325
  %1764 = vmatprep.subr.mxu0 0.0
  %1765 = vmatpush2.msra.mxu0 %v1324
  %1766 = vmatprep.subr.mxu0 0.0
  %1767 = vmatpush2.msra.mxu0 %v1323
  %1768 = vmatprep.subr.mxu0 0.0
  %1769 = vmatpush2.msra.mxu0 %v1322
  %1770 = vmatprep.subr.mxu0 0.0
  %1771 = vmatpush2.msra.mxu0 %v1321
  %1772 = vmatprep.subr.mxu0 0.0
  %1773 = vmatpush2.msra.mxu0 %v1320
  %1774 = vmatprep.subr.mxu0 0.0
  %1775 = vmatpush2.msra.mxu0 %v1319
  %1776 = vmatprep.subr.mxu0 0.0
  %1777 = vmatpush2.msra.mxu0 %v1318
  %1778 = vmatprep.subr.mxu0 0.0
  %1779 = vmatpush2.msra.mxu0 %v1317
  %1780 = vmatprep.mubr.f32.mxu0 %v33
  %1781 = vmatmul.mubr.f32.gmra.mxu0 %v32
  %v1782 = vpop.f32.mrf.mxu0
  %v1783 = vadd.f32 %v1698, %v1782
  %v1784 = vpop.f32.mrf.mxu0
  %1785 = vmatprep.mubr.f32.mxu0 %v49
  %1786 = vmatmul.mubr.f32.gmra.mxu0 %v48
  %v1787 = vpop.f32.mrf.mxu0
  %v1788 = vadd.f32 %v1703, %v1787
  %v1789 = vpop.f32.mrf.mxu0
  %1790 = vmatprep.mubr.f32.mxu0 %v65
  %1791 = vmatmul.mubr.f32.gmra.mxu0 %v64
  %v1792 = vpop.f32.mrf.mxu0
  %v1793 = vadd.f32 %v1708, %v1792
  %v1794 = vpop.f32.mrf.mxu0
  %1795 = vmatprep.mubr.f32.mxu0 %v81
  %1796 = vmatmul.mubr.f32.gmra.mxu0 %v80
  %v1797 = vpop.f32.mrf.mxu0
  %v1798 = vadd.f32 %v1713, %v1797
  %v1799 = vpop.f32.mrf.mxu0
  %1800 = vdwg.mxu0
  %1801 = vmatprep.subr.mxu0 0.0
  %1802 = vmatpush1.msra.mxu0 %v1348
  %1803 = vmatprep.subr.mxu0 0.0
  %1804 = vmatpush1.msra.mxu0 %v1347
  %1805 = vmatprep.subr.mxu0 0.0
  %1806 = vmatpush1.msra.mxu0 %v1346
  %1807 = vmatprep.subr.mxu0 0.0
  %1808 = vmatpush1.msra.mxu0 %v1345
  %1809 = vmatprep.subr.mxu0 0.0
  %1810 = vmatpush1.msra.mxu0 %v1344
  %1811 = vmatprep.subr.mxu0 0.0
  %1812 = vmatpush1.msra.mxu0 %v1343
  %1813 = vmatprep.subr.mxu0 0.0
  %1814 = vmatpush1.msra.mxu0 %v1342
  %1815 = vmatprep.subr.mxu0 0.0
  %1816 = vmatpush1.msra.mxu0 %v1341
  %1817 = vmatprep.subr.mxu0 0.0
  %1818 = vmatpush1.msra.mxu0 %v1340
  %1819 = vmatprep.subr.mxu0 0.0
  %1820 = vmatpush1.msra.mxu0 %v1339
  %1821 = vmatprep.subr.mxu0 0.0
  %1822 = vmatpush1.msra.mxu0 %v1338
  %1823 = vmatprep.subr.mxu0 0.0
  %1824 = vmatpush1.msra.mxu0 %v1337
  %1825 = vmatprep.subr.mxu0 0.0
  %1826 = vmatpush1.msra.mxu0 %v1336
  %1827 = vmatprep.subr.mxu0 0.0
  %1828 = vmatpush1.msra.mxu0 %v1335
  %1829 = vmatprep.subr.mxu0 0.0
  %1830 = vmatpush1.msra.mxu0 %v1334
  %1831 = vmatprep.subr.mxu0 0.0
  %1832 = vmatpush1.msra.mxu0 %v1333
  %1833 = vmatprep.subr.mxu0 0.0
  %1834 = vmatpush2.msra.mxu0 %v1364
  %1835 = vmatprep.subr.mxu0 0.0
  %1836 = vmatpush2.msra.mxu0 %v1363
  %1837 = vmatprep.subr.mxu0 0.0
  %1838 = vmatpush2.msra.mxu0 %v1362
  %1839 = vmatprep.subr.mxu0 0.0
  %1840 = vmatpush2.msra.mxu0 %v1361
  %1841 = vmatprep.subr.mxu0 0.0
  %1842 = vmatpush2.msra.mxu0 %v1360
  %1843 = vmatprep.subr.mxu0 0.0
  %1844 = vmatpush2.msra.mxu0 %v1359
  %1845 = vmatprep.subr.mxu0 0.0
  %1846 = vmatpush2.msra.mxu0 %v1358
  %1847 = vmatprep.subr.mxu0 0.0
  %1848 = vmatpush2.msra.mxu0 %v1357
  %1849 = vmatprep.subr.mxu0 0.0
  %1850 = vmatpush2.msra.mxu0 %v1356
  %1851 = vmatprep.subr.mxu0 0.0
  %1852 = vmatpush2.msra.mxu0 %v1355
  %1853 = vmatprep.subr.mxu0 0.0
  %1854 = vmatpush2.msra.mxu0 %v1354
  %1855 = vmatprep.subr.mxu0 0.0
  %1856 = vmatpush2.msra.mxu0 %v1353
  %1857 = vmatprep.subr.mxu0 0.0
  %1858 = vmatpush2.msra.mxu0 %v1352
  %1859 = vmatprep.subr.mxu0 0.0
  %1860 = vmatpush2.msra.mxu0 %v1351
  %1861 = vmatprep.subr.mxu0 0.0
  %1862 = vmatpush2.msra.mxu0 %v1350
  %1863 = vmatprep.subr.mxu0 0.0
  %1864 = vmatpush2.msra.mxu0 %v1349
  %1865 = vmatprep.mubr.f32.mxu0 %v35
  %1866 = vmatmul.mubr.f32.gmra.mxu0 %v34
  %v1867 = vpop.f32.mrf.mxu0
  %v1868 = vadd.f32 %v1783, %v1867
  %v1869 = vpop.f32.mrf.mxu0
  %1870 = vmatprep.mubr.f32.mxu0 %v51
  %1871 = vmatmul.mubr.f32.gmra.mxu0 %v50
  %v1872 = vpop.f32.mrf.mxu0
  %v1873 = vadd.f32 %v1788, %v1872
  %v1874 = vpop.f32.mrf.mxu0
  %1875 = vmatprep.mubr.f32.mxu0 %v67
  %1876 = vmatmul.mubr.f32.gmra.mxu0 %v66
  %v1877 = vpop.f32.mrf.mxu0
  %v1878 = vadd.f32 %v1793, %v1877
  %v1879 = vpop.f32.mrf.mxu0
  %1880 = vmatprep.mubr.f32.mxu0 %v83
  %1881 = vmatmul.mubr.f32.gmra.mxu0 %v82
  %v1882 = vpop.f32.mrf.mxu0
  %v1883 = vadd.f32 %v1798, %v1882
  %v1884 = vpop.f32.mrf.mxu0
  %1885 = vdwg.mxu0
  %1886 = vmatprep.subr.mxu0 0.0
  %1887 = vmatpush1.msra.mxu0 %v1380
  %1888 = vmatprep.subr.mxu0 0.0
  %1889 = vmatpush1.msra.mxu0 %v1379
  %1890 = vmatprep.subr.mxu0 0.0
  %1891 = vmatpush1.msra.mxu0 %v1378
  %1892 = vmatprep.subr.mxu0 0.0
  %1893 = vmatpush1.msra.mxu0 %v1377
  %1894 = vmatprep.subr.mxu0 0.0
  %1895 = vmatpush1.msra.mxu0 %v1376
  %1896 = vmatprep.subr.mxu0 0.0
  %1897 = vmatpush1.msra.mxu0 %v1375
  %1898 = vmatprep.subr.mxu0 0.0
  %1899 = vmatpush1.msra.mxu0 %v1374
  %1900 = vmatprep.subr.mxu0 0.0
  %1901 = vmatpush1.msra.mxu0 %v1373
  %1902 = vmatprep.subr.mxu0 0.0
  %1903 = vmatpush1.msra.mxu0 %v1372
  %1904 = vmatprep.subr.mxu0 0.0
  %1905 = vmatpush1.msra.mxu0 %v1371
  %1906 = vmatprep.subr.mxu0 0.0
  %1907 = vmatpush1.msra.mxu0 %v1370
  %1908 = vmatprep.subr.mxu0 0.0
  %1909 = vmatpush1.msra.mxu0 %v1369
  %1910 = vmatprep.subr.mxu0 0.0
  %1911 = vmatpush1.msra.mxu0 %v1368
  %1912 = vmatprep.subr.mxu0 0.0
  %1913 = vmatpush1.msra.mxu0 %v1367
  %1914 = vmatprep.subr.mxu0 0.0
  %1915 = vmatpush1.msra.mxu0 %v1366
  %1916 = vmatprep.subr.mxu0 0.0
  %1917 = vmatpush1.msra.mxu0 %v1365
  %1918 = vmatprep.subr.mxu0 0.0
  %1919 = vmatpush2.msra.mxu0 %v1396
  %1920 = vmatprep.subr.mxu0 0.0
  %1921 = vmatpush2.msra.mxu0 %v1395
  %1922 = vmatprep.subr.mxu0 0.0
  %1923 = vmatpush2.msra.mxu0 %v1394
  %1924 = vmatprep.subr.mxu0 0.0
  %1925 = vmatpush2.msra.mxu0 %v1393
  %1926 = vmatprep.subr.mxu0 0.0
  %1927 = vmatpush2.msra.mxu0 %v1392
  %1928 = vmatprep.subr.mxu0 0.0
  %1929 = vmatpush2.msra.mxu0 %v1391
  %1930 = vmatprep.subr.mxu0 0.0
  %1931 = vmatpush2.msra.mxu0 %v1390
  %1932 = vmatprep.subr.mxu0 0.0
  %1933 = vmatpush2.msra.mxu0 %v1389
  %1934 = vmatprep.subr.mxu0 0.0
  %1935 = vmatpush2.msra.mxu0 %v1388
  %1936 = vmatprep.subr.mxu0 0.0
  %1937 = vmatpush2.msra.mxu0 %v1387
  %1938 = vmatprep.subr.mxu0 0.0
  %1939 = vmatpush2.msra.mxu0 %v1386
  %1940 = vmatprep.subr.mxu0 0.0
  %1941 = vmatpush2.msra.mxu0 %v1385
  %1942 = vmatprep.subr.mxu0 0.0
  %1943 = vmatpush2.msra.mxu0 %v1384
  %1944 = vmatprep.subr.mxu0 0.0
  %1945 = vmatpush2.msra.mxu0 %v1383
  %1946 = vmatprep.subr.mxu0 0.0
  %1947 = vmatpush2.msra.mxu0 %v1382
  %1948 = vmatprep.subr.mxu0 0.0
  %1949 = vmatpush2.msra.mxu0 %v1381
  %1950 = vmatprep.mubr.f32.mxu0 %v37
  %1951 = vmatmul.mubr.f32.gmra.mxu0 %v36
  %v1952 = vpop.f32.mrf.mxu0
  %v1953 = vadd.f32 %v1868, %v1952
  %v1954 = vpop.f32.mrf.mxu0
  %1955 = vmatprep.mubr.f32.mxu0 %v53
  %1956 = vmatmul.mubr.f32.gmra.mxu0 %v52
  %v1957 = vpop.f32.mrf.mxu0
  %v1958 = vadd.f32 %v1873, %v1957
  %v1959 = vpop.f32.mrf.mxu0
  %1960 = vmatprep.mubr.f32.mxu0 %v69
  %1961 = vmatmul.mubr.f32.gmra.mxu0 %v68
  %v1962 = vpop.f32.mrf.mxu0
  %v1963 = vadd.f32 %v1878, %v1962
  %v1964 = vpop.f32.mrf.mxu0
  %1965 = vmatprep.mubr.f32.mxu0 %v85
  %1966 = vmatmul.mubr.f32.gmra.mxu0 %v84
  %v1967 = vpop.f32.mrf.mxu0
  %v1968 = vadd.f32 %v1883, %v1967
  %v1969 = vpop.f32.mrf.mxu0
  %1970 = vdwg.mxu0
  %1971 = vmatprep.subr.mxu0 0.0
  %1972 = vmatpush1.msra.mxu0 %v1412
  %1973 = vmatprep.subr.mxu0 0.0
  %1974 = vmatpush1.msra.mxu0 %v1411
  %1975 = vmatprep.subr.mxu0 0.0
  %1976 = vmatpush1.msra.mxu0 %v1410
  %1977 = vmatprep.subr.mxu0 0.0
  %1978 = vmatpush1.msra.mxu0 %v1409
  %1979 = vmatprep.subr.mxu0 0.0
  %1980 = vmatpush1.msra.mxu0 %v1408
  %1981 = vmatprep.subr.mxu0 0.0
  %1982 = vmatpush1.msra.mxu0 %v1407
  %1983 = vmatprep.subr.mxu0 0.0
  %1984 = vmatpush1.msra.mxu0 %v1406
  %1985 = vmatprep.subr.mxu0 0.0
  %1986 = vmatpush1.msra.mxu0 %v1405
  %1987 = vmatprep.subr.mxu0 0.0
  %1988 = vmatpush1.msra.mxu0 %v1404
  %1989 = vmatprep.subr.mxu0 0.0
  %1990 = vmatpush1.msra.mxu0 %v1403
  %1991 = vmatprep.subr.mxu0 0.0
  %1992 = vmatpush1.msra.mxu0 %v1402
  %1993 = vmatprep.subr.mxu0 0.0
  %1994 = vmatpush1.msra.mxu0 %v1401
  %1995 = vmatprep.subr.mxu0 0.0
  %1996 = vmatpush1.msra.mxu0 %v1400
  %1997 = vmatprep.subr.mxu0 0.0
  %1998 = vmatpush1.msra.mxu0 %v1399
  %1999 = vmatprep.subr.mxu0 0.0
  %2000 = vmatpush1.msra.mxu0 %v1398
  %2001 = vmatprep.subr.mxu0 0.0
  %2002 = vmatpush1.msra.mxu0 %v1397
  %2003 = vmatprep.subr.mxu0 0.0
  %2004 = vmatpush2.msra.mxu0 %v1428
  %2005 = vmatprep.subr.mxu0 0.0
  %2006 = vmatpush2.msra.mxu0 %v1427
  %2007 = vmatprep.subr.mxu0 0.0
  %2008 = vmatpush2.msra.mxu0 %v1426
  %2009 = vmatprep.subr.mxu0 0.0
  %2010 = vmatpush2.msra.mxu0 %v1425
  %2011 = vmatprep.subr.mxu0 0.0
  %2012 = vmatpush2.msra.mxu0 %v1424
  %2013 = vmatprep.subr.mxu0 0.0
  %2014 = vmatpush2.msra.mxu0 %v1423
  %2015 = vmatprep.subr.mxu0 0.0
  %2016 = vmatpush2.msra.mxu0 %v1422
  %2017 = vmatprep.subr.mxu0 0.0
  %2018 = vmatpush2.msra.mxu0 %v1421
  %2019 = vmatprep.subr.mxu0 0.0
  %2020 = vmatpush2.msra.mxu0 %v1420
  %2021 = vmatprep.subr.mxu0 0.0
  %2022 = vmatpush2.msra.mxu0 %v1419
  %2023 = vmatprep.subr.mxu0 0.0
  %2024 = vmatpush2.msra.mxu0 %v1418
  %2025 = vmatprep.subr.mxu0 0.0
  %2026 = vmatpush2.msra.mxu0 %v1417
  %2027 = vmatprep.subr.mxu0 0.0
  %2028 = vmatpush2.msra.mxu0 %v1416
  %2029 = vmatprep.subr.mxu0 0.0
  %2030 = vmatpush2.msra.mxu0 %v1415
  %2031 = vmatprep.subr.mxu0 0.0
  %2032 = vmatpush2.msra.mxu0 %v1414
  %2033 = vmatprep.subr.mxu0 0.0
  %2034 = vmatpush2.msra.mxu0 %v1413
  %2035 = vmatprep.mubr.f32.mxu0 %v39
  %2036 = vmatmul.mubr.f32.gmra.mxu0 %v38
  %v2037 = vpop.f32.mrf.mxu0
  %v2038 = vadd.f32 %v1953, %v2037
  %v2039 = vpop.f32.mrf.mxu0
  %2040 = vmatprep.mubr.f32.mxu0 %v55
  %2041 = vmatmul.mubr.f32.gmra.mxu0 %v54
  %v2042 = vpop.f32.mrf.mxu0
  %v2043 = vadd.f32 %v1958, %v2042
  %v2044 = vpop.f32.mrf.mxu0
  %2045 = vmatprep.mubr.f32.mxu0 %v71
  %2046 = vmatmul.mubr.f32.gmra.mxu0 %v70
  %v2047 = vpop.f32.mrf.mxu0
  %v2048 = vadd.f32 %v1963, %v2047
  %v2049 = vpop.f32.mrf.mxu0
  %2050 = vmatprep.mubr.f32.mxu0 %v87
  %2051 = vmatmul.mubr.f32.gmra.mxu0 %v86
  %v2052 = vpop.f32.mrf.mxu0
  %v2053 = vadd.f32 %v1968, %v2052
  %v2054 = vpop.f32.mrf.mxu0
  %2055 = vdwg.mxu0
  %2056 = vmatprep.subr.mxu0 0.0
  %2057 = vmatpush1.msra.mxu0 %v1444
  %2058 = vmatprep.subr.mxu0 0.0
  %2059 = vmatpush1.msra.mxu0 %v1443
  %2060 = vmatprep.subr.mxu0 0.0
  %2061 = vmatpush1.msra.mxu0 %v1442
  %2062 = vmatprep.subr.mxu0 0.0
  %2063 = vmatpush1.msra.mxu0 %v1441
  %2064 = vmatprep.subr.mxu0 0.0
  %2065 = vmatpush1.msra.mxu0 %v1440
  %2066 = vmatprep.subr.mxu0 0.0
  %2067 = vmatpush1.msra.mxu0 %v1439
  %2068 = vmatprep.subr.mxu0 0.0
  %2069 = vmatpush1.msra.mxu0 %v1438
  %2070 = vmatprep.subr.mxu0 0.0
  %2071 = vmatpush1.msra.mxu0 %v1437
  %2072 = vmatprep.subr.mxu0 0.0
  %2073 = vmatpush1.msra.mxu0 %v1436
  %2074 = vmatprep.subr.mxu0 0.0
  %2075 = vmatpush1.msra.mxu0 %v1435
  %2076 = vmatprep.subr.mxu0 0.0
  %2077 = vmatpush1.msra.mxu0 %v1434
  %2078 = vmatprep.subr.mxu0 0.0
  %2079 = vmatpush1.msra.mxu0 %v1433
  %2080 = vmatprep.subr.mxu0 0.0
  %2081 = vmatpush1.msra.mxu0 %v1432
  %2082 = vmatprep.subr.mxu0 0.0
  %2083 = vmatpush1.msra.mxu0 %v1431
  %2084 = vmatprep.subr.mxu0 0.0
  %2085 = vmatpush1.msra.mxu0 %v1430
  %2086 = vmatprep.subr.mxu0 0.0
  %2087 = vmatpush1.msra.mxu0 %v1429
  %2088 = vmatprep.subr.mxu0 0.0
  %2089 = vmatpush2.msra.mxu0 %v1460
  %2090 = vmatprep.subr.mxu0 0.0
  %2091 = vmatpush2.msra.mxu0 %v1459
  %2092 = vmatprep.subr.mxu0 0.0
  %2093 = vmatpush2.msra.mxu0 %v1458
  %2094 = vmatprep.subr.mxu0 0.0
  %2095 = vmatpush2.msra.mxu0 %v1457
  %2096 = vmatprep.subr.mxu0 0.0
  %2097 = vmatpush2.msra.mxu0 %v1456
  %2098 = vmatprep.subr.mxu0 0.0
  %2099 = vmatpush2.msra.mxu0 %v1455
  %2100 = vmatprep.subr.mxu0 0.0
  %2101 = vmatpush2.msra.mxu0 %v1454
  %2102 = vmatprep.subr.mxu0 0.0
  %2103 = vmatpush2.msra.mxu0 %v1453
  %2104 = vmatprep.subr.mxu0 0.0
  %2105 = vmatpush2.msra.mxu0 %v1452
  %2106 = vmatprep.subr.mxu0 0.0
  %2107 = vmatpush2.msra.mxu0 %v1451
  %2108 = vmatprep.subr.mxu0 0.0
  %2109 = vmatpush2.msra.mxu0 %v1450
  %2110 = vmatprep.subr.mxu0 0.0
  %2111 = vmatpush2.msra.mxu0 %v1449
  %2112 = vmatprep.subr.mxu0 0.0
  %2113 = vmatpush2.msra.mxu0 %v1448
  %2114 = vmatprep.subr.mxu0 0.0
  %2115 = vmatpush2.msra.mxu0 %v1447
  %2116 = vmatprep.subr.mxu0 0.0
  %2117 = vmatpush2.msra.mxu0 %v1446
  %2118 = vmatprep.subr.mxu0 0.0
  %2119 = vmatpush2.msra.mxu0 %v1445
  %2120 = vmatprep.mubr.f32.mxu0 %v41
  %2121 = vmatmul.mubr.f32.gmra.mxu0 %v40
  %v2122 = vpop.f32.mrf.mxu0
  %v2123 = vadd.f32 %v2038, %v2122
  %v2124 = vpop.f32.mrf.mxu0
  %2125 = vmatprep.mubr.f32.mxu0 %v57
  %2126 = vmatmul.mubr.f32.gmra.mxu0 %v56
  %v2127 = vpop.f32.mrf.mxu0
  %v2128 = vadd.f32 %v2043, %v2127
  %v2129 = vpop.f32.mrf.mxu0
  %2130 = vmatprep.mubr.f32.mxu0 %v73
  %2131 = vmatmul.mubr.f32.gmra.mxu0 %v72
  %v2132 = vpop.f32.mrf.mxu0
  %v2133 = vadd.f32 %v2048, %v2132
  %v2134 = vpop.f32.mrf.mxu0
  %2135 = vmatprep.mubr.f32.mxu0 %v89
  %2136 = vmatmul.mubr.f32.gmra.mxu0 %v88
  %v2137 = vpop.f32.mrf.mxu0
  %v2138 = vadd.f32 %v2053, %v2137
  %v2139 = vpop.f32.mrf.mxu0
  %2140 = vdwg.mxu0
  %v2142 = vsel %vm1037, %v2123, 0
  %v2145 = vsel %vm1037, %v2128, 0
  %v2148 = vsel %vm1037, %v2133, 0
  %v2151 = vsel %vm1037, %v2138, 0
  %2153 = vmatprep.subr.mxu0 0.0
  %2154 = vmatpush1.xpose.msra.mxu0 0.0
  %2155 = vmatprep.subr.mxu0 0.0
  %2156 = vmatpush1.xpose.msra.mxu0 0.0
  %2157 = vmatprep.subr.mxu0 0.0
  %2158 = vmatpush1.xpose.msra.mxu0 0.0
  %2159 = vmatprep.subr.mxu0 0.0
  %2160 = vmatpush1.xpose.msra.mxu0 0.0
  %2161 = vmatprep.subr.mxu0 0.0
  %2162 = vmatpush1.xpose.msra.mxu0 0.0
  %2163 = vmatprep.subr.mxu0 0.0
  %2164 = vmatpush1.xpose.msra.mxu0 0.0
  %2165 = vmatprep.subr.mxu0 0.0
  %2166 = vmatpush1.xpose.msra.mxu0 0.0
  %2167 = vmatprep.subr.mxu0 0.0
  %2168 = vmatpush1.xpose.msra.mxu0 0.0
  %2169 = vmatprep.subr.mxu0 0.0
  %2170 = vmatpush1.xpose.msra.mxu0 0.0
  %2171 = vmatprep.subr.mxu0 0.0
  %2172 = vmatpush1.xpose.msra.mxu0 0.0
  %2173 = vmatprep.subr.mxu0 0.0
  %2174 = vmatpush1.xpose.msra.mxu0 0.0
  %2175 = vmatprep.subr.mxu0 0.0
  %2176 = vmatpush1.xpose.msra.mxu0 0.0
  %2177 = vmatprep.subr.mxu0 0.0
  %2178 = vmatpush1.xpose.msra.mxu0 %v2151
  %2179 = vmatprep.subr.mxu0 0.0
  %2180 = vmatpush1.xpose.msra.mxu0 %v2148
  %2181 = vmatprep.subr.mxu0 0.0
  %2182 = vmatpush1.xpose.msra.mxu0 %v2145
  %2183 = vmatprep.subr.mxu0 0.0
  %2184 = vmatpush1.xpose.msra.mxu0 %v2142
  %2185 = vmatprep.subr.mxu0 0.0
  %2186 = vmatpush2.xpose.msra.mxu0 0.0
  %2187 = vmatprep.subr.mxu0 0.0
  %2188 = vmatpush2.xpose.msra.mxu0 0.0
  %2189 = vmatprep.subr.mxu0 0.0
  %2190 = vmatpush2.xpose.msra.mxu0 0.0
  %2191 = vmatprep.subr.mxu0 0.0
  %2192 = vmatpush2.xpose.msra.mxu0 0.0
  %2193 = vmatprep.subr.mxu0 0.0
  %2194 = vmatpush2.xpose.msra.mxu0 0.0
  %2195 = vmatprep.subr.mxu0 0.0
  %2196 = vmatpush2.xpose.msra.mxu0 0.0
  %2197 = vmatprep.subr.mxu0 0.0
  %2198 = vmatpush2.xpose.msra.mxu0 0.0
  %2199 = vmatprep.subr.mxu0 0.0
  %2200 = vmatpush2.xpose.msra.mxu0 0.0
  %2201 = vmatprep.subr.mxu0 0.0
  %2202 = vmatpush2.xpose.msra.mxu0 0.0
  %2203 = vmatprep.subr.mxu0 0.0
  %2204 = vmatpush2.xpose.msra.mxu0 0.0
  %2205 = vmatprep.subr.mxu0 0.0
  %2206 = vmatpush2.xpose.msra.mxu0 0.0
  %2207 = vmatprep.subr.mxu0 0.0
  %2208 = vmatpush2.xpose.msra.mxu0 0.0
  %2209 = vmatprep.subr.mxu0 0.0
  %2210 = vmatpush2.xpose.msra.mxu0 0.0
  %2211 = vmatprep.subr.mxu0 0.0
  %2212 = vmatpush2.xpose.msra.mxu0 0.0
  %2213 = vmatprep.subr.mxu0 0.0
  %2214 = vmatpush2.xpose.msra.mxu0 0.0
  %2215 = vmatprep.subr.mxu0 0.0
  %2216 = vmatpush2.xpose.msra.mxu0 0.0
  %2217 = vmatprep.mubr.f32.mxu0 0.0
  %2218 = vmatmul.mubr.f32.gmra.mxu0 %v1039
  %v2219 = vpop.f32.mrf.mxu0
  %v2220 = vadd.f32 %v91, %v2219
  %v2221 = vpop.f32.mrf.mxu0
  %2222 = vdwg.mxu0
  %v2223 = vmax.f32 %v2220, 0.0
  %v2225 = vsel %vm1130, %v2223, 0
  %2227 = vmatprep.subr.mxu0 0.0
  %2228 = vmatpush1.msra.mxu0 0.0
  %2229 = vmatprep.subr.mxu0 0.0
  %2230 = vmatpush1.msra.mxu0 0.0
  %2231 = vmatprep.subr.mxu0 0.0
  %2232 = vmatpush1.msra.mxu0 0.0
  %2233 = vmatprep.subr.mxu0 0.0
  %2234 = vmatpush1.msra.mxu0 0.0
  %2235 = vmatprep.subr.mxu0 0.0
  %2236 = vmatpush1.msra.mxu0 0.0
  %2237 = vmatprep.subr.mxu0 0.0
  %2238 = vmatpush1.msra.mxu0 0.0
  %2239 = vmatprep.subr.mxu0 0.0
  %2240 = vmatpush1.msra.mxu0 0.0
  %2241 = vmatprep.subr.mxu0 0.0
  %2242 = vmatpush1.msra.mxu0 0.0
  %2243 = vmatprep.subr.mxu0 0.0
  %2244 = vmatpush1.msra.mxu0 0.0
  %2245 = vmatprep.subr.mxu0 0.0
  %2246 = vmatpush1.msra.mxu0 0.0
  %2247 = vmatprep.subr.mxu0 0.0
  %2248 = vmatpush1.msra.mxu0 0.0
  %2249 = vmatprep.subr.mxu0 0.0
  %2250 = vmatpush1.msra.mxu0 0.0
  %2251 = vmatprep.subr.mxu0 0.0
  %2252 = vmatpush1.msra.mxu0 %v95
  %2253 = vmatprep.subr.mxu0 0.0
  %2254 = vmatpush1.msra.mxu0 %v94
  %2255 = vmatprep.subr.mxu0 0.0
  %2256 = vmatpush1.msra.mxu0 %v93
  %2257 = vmatprep.subr.mxu0 0.0
  %2258 = vmatpush1.msra.mxu0 %v92
  %2259 = vmatprep.subr.mxu0 0.0
  %2260 = vmatpush2.msra.mxu0 0.0
  %2261 = vmatprep.subr.mxu0 0.0
  %2262 = vmatpush2.msra.mxu0 0.0
  %2263 = vmatprep.subr.mxu0 0.0
  %2264 = vmatpush2.msra.mxu0 0.0
  %2265 = vmatprep.subr.mxu0 0.0
  %2266 = vmatpush2.msra.mxu0 0.0
  %2267 = vmatprep.subr.mxu0 0.0
  %2268 = vmatpush2.msra.mxu0 0.0
  %2269 = vmatprep.subr.mxu0 0.0
  %2270 = vmatpush2.msra.mxu0 0.0
  %2271 = vmatprep.subr.mxu0 0.0
  %2272 = vmatpush2.msra.mxu0 0.0
  %2273 = vmatprep.subr.mxu0 0.0
  %2274 = vmatpush2.msra.mxu0 0.0
  %2275 = vmatprep.subr.mxu0 0.0
  %2276 = vmatpush2.msra.mxu0 0.0
  %2277 = vmatprep.subr.mxu0 0.0
  %2278 = vmatpush2.msra.mxu0 0.0
  %2279 = vmatprep.subr.mxu0 0.0
  %2280 = vmatpush2.msra.mxu0 0.0
  %2281 = vmatprep.subr.mxu0 0.0
  %2282 = vmatpush2.msra.mxu0 0.0
  %2283 = vmatprep.subr.mxu0 0.0
  %2284 = vmatpush2.msra.mxu0 0.0
  %2285 = vmatprep.subr.mxu0 0.0
  %2286 = vmatpush2.msra.mxu0 0.0
  %2287 = vmatprep.subr.mxu0 0.0
  %2288 = vmatpush2.msra.mxu0 0.0
  %2289 = vmatprep.subr.mxu0 0.0
  %2290 = vmatpush2.msra.mxu0 0.0
  %2291 = vmatprep.mubr.f32.mxu0 0.0
  %2292 = vmatmul.mubr.f32.gmra.mxu0 %v2225
  %v2293 = vpop.f32.mrf.mxu0
  %v2294 = vadd.f32 %v1128, %v2293
  %v2295 = vpop.f32.mrf.mxu0
  %2296 = vdwg.mxu0
  %v2298 = vrot.slane %v2294, 7
  %vm2300 = vcmask 1040384
  %v2301 = vsel %vm2300, %v1201, %v2298
  %v2303 = vrot.slane %v1201, 1
  %v2305 = vsel %vm2300, %v2303, %v2294
  %v2306 = vrot.slane %v1201, 2
  %v2308 = vrot.slane %v2294, 1
  %v2310 = vsel %vm2300, %v2306, %v2308
  %v2311 = vrot.slane %v1201, 3
  %v2313 = vrot.slane %v2294, 2
  %v2315 = vsel %vm2300, %v2311, %v2313
  %v2316 = vrot.slane %v1201, 4
  %v2318 = vrot.slane %v2294, 3
  %v2320 = vsel %vm2300, %v2316, %v2318
  %v2321 = vrot.slane %v1201, 5
  %v2323 = vrot.slane %v2294, 4
  %v2325 = vsel %vm2300, %v2321, %v2323
  %v2326 = vrot.slane %v1201, 6
  %v2328 = vrot.slane %v2294, 5
  %v2330 = vsel %vm2300, %v2326, %v2328
  %v2331 = vrot.slane %v1201, 7
  %v2333 = vrot.slane %v2294, 6
  %v2335 = vsel %vm2300, %v2331, %v2333
  %v2337 = vsel %vm1130, 0.0, 0
  %2339 = vmatprep.subr.mxu0 0.0
  %2340 = vmatpush1.msra.mxu0 0.0
  %2341 = vmatprep.subr.mxu0 0.0
  %2342 = vmatpush1.msra.mxu0 0.0
  %2343 = vmatprep.subr.mxu0 0.0
  %2344 = vmatpush1.msra.mxu0 0.0
  %2345 = vmatprep.subr.mxu0 0.0
  %2346 = vmatpush1.msra.mxu0 0.0
  %2347 = vmatprep.subr.mxu0 0.0
  %2348 = vmatpush1.msra.mxu0 0.0
  %2349 = vmatprep.subr.mxu0 0.0
  %2350 = vmatpush1.msra.mxu0 0.0
  %2351 = vmatprep.subr.mxu0 0.0
  %2352 = vmatpush1.msra.mxu0 0.0
  %2353 = vmatprep.subr.mxu0 0.0
  %2354 = vmatpush1.msra.mxu0 0.0
  %2355 = vmatprep.subr.mxu0 0.0
  %2356 = vmatpush1.msra.mxu0 0.0
  %2357 = vmatprep.subr.mxu0 0.0
  %2358 = vmatpush1.msra.mxu0 0.0
  %2359 = vmatprep.subr.mxu0 0.0
  %2360 = vmatpush1.msra.mxu0 0.0
  %2361 = vmatprep.subr.mxu0 0.0
  %2362 = vmatpush1.msra.mxu0 0.0
  %2363 = vmatprep.subr.mxu0 0.0
  %2364 = vmatpush1.msra.mxu0 %v99
  %2365 = vmatprep.subr.mxu0 0.0
  %2366 = vmatpush1.msra.mxu0 %v98
  %2367 = vmatprep.subr.mxu0 0.0
  %2368 = vmatpush1.msra.mxu0 %v97
  %2369 = vmatprep.subr.mxu0 0.0
  %2370 = vmatpush1.msra.mxu0 %v96
  %2371 = vmatprep.subr.mxu0 0.0
  %2372 = vmatpush2.msra.mxu0 0.0
  %2373 = vmatprep.subr.mxu0 0.0
  %2374 = vmatpush2.msra.mxu0 0.0
  %2375 = vmatprep.subr.mxu0 0.0
  %2376 = vmatpush2.msra.mxu0 0.0
  %2377 = vmatprep.subr.mxu0 0.0
  %2378 = vmatpush2.msra.mxu0 0.0
  %2379 = vmatprep.subr.mxu0 0.0
  %2380 = vmatpush2.msra.mxu0 0.0
  %2381 = vmatprep.subr.mxu0 0.0
  %2382 = vmatpush2.msra.mxu0 0.0
  %2383 = vmatprep.subr.mxu0 0.0
  %2384 = vmatpush2.msra.mxu0 0.0
  %2385 = vmatprep.subr.mxu0 0.0
  %2386 = vmatpush2.msra.mxu0 0.0
  %2387 = vmatprep.subr.mxu0 0.0
  %2388 = vmatpush2.msra.mxu0 0.0
  %2389 = vmatprep.subr.mxu0 0.0
  %2390 = vmatpush2.msra.mxu0 0.0
  %2391 = vmatprep.subr.mxu0 0.0
  %2392 = vmatpush2.msra.mxu0 0.0
  %2393 = vmatprep.subr.mxu0 0.0
  %2394 = vmatpush2.msra.mxu0 0.0
  %2395 = vmatprep.subr.mxu0 0.0
  %2396 = vmatpush2.msra.mxu0 0.0
  %2397 = vmatprep.subr.mxu0 0.0
  %2398 = vmatpush2.msra.mxu0 0.0
  %2399 = vmatprep.subr.mxu0 0.0
  %2400 = vmatpush2.msra.mxu0 0.0
  %2401 = vmatprep.subr.mxu0 0.0
  %2402 = vmatpush2.msra.mxu0 0.0
  %2403 = vmatprep.mubr.f32.mxu0 0.0
  %2404 = vmatmul.mubr.f32.gmra.mxu0 %v2337
  %v2405 = vpop.f32.mrf.mxu0
  %v2406 = vadd.f32 0.0, %v2405
  %v2407 = vpop.f32.mrf.mxu0
  %2408 = vdwg.mxu0
  %v2409 = vadd.f32 %v2301, %v2406
  %v2410 = vxor.u32 %v2409, 2147483648
  %v2411 = vmul.f32 %v2410, 1.442695
  %v2412 = vpow.pop %v2411
  %v2413 = vadd.f32 %v2412, 1.0
  %v2414 = vrcp.pop %v2413
  %v2415 = vmul.f32 1.0, %v2414
  %v2416 = vtanh.pop %v2409
  %v2417 = vmul.f32 %v2415, 0.0
  %2419 = vrot.lane.b32.xlu0 %v2416, 32
  %v2420 = vpop.permute.xlu0 %2419
  %v2422 = vmul.f32 %v2415, %v2420
  %2424 = vrot.lane.b32.xlu0 %v2422, 32
  %v2425 = vpop.permute.xlu0 %2424
  %v2427 = vadd.f32 %v2417, %v2425
  %v2428 = vtanh.pop %v2427
  %2430 = vrot.lane.b32.xlu0 %v2428, 32
  %v2431 = vpop.permute.xlu0 %2430
  %v2433 = vmul.f32 %v2415, %v2431
  %2435 = vrot.lane.b32.xlu0 %v2433, 64
  %v2436 = vpop.permute.xlu0 %2435
  %v2437 = vsel %vm1130, %v2436, 0
  %2439 = vmatprep.subr.mxu0 0.0
  %2440 = vmatpush1.msra.mxu0 0.0
  %2441 = vmatprep.subr.mxu0 0.0
  %2442 = vmatpush1.msra.mxu0 0.0
  %2443 = vmatprep.subr.mxu0 0.0
  %2444 = vmatpush1.msra.mxu0 0.0
  %2445 = vmatprep.subr.mxu0 0.0
  %2446 = vmatpush1.msra.mxu0 0.0
  %2447 = vmatprep.subr.mxu0 0.0
  %2448 = vmatpush1.msra.mxu0 0.0
  %2449 = vmatprep.subr.mxu0 0.0
  %2450 = vmatpush1.msra.mxu0 0.0
  %2451 = vmatprep.subr.mxu0 0.0
  %2452 = vmatpush1.msra.mxu0 0.0
  %2453 = vmatprep.subr.mxu0 0.0
  %2454 = vmatpush1.msra.mxu0 0.0
  %2455 = vmatprep.subr.mxu0 0.0
  %2456 = vmatpush1.msra.mxu0 0.0
  %2457 = vmatprep.subr.mxu0 0.0
  %2458 = vmatpush1.msra.mxu0 0.0
  %2459 = vmatprep.subr.mxu0 0.0
  %2460 = vmatpush1.msra.mxu0 0.0
  %2461 = vmatprep.subr.mxu0 0.0
  %2462 = vmatpush1.msra.mxu0 0.0
  %2463 = vmatprep.subr.mxu0 0.0
  %2464 = vmatpush1.msra.mxu0 %v99
  %2465 = vmatprep.subr.mxu0 0.0
  %2466 = vmatpush1.msra.mxu0 %v98
  %2467 = vmatprep.subr.mxu0 0.0
  %2468 = vmatpush1.msra.mxu0 %v97
  %2469 = vmatprep.subr.mxu0 0.0
  %2470 = vmatpush1.msra.mxu0 %v96
  %2471 = vmatprep.subr.mxu0 0.0
  %2472 = vmatpush2.msra.mxu0 0.0
  %2473 = vmatprep.subr.mxu0 0.0
  %2474 = vmatpush2.msra.mxu0 0.0
  %2475 = vmatprep.subr.mxu0 0.0
  %2476 = vmatpush2.msra.mxu0 0.0
  %2477 = vmatprep.subr.mxu0 0.0
  %2478 = vmatpush2.msra.mxu0 0.0
  %2479 = vmatprep.subr.mxu0 0.0
  %2480 = vmatpush2.msra.mxu0 0.0
  %2481 = vmatprep.subr.mxu0 0.0
  %2482 = vmatpush2.msra.mxu0 0.0
  %2483 = vmatprep.subr.mxu0 0.0
  %2484 = vmatpush2.msra.mxu0 0.0
  %2485 = vmatprep.subr.mxu0 0.0
  %2486 = vmatpush2.msra.mxu0 0.0
  %2487 = vmatprep.subr.mxu0 0.0
  %2488 = vmatpush2.msra.mxu0 0.0
  %2489 = vmatprep.subr.mxu0 0.0
  %2490 = vmatpush2.msra.mxu0 0.0
  %2491 = vmatprep.subr.mxu0 0.0
  %2492 = vmatpush2.msra.mxu0 0.0
  %2493 = vmatprep.subr.mxu0 0.0
  %2494 = vmatpush2.msra.mxu0 0.0
  %2495 = vmatprep.subr.mxu0 0.0
  %2496 = vmatpush2.msra.mxu0 0.0
  %2497 = vmatprep.subr.mxu0 0.0
  %2498 = vmatpush2.msra.mxu0 0.0
  %2499 = vmatprep.subr.mxu0 0.0
  %2500 = vmatpush2.msra.mxu0 0.0
  %2501 = vmatprep.subr.mxu0 0.0
  %2502 = vmatpush2.msra.mxu0 0.0
  %2503 = vmatprep.mubr.f32.mxu0 0.0
  %2504 = vmatmul.mubr.f32.gmra.mxu0 %v2437
  %v2505 = vpop.f32.mrf.mxu0
  %v2506 = vadd.f32 0.0, %v2505
  %v2507 = vpop.f32.mrf.mxu0
  %2508 = vdwg.mxu0
  %v2509 = vadd.f32 %v2305, %v2506
  %v2510 = vxor.u32 %v2509, 2147483648
  %v2511 = vmul.f32 %v2510, 1.442695
  %v2512 = vpow.pop %v2511
  %v2513 = vadd.f32 %v2512, 1.0
  %v2514 = vrcp.pop %v2513
  %v2515 = vmul.f32 1.0, %v2514
  %v2516 = vtanh.pop %v2509
  %v2517 = vmul.f32 %v2515, %v2427
  %2519 = vrot.lane.b32.xlu0 %v2516, 32
  %v2520 = vpop.permute.xlu0 %2519
  %v2522 = vmul.f32 %v2515, %v2520
  %2524 = vrot.lane.b32.xlu0 %v2522, 32
  %v2525 = vpop.permute.xlu0 %2524
  %v2527 = vadd.f32 %v2517, %v2525
  %v2528 = vtanh.pop %v2527
  %2530 = vrot.lane.b32.xlu0 %v2528, 32
  %v2531 = vpop.permute.xlu0 %2530
  %v2533 = vmul.f32 %v2515, %v2531
  %2535 = vrot.lane.b32.xlu0 %v2533, 64
  %v2536 = vpop.permute.xlu0 %2535
  %v2537 = vsel %vm1130, %v2536, 0
  %2539 = vmatprep.subr.mxu0 0.0
  %2540 = vmatpush1.msra.mxu0 0.0
  %2541 = vmatprep.subr.mxu0 0.0
  %2542 = vmatpush1.msra.mxu0 0.0
  %2543 = vmatprep.subr.mxu0 0.0
  %2544 = vmatpush1.msra.mxu0 0.0
  %2545 = vmatprep.subr.mxu0 0.0
  %2546 = vmatpush1.msra.mxu0 0.0
  %2547 = vmatprep.subr.mxu0 0.0
  %2548 = vmatpush1.msra.mxu0 0.0
  %2549 = vmatprep.subr.mxu0 0.0
  %2550 = vmatpush1.msra.mxu0 0.0
  %2551 = vmatprep.subr.mxu0 0.0
  %2552 = vmatpush1.msra.mxu0 0.0
  %2553 = vmatprep.subr.mxu0 0.0
  %2554 = vmatpush1.msra.mxu0 0.0
  %2555 = vmatprep.subr.mxu0 0.0
  %2556 = vmatpush1.msra.mxu0 0.0
  %2557 = vmatprep.subr.mxu0 0.0
  %2558 = vmatpush1.msra.mxu0 0.0
  %2559 = vmatprep.subr.mxu0 0.0
  %2560 = vmatpush1.msra.mxu0 0.0
  %2561 = vmatprep.subr.mxu0 0.0
  %2562 = vmatpush1.msra.mxu0 0.0
  %2563 = vmatprep.subr.mxu0 0.0
  %2564 = vmatpush1.msra.mxu0 %v99
  %2565 = vmatprep.subr.mxu0 0.0
  %2566 = vmatpush1.msra.mxu0 %v98
  %2567 = vmatprep.subr.mxu0 0.0
  %2568 = vmatpush1.msra.mxu0 %v97
  %2569 = vmatprep.subr.mxu0 0.0
  %2570 = vmatpush1.msra.mxu0 %v96
  %2571 = vmatprep.subr.mxu0 0.0
  %2572 = vmatpush2.msra.mxu0 0.0
  %2573 = vmatprep.subr.mxu0 0.0
  %2574 = vmatpush2.msra.mxu0 0.0
  %2575 = vmatprep.subr.mxu0 0.0
  %2576 = vmatpush2.msra.mxu0 0.0
  %2577 = vmatprep.subr.mxu0 0.0
  %2578 = vmatpush2.msra.mxu0 0.0
  %2579 = vmatprep.subr.mxu0 0.0
  %2580 = vmatpush2.msra.mxu0 0.0
  %2581 = vmatprep.subr.mxu0 0.0
  %2582 = vmatpush2.msra.mxu0 0.0
  %2583 = vmatprep.subr.mxu0 0.0
  %2584 = vmatpush2.msra.mxu0 0.0
  %2585 = vmatprep.subr.mxu0 0.0
  %2586 = vmatpush2.msra.mxu0 0.0
  %2587 = vmatprep.subr.mxu0 0.0
  %2588 = vmatpush2.msra.mxu0 0.0
  %2589 = vmatprep.subr.mxu0 0.0
  %2590 = vmatpush2.msra.mxu0 0.0
  %2591 = vmatprep.subr.mxu0 0.0
  %2592 = vmatpush2.msra.mxu0 0.0
  %2593 = vmatprep.subr.mxu0 0.0
  %2594 = vmatpush2.msra.mxu0 0.0
  %2595 = vmatprep.subr.mxu0 0.0
  %2596 = vmatpush2.msra.mxu0 0.0
  %2597 = vmatprep.subr.mxu0 0.0
  %2598 = vmatpush2.msra.mxu0 0.0
  %2599 = vmatprep.subr.mxu0 0.0
  %2600 = vmatpush2.msra.mxu0 0.0
  %2601 = vmatprep.subr.mxu0 0.0
  %2602 = vmatpush2.msra.mxu0 0.0
  %2603 = vmatprep.mubr.f32.mxu0 0.0
  %2604 = vmatmul.mubr.f32.gmra.mxu0 %v2537
  %v2605 = vpop.f32.mrf.mxu0
  %v2606 = vadd.f32 0.0, %v2605
  %v2607 = vpop.f32.mrf.mxu0
  %2608 = vdwg.mxu0
  %v2609 = vadd.f32 %v2310, %v2606
  %v2610 = vxor.u32 %v2609, 2147483648
  %v2611 = vmul.f32 %v2610, 1.442695
  %v2612 = vpow.pop %v2611
  %v2613 = vadd.f32 %v2612, 1.0
  %v2614 = vrcp.pop %v2613
  %v2615 = vmul.f32 1.0, %v2614
  %v2616 = vtanh.pop %v2609
  %v2617 = vmul.f32 %v2615, %v2527
  %2619 = vrot.lane.b32.xlu0 %v2616, 32
  %v2620 = vpop.permute.xlu0 %2619
  %v2622 = vmul.f32 %v2615, %v2620
  %2624 = vrot.lane.b32.xlu0 %v2622, 32
  %v2625 = vpop.permute.xlu0 %2624
  %v2627 = vadd.f32 %v2617, %v2625
  %v2628 = vtanh.pop %v2627
  %2630 = vrot.lane.b32.xlu0 %v2628, 32
  %v2631 = vpop.permute.xlu0 %2630
  %v2633 = vmul.f32 %v2615, %v2631
  %2635 = vrot.lane.b32.xlu0 %v2633, 64
  %v2636 = vpop.permute.xlu0 %2635
  %v2637 = vsel %vm1130, %v2636, 0
  %2639 = vmatprep.subr.mxu0 0.0
  %2640 = vmatpush1.msra.mxu0 0.0
  %2641 = vmatprep.subr.mxu0 0.0
  %2642 = vmatpush1.msra.mxu0 0.0
  %2643 = vmatprep.subr.mxu0 0.0
  %2644 = vmatpush1.msra.mxu0 0.0
  %2645 = vmatprep.subr.mxu0 0.0
  %2646 = vmatpush1.msra.mxu0 0.0
  %2647 = vmatprep.subr.mxu0 0.0
  %2648 = vmatpush1.msra.mxu0 0.0
  %2649 = vmatprep.subr.mxu0 0.0
  %2650 = vmatpush1.msra.mxu0 0.0
  %2651 = vmatprep.subr.mxu0 0.0
  %2652 = vmatpush1.msra.mxu0 0.0
  %2653 = vmatprep.subr.mxu0 0.0
  %2654 = vmatpush1.msra.mxu0 0.0
  %2655 = vmatprep.subr.mxu0 0.0
  %2656 = vmatpush1.msra.mxu0 0.0
  %2657 = vmatprep.subr.mxu0 0.0
  %2658 = vmatpush1.msra.mxu0 0.0
  %2659 = vmatprep.subr.mxu0 0.0
  %2660 = vmatpush1.msra.mxu0 0.0
  %2661 = vmatprep.subr.mxu0 0.0
  %2662 = vmatpush1.msra.mxu0 0.0
  %2663 = vmatprep.subr.mxu0 0.0
  %2664 = vmatpush1.msra.mxu0 %v99
  %2665 = vmatprep.subr.mxu0 0.0
  %2666 = vmatpush1.msra.mxu0 %v98
  %2667 = vmatprep.subr.mxu0 0.0
  %2668 = vmatpush1.msra.mxu0 %v97
  %2669 = vmatprep.subr.mxu0 0.0
  %2670 = vmatpush1.msra.mxu0 %v96
  %2671 = vmatprep.subr.mxu0 0.0
  %2672 = vmatpush2.msra.mxu0 0.0
  %2673 = vmatprep.subr.mxu0 0.0
  %2674 = vmatpush2.msra.mxu0 0.0
  %2675 = vmatprep.subr.mxu0 0.0
  %2676 = vmatpush2.msra.mxu0 0.0
  %2677 = vmatprep.subr.mxu0 0.0
  %2678 = vmatpush2.msra.mxu0 0.0
  %2679 = vmatprep.subr.mxu0 0.0
  %2680 = vmatpush2.msra.mxu0 0.0
  %2681 = vmatprep.subr.mxu0 0.0
  %2682 = vmatpush2.msra.mxu0 0.0
  %2683 = vmatprep.subr.mxu0 0.0
  %2684 = vmatpush2.msra.mxu0 0.0
  %2685 = vmatprep.subr.mxu0 0.0
  %2686 = vmatpush2.msra.mxu0 0.0
  %2687 = vmatprep.subr.mxu0 0.0
  %2688 = vmatpush2.msra.mxu0 0.0
  %2689 = vmatprep.subr.mxu0 0.0
  %2690 = vmatpush2.msra.mxu0 0.0
  %2691 = vmatprep.subr.mxu0 0.0
  %2692 = vmatpush2.msra.mxu0 0.0
  %2693 = vmatprep.subr.mxu0 0.0
  %2694 = vmatpush2.msra.mxu0 0.0
  %2695 = vmatprep.subr.mxu0 0.0
  %2696 = vmatpush2.msra.mxu0 0.0
  %2697 = vmatprep.subr.mxu0 0.0
  %2698 = vmatpush2.msra.mxu0 0.0
  %2699 = vmatprep.subr.mxu0 0.0
  %2700 = vmatpush2.msra.mxu0 0.0
  %2701 = vmatprep.subr.mxu0 0.0
  %2702 = vmatpush2.msra.mxu0 0.0
  %2703 = vmatprep.mubr.f32.mxu0 0.0
  %2704 = vmatmul.mubr.f32.gmra.mxu0 %v2637
  %v2705 = vpop.f32.mrf.mxu0
  %v2706 = vadd.f32 0.0, %v2705
  %v2707 = vpop.f32.mrf.mxu0
  %2708 = vdwg.mxu0
  %v2709 = vadd.f32 %v2315, %v2706
  %v2710 = vxor.u32 %v2709, 2147483648
  %v2711 = vmul.f32 %v2710, 1.442695
  %v2712 = vpow.pop %v2711
  %v2713 = vadd.f32 %v2712, 1.0
  %v2714 = vrcp.pop %v2713
  %v2715 = vmul.f32 1.0, %v2714
  %v2716 = vtanh.pop %v2709
  %v2717 = vmul.f32 %v2715, %v2627
  %2719 = vrot.lane.b32.xlu0 %v2716, 32
  %v2720 = vpop.permute.xlu0 %2719
  %v2722 = vmul.f32 %v2715, %v2720
  %2724 = vrot.lane.b32.xlu0 %v2722, 32
  %v2725 = vpop.permute.xlu0 %2724
  %v2727 = vadd.f32 %v2717, %v2725
  %v2728 = vtanh.pop %v2727
  %2730 = vrot.lane.b32.xlu0 %v2728, 32
  %v2731 = vpop.permute.xlu0 %2730
  %v2733 = vmul.f32 %v2715, %v2731
  %2735 = vrot.lane.b32.xlu0 %v2733, 64
  %v2736 = vpop.permute.xlu0 %2735
  %v2737 = vsel %vm1130, %v2736, 0
  %2739 = vmatprep.subr.mxu0 0.0
  %2740 = vmatpush1.msra.mxu0 0.0
  %2741 = vmatprep.subr.mxu0 0.0
  %2742 = vmatpush1.msra.mxu0 0.0
  %2743 = vmatprep.subr.mxu0 0.0
  %2744 = vmatpush1.msra.mxu0 0.0
  %2745 = vmatprep.subr.mxu0 0.0
  %2746 = vmatpush1.msra.mxu0 0.0
  %2747 = vmatprep.subr.mxu0 0.0
  %2748 = vmatpush1.msra.mxu0 0.0
  %2749 = vmatprep.subr.mxu0 0.0
  %2750 = vmatpush1.msra.mxu0 0.0
  %2751 = vmatprep.subr.mxu0 0.0
  %2752 = vmatpush1.msra.mxu0 0.0
  %2753 = vmatprep.subr.mxu0 0.0
  %2754 = vmatpush1.msra.mxu0 0.0
  %2755 = vmatprep.subr.mxu0 0.0
  %2756 = vmatpush1.msra.mxu0 0.0
  %2757 = vmatprep.subr.mxu0 0.0
  %2758 = vmatpush1.msra.mxu0 0.0
  %2759 = vmatprep.subr.mxu0 0.0
  %2760 = vmatpush1.msra.mxu0 0.0
  %2761 = vmatprep.subr.mxu0 0.0
  %2762 = vmatpush1.msra.mxu0 0.0
  %2763 = vmatprep.subr.mxu0 0.0
  %2764 = vmatpush1.msra.mxu0 %v99
  %2765 = vmatprep.subr.mxu0 0.0
  %2766 = vmatpush1.msra.mxu0 %v98
  %2767 = vmatprep.subr.mxu0 0.0
  %2768 = vmatpush1.msra.mxu0 %v97
  %2769 = vmatprep.subr.mxu0 0.0
  %2770 = vmatpush1.msra.mxu0 %v96
  %2771 = vmatprep.subr.mxu0 0.0
  %2772 = vmatpush2.msra.mxu0 0.0
  %2773 = vmatprep.subr.mxu0 0.0
  %2774 = vmatpush2.msra.mxu0 0.0
  %2775 = vmatprep.subr.mxu0 0.0
  %2776 = vmatpush2.msra.mxu0 0.0
  %2777 = vmatprep.subr.mxu0 0.0
  %2778 = vmatpush2.msra.mxu0 0.0
  %2779 = vmatprep.subr.mxu0 0.0
  %2780 = vmatpush2.msra.mxu0 0.0
  %2781 = vmatprep.subr.mxu0 0.0
  %2782 = vmatpush2.msra.mxu0 0.0
  %2783 = vmatprep.subr.mxu0 0.0
  %2784 = vmatpush2.msra.mxu0 0.0
  %2785 = vmatprep.subr.mxu0 0.0
  %2786 = vmatpush2.msra.mxu0 0.0
  %2787 = vmatprep.subr.mxu0 0.0
  %2788 = vmatpush2.msra.mxu0 0.0
  %2789 = vmatprep.subr.mxu0 0.0
  %2790 = vmatpush2.msra.mxu0 0.0
  %2791 = vmatprep.subr.mxu0 0.0
  %2792 = vmatpush2.msra.mxu0 0.0
  %2793 = vmatprep.subr.mxu0 0.0
  %2794 = vmatpush2.msra.mxu0 0.0
  %2795 = vmatprep.subr.mxu0 0.0
  %2796 = vmatpush2.msra.mxu0 0.0
  %2797 = vmatprep.subr.mxu0 0.0
  %2798 = vmatpush2.msra.mxu0 0.0
  %2799 = vmatprep.subr.mxu0 0.0
  %2800 = vmatpush2.msra.mxu0 0.0
  %2801 = vmatprep.subr.mxu0 0.0
  %2802 = vmatpush2.msra.mxu0 0.0
  %2803 = vmatprep.mubr.f32.mxu0 0.0
  %2804 = vmatmul.mubr.f32.gmra.mxu0 %v2737
  %v2805 = vpop.f32.mrf.mxu0
  %v2806 = vadd.f32 0.0, %v2805
  %v2807 = vpop.f32.mrf.mxu0
  %2808 = vdwg.mxu0
  %v2809 = vadd.f32 %v2320, %v2806
  %v2810 = vxor.u32 %v2809, 2147483648
  %v2811 = vmul.f32 %v2810, 1.442695
  %v2812 = vpow.pop %v2811
  %v2813 = vadd.f32 %v2812, 1.0
  %v2814 = vrcp.pop %v2813
  %v2815 = vmul.f32 1.0, %v2814
  %v2816 = vtanh.pop %v2809
  %v2817 = vmul.f32 %v2815, %v2727
  %2819 = vrot.lane.b32.xlu0 %v2816, 32
  %v2820 = vpop.permute.xlu0 %2819
  %v2822 = vmul.f32 %v2815, %v2820
  %2824 = vrot.lane.b32.xlu0 %v2822, 32
  %v2825 = vpop.permute.xlu0 %2824
  %v2827 = vadd.f32 %v2817, %v2825
  %v2828 = vtanh.pop %v2827
  %2830 = vrot.lane.b32.xlu0 %v2828, 32
  %v2831 = vpop.permute.xlu0 %2830
  %v2833 = vmul.f32 %v2815, %v2831
  %2835 = vrot.lane.b32.xlu0 %v2833, 64
  %v2836 = vpop.permute.xlu0 %2835
  %v2837 = vsel %vm1130, %v2836, 0
  %2839 = vmatprep.subr.mxu0 0.0
  %2840 = vmatpush1.msra.mxu0 0.0
  %2841 = vmatprep.subr.mxu0 0.0
  %2842 = vmatpush1.msra.mxu0 0.0
  %2843 = vmatprep.subr.mxu0 0.0
  %2844 = vmatpush1.msra.mxu0 0.0
  %2845 = vmatprep.subr.mxu0 0.0
  %2846 = vmatpush1.msra.mxu0 0.0
  %2847 = vmatprep.subr.mxu0 0.0
  %2848 = vmatpush1.msra.mxu0 0.0
  %2849 = vmatprep.subr.mxu0 0.0
  %2850 = vmatpush1.msra.mxu0 0.0
  %2851 = vmatprep.subr.mxu0 0.0
  %2852 = vmatpush1.msra.mxu0 0.0
  %2853 = vmatprep.subr.mxu0 0.0
  %2854 = vmatpush1.msra.mxu0 0.0
  %2855 = vmatprep.subr.mxu0 0.0
  %2856 = vmatpush1.msra.mxu0 0.0
  %2857 = vmatprep.subr.mxu0 0.0
  %2858 = vmatpush1.msra.mxu0 0.0
  %2859 = vmatprep.subr.mxu0 0.0
  %2860 = vmatpush1.msra.mxu0 0.0
  %2861 = vmatprep.subr.mxu0 0.0
  %2862 = vmatpush1.msra.mxu0 0.0
  %2863 = vmatprep.subr.mxu0 0.0
  %2864 = vmatpush1.msra.mxu0 %v99
  %2865 = vmatprep.subr.mxu0 0.0
  %2866 = vmatpush1.msra.mxu0 %v98
  %2867 = vmatprep.subr.mxu0 0.0
  %2868 = vmatpush1.msra.mxu0 %v97
  %2869 = vmatprep.subr.mxu0 0.0
  %2870 = vmatpush1.msra.mxu0 %v96
  %2871 = vmatprep.subr.mxu0 0.0
  %2872 = vmatpush2.msra.mxu0 0.0
  %2873 = vmatprep.subr.mxu0 0.0
  %2874 = vmatpush2.msra.mxu0 0.0
  %2875 = vmatprep.subr.mxu0 0.0
  %2876 = vmatpush2.msra.mxu0 0.0
  %2877 = vmatprep.subr.mxu0 0.0
  %2878 = vmatpush2.msra.mxu0 0.0
  %2879 = vmatprep.subr.mxu0 0.0
  %2880 = vmatpush2.msra.mxu0 0.0
  %2881 = vmatprep.subr.mxu0 0.0
  %2882 = vmatpush2.msra.mxu0 0.0
  %2883 = vmatprep.subr.mxu0 0.0
  %2884 = vmatpush2.msra.mxu0 0.0
  %2885 = vmatprep.subr.mxu0 0.0
  %2886 = vmatpush2.msra.mxu0 0.0
  %2887 = vmatprep.subr.mxu0 0.0
  %2888 = vmatpush2.msra.mxu0 0.0
  %2889 = vmatprep.subr.mxu0 0.0
  %2890 = vmatpush2.msra.mxu0 0.0
  %2891 = vmatprep.subr.mxu0 0.0
  %2892 = vmatpush2.msra.mxu0 0.0
  %2893 = vmatprep.subr.mxu0 0.0
  %2894 = vmatpush2.msra.mxu0 0.0
  %2895 = vmatprep.subr.mxu0 0.0
  %2896 = vmatpush2.msra.mxu0 0.0
  %2897 = vmatprep.subr.mxu0 0.0
  %2898 = vmatpush2.msra.mxu0 0.0
  %2899 = vmatprep.subr.mxu0 0.0
  %2900 = vmatpush2.msra.mxu0 0.0
  %2901 = vmatprep.subr.mxu0 0.0
  %2902 = vmatpush2.msra.mxu0 0.0
  %2903 = vmatprep.mubr.f32.mxu0 0.0
  %2904 = vmatmul.mubr.f32.gmra.mxu0 %v2837
  %v2905 = vpop.f32.mrf.mxu0
  %v2906 = vadd.f32 0.0, %v2905
  %v2907 = vpop.f32.mrf.mxu0
  %2908 = vdwg.mxu0
  %v2909 = vadd.f32 %v2325, %v2906
  %v2910 = vxor.u32 %v2909, 2147483648
  %v2911 = vmul.f32 %v2910, 1.442695
  %v2912 = vpow.pop %v2911
  %v2913 = vadd.f32 %v2912, 1.0
  %v2914 = vrcp.pop %v2913
  %v2915 = vmul.f32 1.0, %v2914
  %v2916 = vtanh.pop %v2909
  %v2917 = vmul.f32 %v2915, %v2827
  %2919 = vrot.lane.b32.xlu0 %v2916, 32
  %v2920 = vpop.permute.xlu0 %2919
  %v2922 = vmul.f32 %v2915, %v2920
  %2924 = vrot.lane.b32.xlu0 %v2922, 32
  %v2925 = vpop.permute.xlu0 %2924
  %v2927 = vadd.f32 %v2917, %v2925
  %v2928 = vtanh.pop %v2927
  %2930 = vrot.lane.b32.xlu0 %v2928, 32
  %v2931 = vpop.permute.xlu0 %2930
  %v2933 = vmul.f32 %v2915, %v2931
  %2935 = vrot.lane.b32.xlu0 %v2933, 64
  %v2936 = vpop.permute.xlu0 %2935
  %v2937 = vsel %vm1130, %v2936, 0
  %2939 = vmatprep.subr.mxu0 0.0
  %2940 = vmatpush1.msra.mxu0 0.0
  %2941 = vmatprep.subr.mxu0 0.0
  %2942 = vmatpush1.msra.mxu0 0.0
  %2943 = vmatprep.subr.mxu0 0.0
  %2944 = vmatpush1.msra.mxu0 0.0
  %2945 = vmatprep.subr.mxu0 0.0
  %2946 = vmatpush1.msra.mxu0 0.0
  %2947 = vmatprep.subr.mxu0 0.0
  %2948 = vmatpush1.msra.mxu0 0.0
  %2949 = vmatprep.subr.mxu0 0.0
  %2950 = vmatpush1.msra.mxu0 0.0
  %2951 = vmatprep.subr.mxu0 0.0
  %2952 = vmatpush1.msra.mxu0 0.0
  %2953 = vmatprep.subr.mxu0 0.0
  %2954 = vmatpush1.msra.mxu0 0.0
  %2955 = vmatprep.subr.mxu0 0.0
  %2956 = vmatpush1.msra.mxu0 0.0
  %2957 = vmatprep.subr.mxu0 0.0
  %2958 = vmatpush1.msra.mxu0 0.0
  %2959 = vmatprep.subr.mxu0 0.0
  %2960 = vmatpush1.msra.mxu0 0.0
  %2961 = vmatprep.subr.mxu0 0.0
  %2962 = vmatpush1.msra.mxu0 0.0
  %2963 = vmatprep.subr.mxu0 0.0
  %2964 = vmatpush1.msra.mxu0 %v99
  %2965 = vmatprep.subr.mxu0 0.0
  %2966 = vmatpush1.msra.mxu0 %v98
  %2967 = vmatprep.subr.mxu0 0.0
  %2968 = vmatpush1.msra.mxu0 %v97
  %2969 = vmatprep.subr.mxu0 0.0
  %2970 = vmatpush1.msra.mxu0 %v96
  %2971 = vmatprep.subr.mxu0 0.0
  %2972 = vmatpush2.msra.mxu0 0.0
  %2973 = vmatprep.subr.mxu0 0.0
  %2974 = vmatpush2.msra.mxu0 0.0
  %2975 = vmatprep.subr.mxu0 0.0
  %2976 = vmatpush2.msra.mxu0 0.0
  %2977 = vmatprep.subr.mxu0 0.0
  %2978 = vmatpush2.msra.mxu0 0.0
  %2979 = vmatprep.subr.mxu0 0.0
  %2980 = vmatpush2.msra.mxu0 0.0
  %2981 = vmatprep.subr.mxu0 0.0
  %2982 = vmatpush2.msra.mxu0 0.0
  %2983 = vmatprep.subr.mxu0 0.0
  %2984 = vmatpush2.msra.mxu0 0.0
  %2985 = vmatprep.subr.mxu0 0.0
  %2986 = vmatpush2.msra.mxu0 0.0
  %2987 = vmatprep.subr.mxu0 0.0
  %2988 = vmatpush2.msra.mxu0 0.0
  %2989 = vmatprep.subr.mxu0 0.0
  %2990 = vmatpush2.msra.mxu0 0.0
  %2991 = vmatprep.subr.mxu0 0.0
  %2992 = vmatpush2.msra.mxu0 0.0
  %2993 = vmatprep.subr.mxu0 0.0
  %2994 = vmatpush2.msra.mxu0 0.0
  %2995 = vmatprep.subr.mxu0 0.0
  %2996 = vmatpush2.msra.mxu0 0.0
  %2997 = vmatprep.subr.mxu0 0.0
  %2998 = vmatpush2.msra.mxu0 0.0
  %2999 = vmatprep.subr.mxu0 0.0
  %3000 = vmatpush2.msra.mxu0 0.0
  %3001 = vmatprep.subr.mxu0 0.0
  %3002 = vmatpush2.msra.mxu0 0.0
  %3003 = vmatprep.mubr.f32.mxu0 0.0
  %3004 = vmatmul.mubr.f32.gmra.mxu0 %v2937
  %v3005 = vpop.f32.mrf.mxu0
  %v3006 = vadd.f32 0.0, %v3005
  %v3007 = vpop.f32.mrf.mxu0
  %3008 = vdwg.mxu0
  %v3009 = vadd.f32 %v2330, %v3006
  %v3010 = vxor.u32 %v3009, 2147483648
  %v3011 = vmul.f32 %v3010, 1.442695
  %v3012 = vpow.pop %v3011
  %v3013 = vadd.f32 %v3012, 1.0
  %v3014 = vrcp.pop %v3013
  %v3015 = vmul.f32 1.0, %v3014
  %v3016 = vtanh.pop %v3009
  %v3017 = vmul.f32 %v3015, %v2927
  %3019 = vrot.lane.b32.xlu0 %v3016, 32
  %v3020 = vpop.permute.xlu0 %3019
  %v3022 = vmul.f32 %v3015, %v3020
  %3024 = vrot.lane.b32.xlu0 %v3022, 32
  %v3025 = vpop.permute.xlu0 %3024
  %v3027 = vadd.f32 %v3017, %v3025
  %v3028 = vtanh.pop %v3027
  %3030 = vrot.lane.b32.xlu0 %v3028, 32
  %v3031 = vpop.permute.xlu0 %3030
  %v3033 = vmul.f32 %v3015, %v3031
  %3035 = vrot.lane.b32.xlu0 %v3033, 64
  %v3036 = vpop.permute.xlu0 %3035
  %v3037 = vsel %vm1130, %v3036, 0
  %3039 = vmatprep.subr.mxu0 0.0
  %3040 = vmatpush1.msra.mxu0 0.0
  %3041 = vmatprep.subr.mxu0 0.0
  %3042 = vmatpush1.msra.mxu0 0.0
  %3043 = vmatprep.subr.mxu0 0.0
  %3044 = vmatpush1.msra.mxu0 0.0
  %3045 = vmatprep.subr.mxu0 0.0
  %3046 = vmatpush1.msra.mxu0 0.0
  %3047 = vmatprep.subr.mxu0 0.0
  %3048 = vmatpush1.msra.mxu0 0.0
  %3049 = vmatprep.subr.mxu0 0.0
  %3050 = vmatpush1.msra.mxu0 0.0
  %3051 = vmatprep.subr.mxu0 0.0
  %3052 = vmatpush1.msra.mxu0 0.0
  %3053 = vmatprep.subr.mxu0 0.0
  %3054 = vmatpush1.msra.mxu0 0.0
  %3055 = vmatprep.subr.mxu0 0.0
  %3056 = vmatpush1.msra.mxu0 0.0
  %3057 = vmatprep.subr.mxu0 0.0
  %3058 = vmatpush1.msra.mxu0 0.0
  %3059 = vmatprep.subr.mxu0 0.0
  %3060 = vmatpush1.msra.mxu0 0.0
  %3061 = vmatprep.subr.mxu0 0.0
  %3062 = vmatpush1.msra.mxu0 0.0
  %3063 = vmatprep.subr.mxu0 0.0
  %3064 = vmatpush1.msra.mxu0 %v99
  %3065 = vmatprep.subr.mxu0 0.0
  %3066 = vmatpush1.msra.mxu0 %v98
  %3067 = vmatprep.subr.mxu0 0.0
  %3068 = vmatpush1.msra.mxu0 %v97
  %3069 = vmatprep.subr.mxu0 0.0
  %3070 = vmatpush1.msra.mxu0 %v96
  %3071 = vmatprep.subr.mxu0 0.0
  %3072 = vmatpush2.msra.mxu0 0.0
  %3073 = vmatprep.subr.mxu0 0.0
  %3074 = vmatpush2.msra.mxu0 0.0
  %3075 = vmatprep.subr.mxu0 0.0
  %3076 = vmatpush2.msra.mxu0 0.0
  %3077 = vmatprep.subr.mxu0 0.0
  %3078 = vmatpush2.msra.mxu0 0.0
  %3079 = vmatprep.subr.mxu0 0.0
  %3080 = vmatpush2.msra.mxu0 0.0
  %3081 = vmatprep.subr.mxu0 0.0
  %3082 = vmatpush2.msra.mxu0 0.0
  %3083 = vmatprep.subr.mxu0 0.0
  %3084 = vmatpush2.msra.mxu0 0.0
  %3085 = vmatprep.subr.mxu0 0.0
  %3086 = vmatpush2.msra.mxu0 0.0
  %3087 = vmatprep.subr.mxu0 0.0
  %3088 = vmatpush2.msra.mxu0 0.0
  %3089 = vmatprep.subr.mxu0 0.0
  %3090 = vmatpush2.msra.mxu0 0.0
  %3091 = vmatprep.subr.mxu0 0.0
  %3092 = vmatpush2.msra.mxu0 0.0
  %3093 = vmatprep.subr.mxu0 0.0
  %3094 = vmatpush2.msra.mxu0 0.0
  %3095 = vmatprep.subr.mxu0 0.0
  %3096 = vmatpush2.msra.mxu0 0.0
  %3097 = vmatprep.subr.mxu0 0.0
  %3098 = vmatpush2.msra.mxu0 0.0
  %3099 = vmatprep.subr.mxu0 0.0
  %3100 = vmatpush2.msra.mxu0 0.0
  %3101 = vmatprep.subr.mxu0 0.0
  %3102 = vmatpush2.msra.mxu0 0.0
  %3103 = vmatprep.mubr.f32.mxu0 0.0
  %3104 = vmatmul.mubr.f32.gmra.mxu0 %v3037
  %v3105 = vpop.f32.mrf.mxu0
  %v3106 = vadd.f32 0.0, %v3105
  %v3107 = vpop.f32.mrf.mxu0
  %3108 = vdwg.mxu0
  %v3109 = vadd.f32 %v2335, %v3106
  %v3110 = vxor.u32 %v3109, 2147483648
  %v3111 = vmul.f32 %v3110, 1.442695
  %v3112 = vpow.pop %v3111
  %v3113 = vadd.f32 %v3112, 1.0
  %v3114 = vrcp.pop %v3113
  %v3115 = vmul.f32 1.0, %v3114
  %v3116 = vtanh.pop %v3109
  %v3117 = vmul.f32 %v3115, %v3027
  %3119 = vrot.lane.b32.xlu0 %v3116, 32
  %v3120 = vpop.permute.xlu0 %3119
  %v3122 = vmul.f32 %v3115, %v3120
  %3124 = vrot.lane.b32.xlu0 %v3122, 32
  %v3125 = vpop.permute.xlu0 %3124
  %v3127 = vadd.f32 %v3117, %v3125
  %v3128 = vtanh.pop %v3127
  %3130 = vrot.lane.b32.xlu0 %v3128, 32
  %v3131 = vpop.permute.xlu0 %3130
  %v3133 = vmul.f32 %v3115, %v3131
  %3135 = vrot.lane.b32.xlu0 %v3133, 64
  %v3136 = vpop.permute.xlu0 %3135
  %vm3138 = vcmask 254976
  %3139 = vst.msk [vmem:[%s7] sm:$0x3] %vm3138, %v3136
  %3141 = vrot.lane.b32.xlu0 %v3127, 96
  %v3142 = vpop.permute.xlu0 %3141
  %s3144 = scalar_lea.vmem %s7, 2
  %3145 = vst.msk [vmem:[%s3144] sm:$0x3] %vm3138, %v3142
  // Predicated region
  $region30: #{seq_forward.1} parent=0 // pred_check
    _
  $region31: #{seq_forward.1} parent=0 // pred_check_branch
    %3147 = sbr.rel (0) target = $region33
  $region32: #{seq_forward.1} parent=0 // pred_region
    _
  $region33: #{seq_forward.1} parent=0 // pred_fallthru
    _
  // Predicated region
  $region34: #{seq_forward.1} parent=0 // pred_check
    _
  $region35: #{seq_forward.1} parent=0 // pred_check_branch
    %3149 = sbr.rel (0) target = $region37
  $region36: #{seq_forward.1} parent=0 // pred_region
    _
  $region37: #{seq_forward.1} parent=0 // pred_fallthru
    _

</llo_original>
